<compile_context>
chip_gen: v6e
topology: v6e:2x2x1
jax: 0.10.0
libtpu: 0.0.40
codegen_flags: <defaults>
</compile_context>

<pallas_src>
import math
import numpy as np
import jax
import jax.numpy as jnp
from jax import lax
from jax.experimental import pallas as pl
from jax.experimental.pallas import tpu as pltpu

# ---- MultiScaleMemoryLayer config (small, TPU-friendly) ----
B, T = 2, 8        # batch, sequence length
I_SZ = 8           # input_size
H = 128            # hidden_size
NRNN = 4           # num_rnn (first NRNN-1 RNNs use relu, last uses tanh)


def _detect_num_groups():
    """2 RNN-groups (one per TensorCore) on v7x, 1 everywhere else."""
    try:
        kind = jax.devices()[0].device_kind.lower()
    except Exception:
        return 1
    if NRNN % 2 == 0 and ("v7" in kind or "7x" in kind):
        return 2
    return 1


# ----------------------------------------------------------------------------
# Kernel factory: one grid step handles G = NRNN // num_groups RNN chains.
# ----------------------------------------------------------------------------
def make_kernel(num_groups):
    G = NRNN // num_groups
    last_group = num_groups - 1

    def kernel(x_ref, wih_ref, bias_ref, whh_ref, out_ref, pre_scr):
        """
        x_ref   : (T*B, I)   f32   time-major rows, r = t*B + b
        wih_ref : (I, G*H)   f32   column block n = W_ih[g*G+n].T
        bias_ref: (1, G*H)   f32   b_ih + b_hh for this group's RNNs
        whh_ref : (G, H, H)  bf16  slice n = W_hh[g*G+n].T
        out_ref : (1, T, G*B, H) f32  dense per-step tiles
        pre_scr : (T*B, G*H) f32  VMEM scratch for the hoisted projection
        """
        # Hoisted input projection for every RNN in the group and every time
        # step: one matmul off the recurrence critical path.  Kept in VMEM
        # scratch (not a live value) so the unrolled recurrence below does not
        # pay vreg pressure for it; per-step slices are re-loaded (cheap vld).
        pre_scr[...] = (jnp.dot(x_ref[...], wih_ref[...],
                                preferred_element_type=jnp.float32)
                        + bias_ref[...])

        if num_groups > 1:
            # Only the very last RNN overall uses tanh; with a grid split the
            # group index is a runtime value, so select via a hoisted mask.
            tanh_mask = jnp.broadcast_to(pl.program_id(0) == last_group, (B, H))

        # Carry all G hidden states together: serial chain is T steps.  T and
        # G are tiny compile-time constants, so everything is fully unrolled
        # (one straight-line region for the scheduler); only
        # h @ Whh^T (bf16 MXU) + add + activation sits on the critical path.
        h = [jnp.zeros((B, H), jnp.float32) for _ in range(G)]
        for t in range(T):
            new_rows = []
            for n in range(G):
                pre = (pre_scr[pl.ds(t * B, B), pl.ds(n * H, H)]
                       + jnp.dot(h[n].astype(jnp.bfloat16), whh_ref[n],
                                 preferred_element_type=jnp.float32))
                if num_groups == 1:
                    # Trace-time activation selection (no runtime blend).
                    hn = jnp.tanh(pre) if n == G - 1 else jnp.maximum(pre, 0.0)
                else:
                    if n == G - 1:
                        hn = jnp.where(tanh_mask, jnp.tanh(pre),
                                       jnp.maximum(pre, 0.0))
                    else:
                        hn = jnp.maximum(pre, 0.0)
                h[n] = hn
                new_rows.append(hn)
            # Single dense (G*B, H) store per step (sublane concat is off the
            # recurrence critical path: the output is a dead end).
            out_ref[0, t, :, :] = jnp.concatenate(
                new_rows, axis=0).astype(out_ref.dtype)

    return kernel


# ----------------------------------------------------------------------------
# Wrapper (single pallas_call, everything resident in VMEM)
# ----------------------------------------------------------------------------
def make_forward(num_groups):
    G = NRNN // num_groups
    kernel = make_kernel(num_groups)

    @jax.jit
    def forward(x, params):
        """x: (B, T, I). Returns (hs_all (B,T,NRNN,H), hidden (NRNN,1,B,H))."""
        # TODO(synk): h_0 is assumed None (zero initial hidden state), i.e. the
        # module's default path; an explicit h_0 would just seed `h` in-kernel.
        x2d = jnp.transpose(x, (1, 0, 2)).reshape(T * B, I_SZ)          # r = t*B+b
        wih_cat_t = jnp.transpose(params["wih"], (2, 0, 1)).reshape(I_SZ, NRNN * H)
        whh_t = jnp.transpose(params["whh"], (0, 2, 1)).astype(jnp.bfloat16)
        bias = (params["bih"] + params["bhh"]).reshape(1, NRNN * H)

        hs = pl.pallas_call(
            kernel,
            out_shape=jax.ShapeDtypeStruct((num_groups, T, G * B, H), jnp.float32),
            grid=(num_groups,),
            in_specs=[
                pl.BlockSpec((T * B, I_SZ), lambda g: (0, 0)),
                pl.BlockSpec((I_SZ, G * H), lambda g: (0, g)),
                pl.BlockSpec((1, G * H), lambda g: (0, g)),
                pl.BlockSpec((G, H, H), lambda g: (g, 0, 0)),
            ],
            out_specs=pl.BlockSpec((1, T, G * B, H), lambda g: (g, 0, 0, 0)),
            scratch_shapes=[pltpu.VMEM((T * B, G * H), jnp.float32)],
            compiler_params=pltpu.CompilerParams(
                dimension_semantics=("parallel",)),
        )(x2d, wih_cat_t, bias, whh_t)

        # Undo the dense kernel layout: (NG, T, G, B, H) -> module layouts.
        hs = hs.reshape(num_groups, T, G, B, H)
        hs_all = jnp.transpose(hs, (3, 1, 0, 2, 4)).reshape(B, T, NRNN, H)
        hidden = hs[:, T - 1].reshape(NRNN, B, H)[:, None]   # (NRNN, 1, B, H)
        return hs_all, hidden

    return forward


multiscale_memory_forward = make_forward(_detect_num_groups())


# ----------------------------------------------------------------------------
# Deterministic parameter init (mirrors MultiScaleMemoryLayer.init_weights,
# arange_type='linear'; biases = 0)
# ----------------------------------------------------------------------------
def redfb_source_init_np(n, m):
    # remainder_init=True, start=stop=1 -> all gains are 1.0
    n_loop = m // (2 * n)
    blocks = []
    for _ in range(n_loop):
        blk = np.zeros((2 * n, n), np.float32)
        for j in range(n):
            blk[2 * j, j] = 1.0
            blk[2 * j + 1, j] = 1.0
        blocks.append(blk)
    blocks.append(np.zeros((m - 2 * n * n_loop, n), np.float32))
    return np.concatenate(blocks, axis=0)                   # (m, n) == (H, I)


def redfb_feedback_init_np(n, a):
    # type='pos', ff=False, start=stop=a
    w = np.zeros((n, n), np.float32)
    for i in range(n):
        if i % 2 == 0:
            w[i, i + 1] = a
        else:
            w[i, i - 1] = a
    return w


def xavier_uniform(key, shape):
    fan_out, fan_in = shape
    limit = math.sqrt(6.0 / (fan_in + fan_out))
    return jax.random.uniform(key, shape, minval=-limit, maxval=limit,
                              dtype=jnp.float32)


def orthogonal_init(key, n):
    a = jax.random.normal(key, (n, n), dtype=jnp.float32)
    q_, r_ = jnp.linalg.qr(a)
    return (q_ * jnp.sign(jnp.diagonal(r_))[None, :]).astype(jnp.float32)


def init_params(key):
    keys = jax.random.split(key, 2)
    arange_hid = np.linspace(0.5, 0.999, NRNN - 1)           # arange_type='linear'
    wih, whh = [], []
    for n in range(NRNN - 1):
        wih.append(jnp.asarray(redfb_source_init_np(I_SZ, H)))
        whh.append(jnp.asarray(redfb_feedback_init_np(H, float(arange_hid[n]))))
    wih.append(xavier_uniform(keys[0], (H, I_SZ)))           # last RNN: xavier
    whh.append(orthogonal_init(keys[1], H))                  # last RNN: orthogonal
    return dict(
        wih=jnp.stack(wih),                                  # (N, H, I)
        whh=jnp.stack(whh),                                  # (N, H, H)
        bih=jnp.zeros((NRNN, H), jnp.float32),
        bhh=jnp.zeros((NRNN, H), jnp.float32),
    )


# ----------------------------------------------------------------------------
# Pure-JAX reference (same math, PyTorch layouts, f32 HIGHEST precision).
# Kernel recurrence runs bf16 on the MXU -> loose 5e-2 tolerance is deliberate.
# ----------------------------------------------------------------------------
def reference_forward(x, params):
    xs_t = jnp.transpose(x, (1, 0, 2))                       # (T, B, I)
    hs_list, last = [], []
    for n in range(NRNN):
        wih, whh = params["wih"][n], params["whh"][n]
        bih, bhh = params["bih"][n], params["bhh"][n]
        tanh_act = (n == NRNN - 1)

        def step(h, xt, wih=wih, whh=whh, bih=bih, bhh=bhh, tanh_act=tanh_act):
            pre = (jnp.dot(xt, wih.T, precision=lax.Precision.HIGHEST) + bih
                   + jnp.dot(h, whh.T, precision=lax.Precision.HIGHEST) + bhh)
            hn = jnp.tanh(pre) if tanh_act else jnp.maximum(pre, 0.0)
            return hn, hn

        _, hseq = lax.scan(step, jnp.zeros((B, H), jnp.float32), xs_t)  # (T,B,H)
        hs_list.append(jnp.transpose(hseq, (1, 0, 2)))                  # (B,T,H)
        last.append(hseq[-1][None])                                     # (1,B,H)
    hs_all = jnp.stack(hs_list, axis=2)                                 # (B,T,N,H)
    hidden = jnp.stack(last, axis=0)                                    # (N,1,B,H)
    return hs_all, hidden


if __name__ == "__main__":
    key = jax.random.PRNGKey(0)
    P = init_params(key)
    x = jax.random.normal(jax.random.fold_in(key, 123), (B, T, I_SZ),
                          dtype=jnp.float32)

    hs_all, hidden = multiscale_memory_forward(x, P)
    hs_all = jax.block_until_ready(hs_all)
    hidden = jax.block_until_ready(hidden)
    assert hs_all.shape == (B, T, NRNN, H)
    assert hidden.shape == (NRNN, 1, B, H)

    ref_hs, ref_hidden = reference_forward(x, P)
    np.testing.assert_allclose(np.asarray(hs_all), np.asarray(ref_hs),
                               rtol=5e-2, atol=5e-2)
    np.testing.assert_allclose(np.asarray(hidden), np.asarray(ref_hidden),
                               rtol=5e-2, atol=5e-2)

    print("KERNEL_OK")
</pallas_src>

<mosaic_0001>
module attributes {stable_mosaic.version = 11 : i64} {
  func.func @kernel(%arg0: i32, %arg1: memref<16x8xf32, #tpu.memory_space<vmem>>, %arg2: memref<8x512xf32, #tpu.memory_space<vmem>>, %arg3: memref<1x512xf32, #tpu.memory_space<vmem>>, %arg4: memref<4x128x128xbf16, #tpu.memory_space<vmem>>, %arg5: memref<1x8x8x128xf32, #tpu.memory_space<vmem>>, %arg6: memref<16x512xf32, #tpu.memory_space<vmem>>) attributes {dimension_semantics = [#tpu.dimension_semantics<parallel>], iteration_bounds = array<i64: 1>, scalar_prefetch = 0 : i64, scratch_operands = 1 : i64, tpu.core_type = #tpu.core_type<tc>, window_params = [{pipeline_mode = #tpu.pipeline_mode<synchronous>, transform_indices = @transform_0, window_bounds = array<i64: 16, 8>}, {transform_indices = @transform_1, window_bounds = array<i64: 8, 512>}, {transform_indices = @transform_2, window_bounds = array<i64: 1, 512>}, {transform_indices = @transform_3, window_bounds = array<i64: 4, 128, 128>}, {transform_indices = @transform_4, window_bounds = array<i64: 1, 8, 8, 128>}]} {
    %c0 = arith.constant 0 : index
    %c0_0 = arith.constant 0 : index
    %0 = vector.load %arg1[%c0, %c0_0] : memref<16x8xf32, #tpu.memory_space<vmem>>, vector<16x8xf32>
    %c0_1 = arith.constant 0 : index
    %c0_2 = arith.constant 0 : index
    %1 = vector.load %arg2[%c0_1, %c0_2] : memref<8x512xf32, #tpu.memory_space<vmem>>, vector<8x512xf32>
    %cst = arith.constant dense<0.000000e+00> : vector<16x512xf32>
    %2 = tpu.matmul %0, %1, %cst {dimension_numbers = #tpu.dot_dimension_numbers<[1], [0], [0], [1], [0, 0, 1, 1], [], []>} : vector<16x8xf32>, vector<8x512xf32>, vector<16x512xf32> -> vector<16x512xf32>
    %c0_3 = arith.constant 0 : index
    %c0_4 = arith.constant 0 : index
    %3 = vector.load %arg3[%c0_3, %c0_4] : memref<1x512xf32, #tpu.memory_space<vmem>>, vector<1x512xf32>
    %4 = vector.broadcast %3 : vector<1x512xf32> to vector<16x512xf32>
    %5 = arith.addf %2, %4 : vector<16x512xf32>
    %c0_5 = arith.constant 0 : index
    %c0_6 = arith.constant 0 : index
    %6 = vector.load %arg6[%c0_5, %c0_6] : memref<16x512xf32, #tpu.memory_space<vmem>>, vector<16x512xf32>
    tpu.vector_store %arg6[%c0_5, %c0_6], %5 {strides = array<i32>} : memref<16x512xf32, #tpu.memory_space<vmem>>, vector<16x512xf32>,
    %cst_7 = arith.constant 0.000000e+00 : f32
    %7 = vector.broadcast %cst_7 : f32 to vector<2x128xf32>
    %cst_8 = arith.constant 0.000000e+00 : f32
    %8 = vector.broadcast %cst_8 : f32 to vector<2x128xf32>
    %cst_9 = arith.constant 0.000000e+00 : f32
    %9 = vector.broadcast %cst_9 : f32 to vector<2x128xf32>
    %cst_10 = arith.constant 0.000000e+00 : f32
    %10 = vector.broadcast %cst_10 : f32 to vector<2x128xf32>
    %c0_11 = arith.constant 0 : index
    %c0_12 = arith.constant 0 : index
    %11 = vector.load %arg6[%c0_11, %c0_12] : memref<16x512xf32, #tpu.memory_space<vmem>>, vector<2x128xf32>
    %12 = arith.truncf %7 : vector<2x128xf32> to vector<2x128xbf16>
    %c0_13 = arith.constant 0 : index
    %c0_14 = arith.constant 0 : index
    %c0_15 = arith.constant 0 : index
    %13 = vector.load %arg4[%c0_13, %c0_14, %c0_15] : memref<4x128x128xbf16, #tpu.memory_space<vmem>>, vector<1x128x128xbf16>
    %14 = vector.shape_cast %13 : vector<1x128x128xbf16> to vector<128x128xbf16>
    %cst_16 = arith.constant dense<0.000000e+00> : vector<2x128xf32>
    %15 = tpu.matmul %12, %14, %cst_16 {dimension_numbers = #tpu.dot_dimension_numbers<[1], [0], [0], [1], [0, 0, 1, 1], [], []>} : vector<2x128xbf16>, vector<128x128xbf16>, vector<2x128xf32> -> vector<2x128xf32>
    %16 = arith.addf %11, %15 : vector<2x128xf32>
    %cst_17 = arith.constant 0.000000e+00 : f32
    %17 = vector.broadcast %cst_17 : f32 to vector<2x128xf32>
    %18 = arith.maximumf %16, %17 : vector<2x128xf32>
    %c0_18 = arith.constant 0 : index
    %c128 = arith.constant 128 : index
    %19 = vector.load %arg6[%c0_18, %c128] : memref<16x512xf32, #tpu.memory_space<vmem>>, vector<2x128xf32>
    %20 = arith.truncf %8 : vector<2x128xf32> to vector<2x128xbf16>
    %c1 = arith.constant 1 : index
    %c0_19 = arith.constant 0 : index
    %c0_20 = arith.constant 0 : index
    %21 = vector.load %arg4[%c1, %c0_19, %c0_20] : memref<4x128x128xbf16, #tpu.memory_space<vmem>>, vector<1x128x128xbf16>
    %22 = vector.shape_cast %21 : vector<1x128x128xbf16> to vector<128x128xbf16>
    %cst_21 = arith.constant dense<0.000000e+00> : vector<2x128xf32>
    %23 = tpu.matmul %20, %22, %cst_21 {dimension_numbers = #tpu.dot_dimension_numbers<[1], [0], [0], [1], [0, 0, 1, 1], [], []>} : vector<2x128xbf16>, vector<128x128xbf16>, vector<2x128xf32> -> vector<2x128xf32>
    %24 = arith.addf %19, %23 : vector<2x128xf32>
    %cst_22 = arith.constant 0.000000e+00 : f32
    %25 = vector.broadcast %cst_22 : f32 to vector<2x128xf32>
    %26 = arith.maximumf %24, %25 : vector<2x128xf32>
    %c0_23 = arith.constant 0 : index
    %c256 = arith.constant 256 : index
    %27 = vector.load %arg6[%c0_23, %c256] : memref<16x512xf32, #tpu.memory_space<vmem>>, vector<2x128xf32>
    %28 = arith.truncf %9 : vector<2x128xf32> to vector<2x128xbf16>
    %c2 = arith.constant 2 : index
    %c0_24 = arith.constant 0 : index
    %c0_25 = arith.constant 0 : index
    %29 = vector.load %arg4[%c2, %c0_24, %c0_25] : memref<4x128x128xbf16, #tpu.memory_space<vmem>>, vector<1x128x128xbf16>
    %30 = vector.shape_cast %29 : vector<1x128x128xbf16> to vector<128x128xbf16>
    %cst_26 = arith.constant dense<0.000000e+00> : vector<2x128xf32>
    %31 = tpu.matmul %28, %30, %cst_26 {dimension_numbers = #tpu.dot_dimension_numbers<[1], [0], [0], [1], [0, 0, 1, 1], [], []>} : vector<2x128xbf16>, vector<128x128xbf16>, vector<2x128xf32> -> vector<2x128xf32>
    %32 = arith.addf %27, %31 : vector<2x128xf32>
    %cst_27 = arith.constant 0.000000e+00 : f32
    %33 = vector.broadcast %cst_27 : f32 to vector<2x128xf32>
    %34 = arith.maximumf %32, %33 : vector<2x128xf32>
    %c0_28 = arith.constant 0 : index
    %c384 = arith.constant 384 : index
    %35 = vector.load %arg6[%c0_28, %c384] : memref<16x512xf32, #tpu.memory_space<vmem>>, vector<2x128xf32>
    %36 = arith.truncf %10 : vector<2x128xf32> to vector<2x128xbf16>
    %c3 = arith.constant 3 : index
    %c0_29 = arith.constant 0 : index
    %c0_30 = arith.constant 0 : index
    %37 = vector.load %arg4[%c3, %c0_29, %c0_30] : memref<4x128x128xbf16, #tpu.memory_space<vmem>>, vector<1x128x128xbf16>
    %38 = vector.shape_cast %37 : vector<1x128x128xbf16> to vector<128x128xbf16>
    %cst_31 = arith.constant dense<0.000000e+00> : vector<2x128xf32>
    %39 = tpu.matmul %36, %38, %cst_31 {dimension_numbers = #tpu.dot_dimension_numbers<[1], [0], [0], [1], [0, 0, 1, 1], [], []>} : vector<2x128xbf16>, vector<128x128xbf16>, vector<2x128xf32> -> vector<2x128xf32>
    %40 = arith.addf %35, %39 : vector<2x128xf32>
    %41 = math.tanh %40 : vector<2x128xf32>
    %42 = tpu.concatenate %18, %26, %34, %41 in 0 : vector<2x128xf32>, vector<2x128xf32>, vector<2x128xf32>, vector<2x128xf32> -> vector<8x128xf32>
    %c0_32 = arith.constant 0 : index
    %c0_33 = arith.constant 0 : index
    %c0_34 = arith.constant 0 : index
    %c0_35 = arith.constant 0 : index
    %43 = vector.load %arg5[%c0_32, %c0_33, %c0_34, %c0_35] : memref<1x8x8x128xf32, #tpu.memory_space<vmem>>, vector<1x1x8x128xf32>
    %44 = vector.shape_cast %43 : vector<1x1x8x128xf32> to vector<8x128xf32>
    %45 = vector.shape_cast %42 : vector<8x128xf32> to vector<1x1x8x128xf32>
    tpu.vector_store %arg5[%c0_32, %c0_33, %c0_34, %c0_35], %45 {strides = array<i32>} : memref<1x8x8x128xf32, #tpu.memory_space<vmem>>, vector<1x1x8x128xf32>,
    %c2_36 = arith.constant 2 : index
    %c0_37 = arith.constant 0 : index
    %46 = vector.load %arg6[%c2_36, %c0_37] : memref<16x512xf32, #tpu.memory_space<vmem>>, vector<2x128xf32>
    %47 = arith.truncf %18 : vector<2x128xf32> to vector<2x128xbf16>
    %c0_38 = arith.constant 0 : index
    %c0_39 = arith.constant 0 : index
    %c0_40 = arith.constant 0 : index
    %48 = vector.load %arg4[%c0_38, %c0_39, %c0_40] : memref<4x128x128xbf16, #tpu.memory_space<vmem>>, vector<1x128x128xbf16>
    %49 = vector.shape_cast %48 : vector<1x128x128xbf16> to vector<128x128xbf16>
    %cst_41 = arith.constant dense<0.000000e+00> : vector<2x128xf32>
    %50 = tpu.matmul %47, %49, %cst_41 {dimension_numbers = #tpu.dot_dimension_numbers<[1], [0], [0], [1], [0, 0, 1, 1], [], []>} : vector<2x128xbf16>, vector<128x128xbf16>, vector<2x128xf32> -> vector<2x128xf32>
    %51 = arith.addf %46, %50 : vector<2x128xf32>
    %cst_42 = arith.constant 0.000000e+00 : f32
    %52 = vector.broadcast %cst_42 : f32 to vector<2x128xf32>
    %53 = arith.maximumf %51, %52 : vector<2x128xf32>
    %c2_43 = arith.constant 2 : index
    %c128_44 = arith.constant 128 : index
    %54 = vector.load %arg6[%c2_43, %c128_44] : memref<16x512xf32, #tpu.memory_space<vmem>>, vector<2x128xf32>
    %55 = arith.truncf %26 : vector<2x128xf32> to vector<2x128xbf16>
    %c1_45 = arith.constant 1 : index
    %c0_46 = arith.constant 0 : index
    %c0_47 = arith.constant 0 : index
    %56 = vector.load %arg4[%c1_45, %c0_46, %c0_47] : memref<4x128x128xbf16, #tpu.memory_space<vmem>>, vector<1x128x128xbf16>
    %57 = vector.shape_cast %56 : vector<1x128x128xbf16> to vector<128x128xbf16>
    %cst_48 = arith.constant dense<0.000000e+00> : vector<2x128xf32>
    %58 = tpu.matmul %55, %57, %cst_48 {dimension_numbers = #tpu.dot_dimension_numbers<[1], [0], [0], [1], [0, 0, 1, 1], [], []>} : vector<2x128xbf16>, vector<128x128xbf16>, vector<2x128xf32> -> vector<2x128xf32>
    %59 = arith.addf %54, %58 : vector<2x128xf32>
    %cst_49 = arith.constant 0.000000e+00 : f32
    %60 = vector.broadcast %cst_49 : f32 to vector<2x128xf32>
    %61 = arith.maximumf %59, %60 : vector<2x128xf32>
    %c2_50 = arith.constant 2 : index
    %c256_51 = arith.constant 256 : index
    %62 = vector.load %arg6[%c2_50, %c256_51] : memref<16x512xf32, #tpu.memory_space<vmem>>, vector<2x128xf32>
    %63 = arith.truncf %34 : vector<2x128xf32> to vector<2x128xbf16>
    %c2_52 = arith.constant 2 : index
    %c0_53 = arith.constant 0 : index
    %c0_54 = arith.constant 0 : index
    %64 = vector.load %arg4[%c2_52, %c0_53, %c0_54] : memref<4x128x128xbf16, #tpu.memory_space<vmem>>, vector<1x128x128xbf16>
    %65 = vector.shape_cast %64 : vector<1x128x128xbf16> to vector<128x128xbf16>
    %cst_55 = arith.constant dense<0.000000e+00> : vector<2x128xf32>
    %66 = tpu.matmul %63, %65, %cst_55 {dimension_numbers = #tpu.dot_dimension_numbers<[1], [0], [0], [1], [0, 0, 1, 1], [], []>} : vector<2x128xbf16>, vector<128x128xbf16>, vector<2x128xf32> -> vector<2x128xf32>
    %67 = arith.addf %62, %66 : vector<2x128xf32>
    %cst_56 = arith.constant 0.000000e+00 : f32
    %68 = vector.broadcast %cst_56 : f32 to vector<2x128xf32>
    %69 = arith.maximumf %67, %68 : vector<2x128xf32>
    %c2_57 = arith.constant 2 : index
    %c384_58 = arith.constant 384 : index
    %70 = vector.load %arg6[%c2_57, %c384_58] : memref<16x512xf32, #tpu.memory_space<vmem>>, vector<2x128xf32>
    %71 = arith.truncf %41 : vector<2x128xf32> to vector<2x128xbf16>
    %c3_59 = arith.constant 3 : index
    %c0_60 = arith.constant 0 : index
    %c0_61 = arith.constant 0 : index
    %72 = vector.load %arg4[%c3_59, %c0_60, %c0_61] : memref<4x128x128xbf16, #tpu.memory_space<vmem>>, vector<1x128x128xbf16>
    %73 = vector.shape_cast %72 : vector<1x128x128xbf16> to vector<128x128xbf16>
    %cst_62 = arith.constant dense<0.000000e+00> : vector<2x128xf32>
    %74 = tpu.matmul %71, %73, %cst_62 {dimension_numbers = #tpu.dot_dimension_numbers<[1], [0], [0], [1], [0, 0, 1, 1], [], []>} : vector<2x128xbf16>, vector<128x128xbf16>, vector<2x128xf32> -> vector<2x128xf32>
    %75 = arith.addf %70, %74 : vector<2x128xf32>
    %76 = math.tanh %75 : vector<2x128xf32>
    %77 = tpu.concatenate %53, %61, %69, %76 in 0 : vector<2x128xf32>, vector<2x128xf32>, vector<2x128xf32>, vector<2x128xf32> -> vector<8x128xf32>
    %c0_63 = arith.constant 0 : index
    %c1_64 = arith.constant 1 : index
    %c0_65 = arith.constant 0 : index
    %c0_66 = arith.constant 0 : index
    %78 = vector.load %arg5[%c0_63, %c1_64, %c0_65, %c0_66] : memref<1x8x8x128xf32, #tpu.memory_space<vmem>>, vector<1x1x8x128xf32>
    %79 = vector.shape_cast %78 : vector<1x1x8x128xf32> to vector<8x128xf32>
    %80 = vector.shape_cast %77 : vector<8x128xf32> to vector<1x1x8x128xf32>
    tpu.vector_store %arg5[%c0_63, %c1_64, %c0_65, %c0_66], %80 {strides = array<i32>} : memref<1x8x8x128xf32, #tpu.memory_space<vmem>>, vector<1x1x8x128xf32>,
    %c4 = arith.constant 4 : index
    %c0_67 = arith.constant 0 : index
    %81 = vector.load %arg6[%c4, %c0_67] : memref<16x512xf32, #tpu.memory_space<vmem>>, vector<2x128xf32>
    %82 = arith.truncf %53 : vector<2x128xf32> to vector<2x128xbf16>
    %c0_68 = arith.constant 0 : index
    %c0_69 = arith.constant 0 : index
    %c0_70 = arith.constant 0 : index
    %83 = vector.load %arg4[%c0_68, %c0_69, %c0_70] : memref<4x128x128xbf16, #tpu.memory_space<vmem>>, vector<1x128x128xbf16>
    %84 = vector.shape_cast %83 : vector<1x128x128xbf16> to vector<128x128xbf16>
    %cst_71 = arith.constant dense<0.000000e+00> : vector<2x128xf32>
    %85 = tpu.matmul %82, %84, %cst_71 {dimension_numbers = #tpu.dot_dimension_numbers<[1], [0], [0], [1], [0, 0, 1, 1], [], []>} : vector<2x128xbf16>, vector<128x128xbf16>, vector<2x128xf32> -> vector<2x128xf32>
    %86 = arith.addf %81, %85 : vector<2x128xf32>
    %cst_72 = arith.constant 0.000000e+00 : f32
    %87 = vector.broadcast %cst_72 : f32 to vector<2x128xf32>
    %88 = arith.maximumf %86, %87 : vector<2x128xf32>
    %c4_73 = arith.constant 4 : index
    %c128_74 = arith.constant 128 : index
    %89 = vector.load %arg6[%c4_73, %c128_74] : memref<16x512xf32, #tpu.memory_space<vmem>>, vector<2x128xf32>
    %90 = arith.truncf %61 : vector<2x128xf32> to vector<2x128xbf16>
    %c1_75 = arith.constant 1 : index
    %c0_76 = arith.constant 0 : index
    %c0_77 = arith.constant 0 : index
    %91 = vector.load %arg4[%c1_75, %c0_76, %c0_77] : memref<4x128x128xbf16, #tpu.memory_space<vmem>>, vector<1x128x128xbf16>
    %92 = vector.shape_cast %91 : vector<1x128x128xbf16> to vector<128x128xbf16>
    %cst_78 = arith.constant dense<0.000000e+00> : vector<2x128xf32>
    %93 = tpu.matmul %90, %92, %cst_78 {dimension_numbers = #tpu.dot_dimension_numbers<[1], [0], [0], [1], [0, 0, 1, 1], [], []>} : vector<2x128xbf16>, vector<128x128xbf16>, vector<2x128xf32> -> vector<2x128xf32>
    %94 = arith.addf %89, %93 : vector<2x128xf32>
    %cst_79 = arith.constant 0.000000e+00 : f32
    %95 = vector.broadcast %cst_79 : f32 to vector<2x128xf32>
    %96 = arith.maximumf %94, %95 : vector<2x128xf32>
    %c4_80 = arith.constant 4 : index
    %c256_81 = arith.constant 256 : index
    %97 = vector.load %arg6[%c4_80, %c256_81] : memref<16x512xf32, #tpu.memory_space<vmem>>, vector<2x128xf32>
    %98 = arith.truncf %69 : vector<2x128xf32> to vector<2x128xbf16>
    %c2_82 = arith.constant 2 : index
    %c0_83 = arith.constant 0 : index
    %c0_84 = arith.constant 0 : index
    %99 = vector.load %arg4[%c2_82, %c0_83, %c0_84] : memref<4x128x128xbf16, #tpu.memory_space<vmem>>, vector<1x128x128xbf16>
    %100 = vector.shape_cast %99 : vector<1x128x128xbf16> to vector<128x128xbf16>
    %cst_85 = arith.constant dense<0.000000e+00> : vector<2x128xf32>
    %101 = tpu.matmul %98, %100, %cst_85 {dimension_numbers = #tpu.dot_dimension_numbers<[1], [0], [0], [1], [0, 0, 1, 1], [], []>} : vector<2x128xbf16>, vector<128x128xbf16>, vector<2x128xf32> -> vector<2x128xf32>
    %102 = arith.addf %97, %101 : vector<2x128xf32>
    %cst_86 = arith.constant 0.000000e+00 : f32
    %103 = vector.broadcast %cst_86 : f32 to vector<2x128xf32>
    %104 = arith.maximumf %102, %103 : vector<2x128xf32>
    %c4_87 = arith.constant 4 : index
    %c384_88 = arith.constant 384 : index
    %105 = vector.load %arg6[%c4_87, %c384_88] : memref<16x512xf32, #tpu.memory_space<vmem>>, vector<2x128xf32>
    %106 = arith.truncf %76 : vector<2x128xf32> to vector<2x128xbf16>
    %c3_89 = arith.constant 3 : index
    %c0_90 = arith.constant 0 : index
    %c0_91 = arith.constant 0 : index
    %107 = vector.load %arg4[%c3_89, %c0_90, %c0_91] : memref<4x128x128xbf16, #tpu.memory_space<vmem>>, vector<1x128x128xbf16>
    %108 = vector.shape_cast %107 : vector<1x128x128xbf16> to vector<128x128xbf16>
    %cst_92 = arith.constant dense<0.000000e+00> : vector<2x128xf32>
    %109 = tpu.matmul %106, %108, %cst_92 {dimension_numbers = #tpu.dot_dimension_numbers<[1], [0], [0], [1], [0, 0, 1, 1], [], []>} : vector<2x128xbf16>, vector<128x128xbf16>, vector<2x128xf32> -> vector<2x128xf32>
    %110 = arith.addf %105, %109 : vector<2x128xf32>
    %111 = math.tanh %110 : vector<2x128xf32>
    %112 = tpu.concatenate %88, %96, %104, %111 in 0 : vector<2x128xf32>, vector<2x128xf32>, vector<2x128xf32>, vector<2x128xf32> -> vector<8x128xf32>
    %c0_93 = arith.constant 0 : index
    %c2_94 = arith.constant 2 : index
    %c0_95 = arith.constant 0 : index
    %c0_96 = arith.constant 0 : index
    %113 = vector.load %arg5[%c0_93, %c2_94, %c0_95, %c0_96] : memref<1x8x8x128xf32, #tpu.memory_space<vmem>>, vector<1x1x8x128xf32>
    %114 = vector.shape_cast %113 : vector<1x1x8x128xf32> to vector<8x128xf32>
    %115 = vector.shape_cast %112 : vector<8x128xf32> to vector<1x1x8x128xf32>
    tpu.vector_store %arg5[%c0_93, %c2_94, %c0_95, %c0_96], %115 {strides = array<i32>} : memref<1x8x8x128xf32, #tpu.memory_space<vmem>>, vector<1x1x8x128xf32>,
    %c6 = arith.constant 6 : index
    %c0_97 = arith.constant 0 : index
    %116 = vector.load %arg6[%c6, %c0_97] : memref<16x512xf32, #tpu.memory_space<vmem>>, vector<2x128xf32>
    %117 = arith.truncf %88 : vector<2x128xf32> to vector<2x128xbf16>
    %c0_98 = arith.constant 0 : index
    %c0_99 = arith.constant 0 : index
    %c0_100 = arith.constant 0 : index
    %118 = vector.load %arg4[%c0_98, %c0_99, %c0_100] : memref<4x128x128xbf16, #tpu.memory_space<vmem>>, vector<1x128x128xbf16>
    %119 = vector.shape_cast %118 : vector<1x128x128xbf16> to vector<128x128xbf16>
    %cst_101 = arith.constant dense<0.000000e+00> : vector<2x128xf32>
    %120 = tpu.matmul %117, %119, %cst_101 {dimension_numbers = #tpu.dot_dimension_numbers<[1], [0], [0], [1], [0, 0, 1, 1], [], []>} : vector<2x128xbf16>, vector<128x128xbf16>, vector<2x128xf32> -> vector<2x128xf32>
    %121 = arith.addf %116, %120 : vector<2x128xf32>
    %cst_102 = arith.constant 0.000000e+00 : f32
    %122 = vector.broadcast %cst_102 : f32 to vector<2x128xf32>
    %123 = arith.maximumf %121, %122 : vector<2x128xf32>
    %c6_103 = arith.constant 6 : index
    %c128_104 = arith.constant 128 : index
    %124 = vector.load %arg6[%c6_103, %c128_104] : memref<16x512xf32, #tpu.memory_space<vmem>>, vector<2x128xf32>
    %125 = arith.truncf %96 : vector<2x128xf32> to vector<2x128xbf16>
    %c1_105 = arith.constant 1 : index
    %c0_106 = arith.constant 0 : index
    %c0_107 = arith.constant 0 : index
    %126 = vector.load %arg4[%c1_105, %c0_106, %c0_107] : memref<4x128x128xbf16, #tpu.memory_space<vmem>>, vector<1x128x128xbf16>
    %127 = vector.shape_cast %126 : vector<1x128x128xbf16> to vector<128x128xbf16>
    %cst_108 = arith.constant dense<0.000000e+00> : vector<2x128xf32>
    %128 = tpu.matmul %125, %127, %cst_108 {dimension_numbers = #tpu.dot_dimension_numbers<[1], [0], [0], [1], [0, 0, 1, 1], [], []>} : vector<2x128xbf16>, vector<128x128xbf16>, vector<2x128xf32> -> vector<2x128xf32>
    %129 = arith.addf %124, %128 : vector<2x128xf32>
    %cst_109 = arith.constant 0.000000e+00 : f32
    %130 = vector.broadcast %cst_109 : f32 to vector<2x128xf32>
    %131 = arith.maximumf %129, %130 : vector<2x128xf32>
    %c6_110 = arith.constant 6 : index
    %c256_111 = arith.constant 256 : index
    %132 = vector.load %arg6[%c6_110, %c256_111] : memref<16x512xf32, #tpu.memory_space<vmem>>, vector<2x128xf32>
    %133 = arith.truncf %104 : vector<2x128xf32> to vector<2x128xbf16>
    %c2_112 = arith.constant 2 : index
    %c0_113 = arith.constant 0 : index
    %c0_114 = arith.constant 0 : index
    %134 = vector.load %arg4[%c2_112, %c0_113, %c0_114] : memref<4x128x128xbf16, #tpu.memory_space<vmem>>, vector<1x128x128xbf16>
    %135 = vector.shape_cast %134 : vector<1x128x128xbf16> to vector<128x128xbf16>
    %cst_115 = arith.constant dense<0.000000e+00> : vector<2x128xf32>
    %136 = tpu.matmul %133, %135, %cst_115 {dimension_numbers = #tpu.dot_dimension_numbers<[1], [0], [0], [1], [0, 0, 1, 1], [], []>} : vector<2x128xbf16>, vector<128x128xbf16>, vector<2x128xf32> -> vector<2x128xf32>
    %137 = arith.addf %132, %136 : vector<2x128xf32>
    %cst_116 = arith.constant 0.000000e+00 : f32
    %138 = vector.broadcast %cst_116 : f32 to vector<2x128xf32>
    %139 = arith.maximumf %137, %138 : vector<2x128xf32>
    %c6_117 = arith.constant 6 : index
    %c384_118 = arith.constant 384 : index
    %140 = vector.load %arg6[%c6_117, %c384_118] : memref<16x512xf32, #tpu.memory_space<vmem>>, vector<2x128xf32>
    %141 = arith.truncf %111 : vector<2x128xf32> to vector<2x128xbf16>
    %c3_119 = arith.constant 3 : index
    %c0_120 = arith.constant 0 : index
    %c0_121 = arith.constant 0 : index
    %142 = vector.load %arg4[%c3_119, %c0_120, %c0_121] : memref<4x128x128xbf16, #tpu.memory_space<vmem>>, vector<1x128x128xbf16>
    %143 = vector.shape_cast %142 : vector<1x128x128xbf16> to vector<128x128xbf16>
    %cst_122 = arith.constant dense<0.000000e+00> : vector<2x128xf32>
    %144 = tpu.matmul %141, %143, %cst_122 {dimension_numbers = #tpu.dot_dimension_numbers<[1], [0], [0], [1], [0, 0, 1, 1], [], []>} : vector<2x128xbf16>, vector<128x128xbf16>, vector<2x128xf32> -> vector<2x128xf32>
    %145 = arith.addf %140, %144 : vector<2x128xf32>
    %146 = math.tanh %145 : vector<2x128xf32>
    %147 = tpu.concatenate %123, %131, %139, %146 in 0 : vector<2x128xf32>, vector<2x128xf32>, vector<2x128xf32>, vector<2x128xf32> -> vector<8x128xf32>
    %c0_123 = arith.constant 0 : index
    %c3_124 = arith.constant 3 : index
    %c0_125 = arith.constant 0 : index
    %c0_126 = arith.constant 0 : index
    %148 = vector.load %arg5[%c0_123, %c3_124, %c0_125, %c0_126] : memref<1x8x8x128xf32, #tpu.memory_space<vmem>>, vector<1x1x8x128xf32>
    %149 = vector.shape_cast %148 : vector<1x1x8x128xf32> to vector<8x128xf32>
    %150 = vector.shape_cast %147 : vector<8x128xf32> to vector<1x1x8x128xf32>
    tpu.vector_store %arg5[%c0_123, %c3_124, %c0_125, %c0_126], %150 {strides = array<i32>} : memref<1x8x8x128xf32, #tpu.memory_space<vmem>>, vector<1x1x8x128xf32>,
    %c8 = arith.constant 8 : index
    %c0_127 = arith.constant 0 : index
    %151 = vector.load %arg6[%c8, %c0_127] : memref<16x512xf32, #tpu.memory_space<vmem>>, vector<2x128xf32>
    %152 = arith.truncf %123 : vector<2x128xf32> to vector<2x128xbf16>
    %c0_128 = arith.constant 0 : index
    %c0_129 = arith.constant 0 : index
    %c0_130 = arith.constant 0 : index
    %153 = vector.load %arg4[%c0_128, %c0_129, %c0_130] : memref<4x128x128xbf16, #tpu.memory_space<vmem>>, vector<1x128x128xbf16>
    %154 = vector.shape_cast %153 : vector<1x128x128xbf16> to vector<128x128xbf16>
    %cst_131 = arith.constant dense<0.000000e+00> : vector<2x128xf32>
    %155 = tpu.matmul %152, %154, %cst_131 {dimension_numbers = #tpu.dot_dimension_numbers<[1], [0], [0], [1], [0, 0, 1, 1], [], []>} : vector<2x128xbf16>, vector<128x128xbf16>, vector<2x128xf32> -> vector<2x128xf32>
    %156 = arith.addf %151, %155 : vector<2x128xf32>
    %cst_132 = arith.constant 0.000000e+00 : f32
    %157 = vector.broadcast %cst_132 : f32 to vector<2x128xf32>
    %158 = arith.maximumf %156, %157 : vector<2x128xf32>
    %c8_133 = arith.constant 8 : index
    %c128_134 = arith.constant 128 : index
    %159 = vector.load %arg6[%c8_133, %c128_134] : memref<16x512xf32, #tpu.memory_space<vmem>>, vector<2x128xf32>
    %160 = arith.truncf %131 : vector<2x128xf32> to vector<2x128xbf16>
    %c1_135 = arith.constant 1 : index
    %c0_136 = arith.constant 0 : index
    %c0_137 = arith.constant 0 : index
    %161 = vector.load %arg4[%c1_135, %c0_136, %c0_137] : memref<4x128x128xbf16, #tpu.memory_space<vmem>>, vector<1x128x128xbf16>
    %162 = vector.shape_cast %161 : vector<1x128x128xbf16> to vector<128x128xbf16>
    %cst_138 = arith.constant dense<0.000000e+00> : vector<2x128xf32>
    %163 = tpu.matmul %160, %162, %cst_138 {dimension_numbers = #tpu.dot_dimension_numbers<[1], [0], [0], [1], [0, 0, 1, 1], [], []>} : vector<2x128xbf16>, vector<128x128xbf16>, vector<2x128xf32> -> vector<2x128xf32>
    %164 = arith.addf %159, %163 : vector<2x128xf32>
    %cst_139 = arith.constant 0.000000e+00 : f32
    %165 = vector.broadcast %cst_139 : f32 to vector<2x128xf32>
    %166 = arith.maximumf %164, %165 : vector<2x128xf32>
    %c8_140 = arith.constant 8 : index
    %c256_141 = arith.constant 256 : index
    %167 = vector.load %arg6[%c8_140, %c256_141] : memref<16x512xf32, #tpu.memory_space<vmem>>, vector<2x128xf32>
    %168 = arith.truncf %139 : vector<2x128xf32> to vector<2x128xbf16>
    %c2_142 = arith.constant 2 : index
    %c0_143 = arith.constant 0 : index
    %c0_144 = arith.constant 0 : index
    %169 = vector.load %arg4[%c2_142, %c0_143, %c0_144] : memref<4x128x128xbf16, #tpu.memory_space<vmem>>, vector<1x128x128xbf16>
    %170 = vector.shape_cast %169 : vector<1x128x128xbf16> to vector<128x128xbf16>
    %cst_145 = arith.constant dense<0.000000e+00> : vector<2x128xf32>
    %171 = tpu.matmul %168, %170, %cst_145 {dimension_numbers = #tpu.dot_dimension_numbers<[1], [0], [0], [1], [0, 0, 1, 1], [], []>} : vector<2x128xbf16>, vector<128x128xbf16>, vector<2x128xf32> -> vector<2x128xf32>
    %172 = arith.addf %167, %171 : vector<2x128xf32>
    %cst_146 = arith.constant 0.000000e+00 : f32
    %173 = vector.broadcast %cst_146 : f32 to vector<2x128xf32>
    %174 = arith.maximumf %172, %173 : vector<2x128xf32>
    %c8_147 = arith.constant 8 : index
    %c384_148 = arith.constant 384 : index
    %175 = vector.load %arg6[%c8_147, %c384_148] : memref<16x512xf32, #tpu.memory_space<vmem>>, vector<2x128xf32>
    %176 = arith.truncf %146 : vector<2x128xf32> to vector<2x128xbf16>
    %c3_149 = arith.constant 3 : index
    %c0_150 = arith.constant 0 : index
    %c0_151 = arith.constant 0 : index
    %177 = vector.load %arg4[%c3_149, %c0_150, %c0_151] : memref<4x128x128xbf16, #tpu.memory_space<vmem>>, vector<1x128x128xbf16>
    %178 = vector.shape_cast %177 : vector<1x128x128xbf16> to vector<128x128xbf16>
    %cst_152 = arith.constant dense<0.000000e+00> : vector<2x128xf32>
    %179 = tpu.matmul %176, %178, %cst_152 {dimension_numbers = #tpu.dot_dimension_numbers<[1], [0], [0], [1], [0, 0, 1, 1], [], []>} : vector<2x128xbf16>, vector<128x128xbf16>, vector<2x128xf32> -> vector<2x128xf32>
    %180 = arith.addf %175, %179 : vector<2x128xf32>
    %181 = math.tanh %180 : vector<2x128xf32>
    %182 = tpu.concatenate %158, %166, %174, %181 in 0 : vector<2x128xf32>, vector<2x128xf32>, vector<2x128xf32>, vector<2x128xf32> -> vector<8x128xf32>
    %c0_153 = arith.constant 0 : index
    %c4_154 = arith.constant 4 : index
    %c0_155 = arith.constant 0 : index
    %c0_156 = arith.constant 0 : index
    %183 = vector.load %arg5[%c0_153, %c4_154, %c0_155, %c0_156] : memref<1x8x8x128xf32, #tpu.memory_space<vmem>>, vector<1x1x8x128xf32>
    %184 = vector.shape_cast %183 : vector<1x1x8x128xf32> to vector<8x128xf32>
    %185 = vector.shape_cast %182 : vector<8x128xf32> to vector<1x1x8x128xf32>
    tpu.vector_store %arg5[%c0_153, %c4_154, %c0_155, %c0_156], %185 {strides = array<i32>} : memref<1x8x8x128xf32, #tpu.memory_space<vmem>>, vector<1x1x8x128xf32>,
    %c10 = arith.constant 10 : index
    %c0_157 = arith.constant 0 : index
    %186 = vector.load %arg6[%c10, %c0_157] : memref<16x512xf32, #tpu.memory_space<vmem>>, vector<2x128xf32>
    %187 = arith.truncf %158 : vector<2x128xf32> to vector<2x128xbf16>
    %c0_158 = arith.constant 0 : index
    %c0_159 = arith.constant 0 : index
    %c0_160 = arith.constant 0 : index
    %188 = vector.load %arg4[%c0_158, %c0_159, %c0_160] : memref<4x128x128xbf16, #tpu.memory_space<vmem>>, vector<1x128x128xbf16>
    %189 = vector.shape_cast %188 : vector<1x128x128xbf16> to vector<128x128xbf16>
    %cst_161 = arith.constant dense<0.000000e+00> : vector<2x128xf32>
    %190 = tpu.matmul %187, %189, %cst_161 {dimension_numbers = #tpu.dot_dimension_numbers<[1], [0], [0], [1], [0, 0, 1, 1], [], []>} : vector<2x128xbf16>, vector<128x128xbf16>, vector<2x128xf32> -> vector<2x128xf32>
    %191 = arith.addf %186, %190 : vector<2x128xf32>
    %cst_162 = arith.constant 0.000000e+00 : f32
    %192 = vector.broadcast %cst_162 : f32 to vector<2x128xf32>
    %193 = arith.maximumf %191, %192 : vector<2x128xf32>
    %c10_163 = arith.constant 10 : index
    %c128_164 = arith.constant 128 : index
    %194 = vector.load %arg6[%c10_163, %c128_164] : memref<16x512xf32, #tpu.memory_space<vmem>>, vector<2x128xf32>
    %195 = arith.truncf %166 : vector<2x128xf32> to vector<2x128xbf16>
    %c1_165 = arith.constant 1 : index
    %c0_166 = arith.constant 0 : index
    %c0_167 = arith.constant 0 : index
    %196 = vector.load %arg4[%c1_165, %c0_166, %c0_167] : memref<4x128x128xbf16, #tpu.memory_space<vmem>>, vector<1x128x128xbf16>
    %197 = vector.shape_cast %196 : vector<1x128x128xbf16> to vector<128x128xbf16>
    %cst_168 = arith.constant dense<0.000000e+00> : vector<2x128xf32>
    %198 = tpu.matmul %195, %197, %cst_168 {dimension_numbers = #tpu.dot_dimension_numbers<[1], [0], [0], [1], [0, 0, 1, 1], [], []>} : vector<2x128xbf16>, vector<128x128xbf16>, vector<2x128xf32> -> vector<2x128xf32>
    %199 = arith.addf %194, %198 : vector<2x128xf32>
    %cst_169 = arith.constant 0.000000e+00 : f32
    %200 = vector.broadcast %cst_169 : f32 to vector<2x128xf32>
    %201 = arith.maximumf %199, %200 : vector<2x128xf32>
    %c10_170 = arith.constant 10 : index
    %c256_171 = arith.constant 256 : index
    %202 = vector.load %arg6[%c10_170, %c256_171] : memref<16x512xf32, #tpu.memory_space<vmem>>, vector<2x128xf32>
    %203 = arith.truncf %174 : vector<2x128xf32> to vector<2x128xbf16>
    %c2_172 = arith.constant 2 : index
    %c0_173 = arith.constant 0 : index
    %c0_174 = arith.constant 0 : index
    %204 = vector.load %arg4[%c2_172, %c0_173, %c0_174] : memref<4x128x128xbf16, #tpu.memory_space<vmem>>, vector<1x128x128xbf16>
    %205 = vector.shape_cast %204 : vector<1x128x128xbf16> to vector<128x128xbf16>
    %cst_175 = arith.constant dense<0.000000e+00> : vector<2x128xf32>
    %206 = tpu.matmul %203, %205, %cst_175 {dimension_numbers = #tpu.dot_dimension_numbers<[1], [0], [0], [1], [0, 0, 1, 1], [], []>} : vector<2x128xbf16>, vector<128x128xbf16>, vector<2x128xf32> -> vector<2x128xf32>
    %207 = arith.addf %202, %206 : vector<2x128xf32>
    %cst_176 = arith.constant 0.000000e+00 : f32
    %208 = vector.broadcast %cst_176 : f32 to vector<2x128xf32>
    %209 = arith.maximumf %207, %208 : vector<2x128xf32>
    %c10_177 = arith.constant 10 : index
    %c384_178 = arith.constant 384 : index
    %210 = vector.load %arg6[%c10_177, %c384_178] : memref<16x512xf32, #tpu.memory_space<vmem>>, vector<2x128xf32>
    %211 = arith.truncf %181 : vector<2x128xf32> to vector<2x128xbf16>
    %c3_179 = arith.constant 3 : index
    %c0_180 = arith.constant 0 : index
    %c0_181 = arith.constant 0 : index
    %212 = vector.load %arg4[%c3_179, %c0_180, %c0_181] : memref<4x128x128xbf16, #tpu.memory_space<vmem>>, vector<1x128x128xbf16>
    %213 = vector.shape_cast %212 : vector<1x128x128xbf16> to vector<128x128xbf16>
    %cst_182 = arith.constant dense<0.000000e+00> : vector<2x128xf32>
    %214 = tpu.matmul %211, %213, %cst_182 {dimension_numbers = #tpu.dot_dimension_numbers<[1], [0], [0], [1], [0, 0, 1, 1], [], []>} : vector<2x128xbf16>, vector<128x128xbf16>, vector<2x128xf32> -> vector<2x128xf32>
    %215 = arith.addf %210, %214 : vector<2x128xf32>
    %216 = math.tanh %215 : vector<2x128xf32>
    %217 = tpu.concatenate %193, %201, %209, %216 in 0 : vector<2x128xf32>, vector<2x128xf32>, vector<2x128xf32>, vector<2x128xf32> -> vector<8x128xf32>
    %c0_183 = arith.constant 0 : index
    %c5 = arith.constant 5 : index
    %c0_184 = arith.constant 0 : index
    %c0_185 = arith.constant 0 : index
    %218 = vector.load %arg5[%c0_183, %c5, %c0_184, %c0_185] : memref<1x8x8x128xf32, #tpu.memory_space<vmem>>, vector<1x1x8x128xf32>
    %219 = vector.shape_cast %218 : vector<1x1x8x128xf32> to vector<8x128xf32>
    %220 = vector.shape_cast %217 : vector<8x128xf32> to vector<1x1x8x128xf32>
    tpu.vector_store %arg5[%c0_183, %c5, %c0_184, %c0_185], %220 {strides = array<i32>} : memref<1x8x8x128xf32, #tpu.memory_space<vmem>>, vector<1x1x8x128xf32>,
    %c12 = arith.constant 12 : index
    %c0_186 = arith.constant 0 : index
    %221 = vector.load %arg6[%c12, %c0_186] : memref<16x512xf32, #tpu.memory_space<vmem>>, vector<2x128xf32>
    %222 = arith.truncf %193 : vector<2x128xf32> to vector<2x128xbf16>
    %c0_187 = arith.constant 0 : index
    %c0_188 = arith.constant 0 : index
    %c0_189 = arith.constant 0 : index
    %223 = vector.load %arg4[%c0_187, %c0_188, %c0_189] : memref<4x128x128xbf16, #tpu.memory_space<vmem>>, vector<1x128x128xbf16>
    %224 = vector.shape_cast %223 : vector<1x128x128xbf16> to vector<128x128xbf16>
    %cst_190 = arith.constant dense<0.000000e+00> : vector<2x128xf32>
    %225 = tpu.matmul %222, %224, %cst_190 {dimension_numbers = #tpu.dot_dimension_numbers<[1], [0], [0], [1], [0, 0, 1, 1], [], []>} : vector<2x128xbf16>, vector<128x128xbf16>, vector<2x128xf32> -> vector<2x128xf32>
    %226 = arith.addf %221, %225 : vector<2x128xf32>
    %cst_191 = arith.constant 0.000000e+00 : f32
    %227 = vector.broadcast %cst_191 : f32 to vector<2x128xf32>
    %228 = arith.maximumf %226, %227 : vector<2x128xf32>
    %c12_192 = arith.constant 12 : index
    %c128_193 = arith.constant 128 : index
    %229 = vector.load %arg6[%c12_192, %c128_193] : memref<16x512xf32, #tpu.memory_space<vmem>>, vector<2x128xf32>
    %230 = arith.truncf %201 : vector<2x128xf32> to vector<2x128xbf16>
    %c1_194 = arith.constant 1 : index
    %c0_195 = arith.constant 0 : index
    %c0_196 = arith.constant 0 : index
    %231 = vector.load %arg4[%c1_194, %c0_195, %c0_196] : memref<4x128x128xbf16, #tpu.memory_space<vmem>>, vector<1x128x128xbf16>
    %232 = vector.shape_cast %231 : vector<1x128x128xbf16> to vector<128x128xbf16>
    %cst_197 = arith.constant dense<0.000000e+00> : vector<2x128xf32>
    %233 = tpu.matmul %230, %232, %cst_197 {dimension_numbers = #tpu.dot_dimension_numbers<[1], [0], [0], [1], [0, 0, 1, 1], [], []>} : vector<2x128xbf16>, vector<128x128xbf16>, vector<2x128xf32> -> vector<2x128xf32>
    %234 = arith.addf %229, %233 : vector<2x128xf32>
    %cst_198 = arith.constant 0.000000e+00 : f32
    %235 = vector.broadcast %cst_198 : f32 to vector<2x128xf32>
    %236 = arith.maximumf %234, %235 : vector<2x128xf32>
    %c12_199 = arith.constant 12 : index
    %c256_200 = arith.constant 256 : index
    %237 = vector.load %arg6[%c12_199, %c256_200] : memref<16x512xf32, #tpu.memory_space<vmem>>, vector<2x128xf32>
    %238 = arith.truncf %209 : vector<2x128xf32> to vector<2x128xbf16>
    %c2_201 = arith.constant 2 : index
    %c0_202 = arith.constant 0 : index
    %c0_203 = arith.constant 0 : index
    %239 = vector.load %arg4[%c2_201, %c0_202, %c0_203] : memref<4x128x128xbf16, #tpu.memory_space<vmem>>, vector<1x128x128xbf16>
    %240 = vector.shape_cast %239 : vector<1x128x128xbf16> to vector<128x128xbf16>
    %cst_204 = arith.constant dense<0.000000e+00> : vector<2x128xf32>
    %241 = tpu.matmul %238, %240, %cst_204 {dimension_numbers = #tpu.dot_dimension_numbers<[1], [0], [0], [1], [0, 0, 1, 1], [], []>} : vector<2x128xbf16>, vector<128x128xbf16>, vector<2x128xf32> -> vector<2x128xf32>
    %242 = arith.addf %237, %241 : vector<2x128xf32>
    %cst_205 = arith.constant 0.000000e+00 : f32
    %243 = vector.broadcast %cst_205 : f32 to vector<2x128xf32>
    %244 = arith.maximumf %242, %243 : vector<2x128xf32>
    %c12_206 = arith.constant 12 : index
    %c384_207 = arith.constant 384 : index
    %245 = vector.load %arg6[%c12_206, %c384_207] : memref<16x512xf32, #tpu.memory_space<vmem>>, vector<2x128xf32>
    %246 = arith.truncf %216 : vector<2x128xf32> to vector<2x128xbf16>
    %c3_208 = arith.constant 3 : index
    %c0_209 = arith.constant 0 : index
    %c0_210 = arith.constant 0 : index
    %247 = vector.load %arg4[%c3_208, %c0_209, %c0_210] : memref<4x128x128xbf16, #tpu.memory_space<vmem>>, vector<1x128x128xbf16>
    %248 = vector.shape_cast %247 : vector<1x128x128xbf16> to vector<128x128xbf16>
    %cst_211 = arith.constant dense<0.000000e+00> : vector<2x128xf32>
    %249 = tpu.matmul %246, %248, %cst_211 {dimension_numbers = #tpu.dot_dimension_numbers<[1], [0], [0], [1], [0, 0, 1, 1], [], []>} : vector<2x128xbf16>, vector<128x128xbf16>, vector<2x128xf32> -> vector<2x128xf32>
    %250 = arith.addf %245, %249 : vector<2x128xf32>
    %251 = math.tanh %250 : vector<2x128xf32>
    %252 = tpu.concatenate %228, %236, %244, %251 in 0 : vector<2x128xf32>, vector<2x128xf32>, vector<2x128xf32>, vector<2x128xf32> -> vector<8x128xf32>
    %c0_212 = arith.constant 0 : index
    %c6_213 = arith.constant 6 : index
    %c0_214 = arith.constant 0 : index
    %c0_215 = arith.constant 0 : index
    %253 = vector.load %arg5[%c0_212, %c6_213, %c0_214, %c0_215] : memref<1x8x8x128xf32, #tpu.memory_space<vmem>>, vector<1x1x8x128xf32>
    %254 = vector.shape_cast %253 : vector<1x1x8x128xf32> to vector<8x128xf32>
    %255 = vector.shape_cast %252 : vector<8x128xf32> to vector<1x1x8x128xf32>
    tpu.vector_store %arg5[%c0_212, %c6_213, %c0_214, %c0_215], %255 {strides = array<i32>} : memref<1x8x8x128xf32, #tpu.memory_space<vmem>>, vector<1x1x8x128xf32>,
    %c14 = arith.constant 14 : index
    %c0_216 = arith.constant 0 : index
    %256 = vector.load %arg6[%c14, %c0_216] : memref<16x512xf32, #tpu.memory_space<vmem>>, vector<2x128xf32>
    %257 = arith.truncf %228 : vector<2x128xf32> to vector<2x128xbf16>
    %c0_217 = arith.constant 0 : index
    %c0_218 = arith.constant 0 : index
    %c0_219 = arith.constant 0 : index
    %258 = vector.load %arg4[%c0_217, %c0_218, %c0_219] : memref<4x128x128xbf16, #tpu.memory_space<vmem>>, vector<1x128x128xbf16>
    %259 = vector.shape_cast %258 : vector<1x128x128xbf16> to vector<128x128xbf16>
    %cst_220 = arith.constant dense<0.000000e+00> : vector<2x128xf32>
    %260 = tpu.matmul %257, %259, %cst_220 {dimension_numbers = #tpu.dot_dimension_numbers<[1], [0], [0], [1], [0, 0, 1, 1], [], []>} : vector<2x128xbf16>, vector<128x128xbf16>, vector<2x128xf32> -> vector<2x128xf32>
    %261 = arith.addf %256, %260 : vector<2x128xf32>
    %cst_221 = arith.constant 0.000000e+00 : f32
    %262 = vector.broadcast %cst_221 : f32 to vector<2x128xf32>
    %263 = arith.maximumf %261, %262 : vector<2x128xf32>
    %c14_222 = arith.constant 14 : index
    %c128_223 = arith.constant 128 : index
    %264 = vector.load %arg6[%c14_222, %c128_223] : memref<16x512xf32, #tpu.memory_space<vmem>>, vector<2x128xf32>
    %265 = arith.truncf %236 : vector<2x128xf32> to vector<2x128xbf16>
    %c1_224 = arith.constant 1 : index
    %c0_225 = arith.constant 0 : index
    %c0_226 = arith.constant 0 : index
    %266 = vector.load %arg4[%c1_224, %c0_225, %c0_226] : memref<4x128x128xbf16, #tpu.memory_space<vmem>>, vector<1x128x128xbf16>
    %267 = vector.shape_cast %266 : vector<1x128x128xbf16> to vector<128x128xbf16>
    %cst_227 = arith.constant dense<0.000000e+00> : vector<2x128xf32>
    %268 = tpu.matmul %265, %267, %cst_227 {dimension_numbers = #tpu.dot_dimension_numbers<[1], [0], [0], [1], [0, 0, 1, 1], [], []>} : vector<2x128xbf16>, vector<128x128xbf16>, vector<2x128xf32> -> vector<2x128xf32>
    %269 = arith.addf %264, %268 : vector<2x128xf32>
    %cst_228 = arith.constant 0.000000e+00 : f32
    %270 = vector.broadcast %cst_228 : f32 to vector<2x128xf32>
    %271 = arith.maximumf %269, %270 : vector<2x128xf32>
    %c14_229 = arith.constant 14 : index
    %c256_230 = arith.constant 256 : index
    %272 = vector.load %arg6[%c14_229, %c256_230] : memref<16x512xf32, #tpu.memory_space<vmem>>, vector<2x128xf32>
    %273 = arith.truncf %244 : vector<2x128xf32> to vector<2x128xbf16>
    %c2_231 = arith.constant 2 : index
    %c0_232 = arith.constant 0 : index
    %c0_233 = arith.constant 0 : index
    %274 = vector.load %arg4[%c2_231, %c0_232, %c0_233] : memref<4x128x128xbf16, #tpu.memory_space<vmem>>, vector<1x128x128xbf16>
    %275 = vector.shape_cast %274 : vector<1x128x128xbf16> to vector<128x128xbf16>
    %cst_234 = arith.constant dense<0.000000e+00> : vector<2x128xf32>
    %276 = tpu.matmul %273, %275, %cst_234 {dimension_numbers = #tpu.dot_dimension_numbers<[1], [0], [0], [1], [0, 0, 1, 1], [], []>} : vector<2x128xbf16>, vector<128x128xbf16>, vector<2x128xf32> -> vector<2x128xf32>
    %277 = arith.addf %272, %276 : vector<2x128xf32>
    %cst_235 = arith.constant 0.000000e+00 : f32
    %278 = vector.broadcast %cst_235 : f32 to vector<2x128xf32>
    %279 = arith.maximumf %277, %278 : vector<2x128xf32>
    %c14_236 = arith.constant 14 : index
    %c384_237 = arith.constant 384 : index
    %280 = vector.load %arg6[%c14_236, %c384_237] : memref<16x512xf32, #tpu.memory_space<vmem>>, vector<2x128xf32>
    %281 = arith.truncf %251 : vector<2x128xf32> to vector<2x128xbf16>
    %c3_238 = arith.constant 3 : index
    %c0_239 = arith.constant 0 : index
    %c0_240 = arith.constant 0 : index
    %282 = vector.load %arg4[%c3_238, %c0_239, %c0_240] : memref<4x128x128xbf16, #tpu.memory_space<vmem>>, vector<1x128x128xbf16>
    %283 = vector.shape_cast %282 : vector<1x128x128xbf16> to vector<128x128xbf16>
    %cst_241 = arith.constant dense<0.000000e+00> : vector<2x128xf32>
    %284 = tpu.matmul %281, %283, %cst_241 {dimension_numbers = #tpu.dot_dimension_numbers<[1], [0], [0], [1], [0, 0, 1, 1], [], []>} : vector<2x128xbf16>, vector<128x128xbf16>, vector<2x128xf32> -> vector<2x128xf32>
    %285 = arith.addf %280, %284 : vector<2x128xf32>
    %286 = math.tanh %285 : vector<2x128xf32>
    %287 = tpu.concatenate %263, %271, %279, %286 in 0 : vector<2x128xf32>, vector<2x128xf32>, vector<2x128xf32>, vector<2x128xf32> -> vector<8x128xf32>
    %c0_242 = arith.constant 0 : index
    %c7 = arith.constant 7 : index
    %c0_243 = arith.constant 0 : index
    %c0_244 = arith.constant 0 : index
    %288 = vector.load %arg5[%c0_242, %c7, %c0_243, %c0_244] : memref<1x8x8x128xf32, #tpu.memory_space<vmem>>, vector<1x1x8x128xf32>
    %289 = vector.shape_cast %288 : vector<1x1x8x128xf32> to vector<8x128xf32>
    %290 = vector.shape_cast %287 : vector<8x128xf32> to vector<1x1x8x128xf32>
    tpu.vector_store %arg5[%c0_242, %c7, %c0_243, %c0_244], %290 {strides = array<i32>} : memref<1x8x8x128xf32, #tpu.memory_space<vmem>>, vector<1x1x8x128xf32>,
    return
  }
  func.func @transform_0(%arg0: i32) -> (i32, i32) {
    %c0_i32 = arith.constant 0 : i32
    %c0_i32_0 = arith.constant 0 : i32
    %c0_i32_1 = arith.constant 0 : i32
    return %c0_i32, %c0_i32_0 : i32, i32
  }
  func.func @transform_1(%arg0: i32) -> (i32, i32) {
    %c0_i32 = arith.constant 0 : i32
    %c0_i32_0 = arith.constant 0 : i32
    return %c0_i32, %arg0 : i32, i32
  }
  func.func @transform_2(%arg0: i32) -> (i32, i32) {
    %c0_i32 = arith.constant 0 : i32
    %c0_i32_0 = arith.constant 0 : i32
    return %c0_i32, %arg0 : i32, i32
  }
  func.func @transform_3(%arg0: i32) -> (i32, i32, i32) {
    %c0_i32 = arith.constant 0 : i32
    %c0_i32_0 = arith.constant 0 : i32
    %c0_i32_1 = arith.constant 0 : i32
    return %arg0, %c0_i32, %c0_i32_0 : i32, i32, i32
  }
  func.func @transform_4(%arg0: i32) -> (i32, i32, i32, i32) {
    %c0_i32 = arith.constant 0 : i32
    %c0_i32_0 = arith.constant 0 : i32
    %c0_i32_1 = arith.constant 0 : i32
    %c0_i32_2 = arith.constant 0 : i32
    return %arg0, %c0_i32, %c0_i32_0, %c0_i32_1 : i32, i32, i32, i32
  }
}

</mosaic_0001>

<llo_original>
// kernel: forward.1
$region0: #{forward.1}
  #allocation0 [shape = 'u32[]', space=smem, size = 0x4, offset = 0x4, fixed_abs, tag = 'smem constant byte address 0x4 - core index']
  #allocation1 [shape = 'u32[144,128]{1,0:T(1,128)}', space=vmem, size = 0x12000, scoped, tag = 'internal scratch']
  #allocation2 [shape = 'f32[16,512]{1,0:T(8,128)}', space=vmem, size = 0x8000, scoped, tag = 'scratch operand']
  %s0 = inlined_call_operand.vmem [shape: f32[16,8], index: 0, kind: input, shape index: {}]
  %s1 = inlined_call_operand.vmem [shape: f32[8,512], index: 1, kind: input, shape index: {}]
  %s2 = inlined_call_operand.vmem [shape: f32[1,512], index: 2, kind: input, shape index: {}]
  %s3 = inlined_call_operand.vmem [shape: bf16[4,128,128], index: 3, kind: input, shape index: {}]
  %s4 = inlined_call_operand.vmem [shape: f32[1,8,8,128], index: 4, kind: output, shape index: {}]
  %s5 = sld [smem:[#allocation0]]
  $region26: #{forward.1} parent=0
    _
  %s7 = ssub.s32 1, %s5
  %s8 = scalar_select 0, %s7, %s5
  // Predicated region
  $region2: #{forward.1} parent=0 // pred_check
    _
  $region3: #{forward.1} parent=0 // pred_check_branch
    %10 = sbr.rel (0) target = $region5
  $region4: #{forward.1} parent=0 // pred_region
    _
  $region5: #{forward.1} parent=0 // pred_fallthru
    _
  // Predicated region
  $region6: #{forward.1} parent=0 // pred_check
    _
  $region7: #{forward.1} parent=0 // pred_check_branch
    %12 = sbr.rel (0) target = $region9
  $region8: #{forward.1} parent=0 // pred_region
    _
  $region9: #{forward.1} parent=0 // pred_fallthru
    _
  // Predicated region
  $region10: #{forward.1} parent=0 // pred_check
    _
  $region11: #{forward.1} parent=0 // pred_check_branch
    %14 = sbr.rel (0) target = $region13
  $region12: #{forward.1} parent=0 // pred_region
    _
  $region13: #{forward.1} parent=0 // pred_fallthru
    _
  // Predicated region
  $region14: #{forward.1} parent=0 // pred_check
    _
  $region15: #{forward.1} parent=0 // pred_check_branch
    %16 = sbr.rel (0) target = $region17
  $region16: #{forward.1} parent=0 // pred_region
    _
  $region17: #{forward.1} parent=0 // pred_fallthru
    _
  %v18 = vld [vmem:[%s0] sm:$0xff]
  %v19 = vld [vmem:[%s0 + $0x8] sm:$0xff]
  %v20 = vld [vmem:[%s1] sm:$0xff]
  %v21 = vld [vmem:[%s1 + $0x8] sm:$0xff]
  %v22 = vld [vmem:[%s1 + $0x10] sm:$0xff]
  %v23 = vld [vmem:[%s1 + $0x18] sm:$0xff]
  %v24 = vld [vmem:[%s2] sm:$0xf]
  %v26 = vlaneseq
  %v27 = vshrl.u32 %v26, 7
  %v28 = vsub.s32 0, %v27
  %v29 = vrot.slane %v24, %v28
  %v30 = vlaneseq
  %v31 = vshrl.u32 %v30, 7
  %v32 = vsub.s32 1, %v31
  %v33 = vrot.slane %v24, %v32
  %v34 = vlaneseq
  %v35 = vshrl.u32 %v34, 7
  %v36 = vsub.s32 2, %v35
  %v37 = vrot.slane %v24, %v36
  %v38 = vlaneseq
  %v39 = vshrl.u32 %v38, 7
  %v40 = vsub.s32 3, %v39
  %v41 = vrot.slane %v24, %v40
  %vm46 = vcmask 64512
  %v48 = vsel %vm46, %v18, 0
  %v51 = vsel %vm46, %v19, 0
  %53 = vmatprep.subr.mxu0 0.0
  %54 = vmatpush1.msra.mxu0 0.0
  %55 = vmatprep.subr.mxu0 0.0
  %56 = vmatpush1.msra.mxu0 0.0
  %57 = vmatprep.subr.mxu0 0.0
  %58 = vmatpush1.msra.mxu0 0.0
  %59 = vmatprep.subr.mxu0 0.0
  %60 = vmatpush1.msra.mxu0 0.0
  %61 = vmatprep.subr.mxu0 0.0
  %62 = vmatpush1.msra.mxu0 0.0
  %63 = vmatprep.subr.mxu0 0.0
  %64 = vmatpush1.msra.mxu0 0.0
  %65 = vmatprep.subr.mxu0 0.0
  %66 = vmatpush1.msra.mxu0 0.0
  %67 = vmatprep.subr.mxu0 0.0
  %68 = vmatpush1.msra.mxu0 0.0
  %69 = vmatprep.subr.mxu0 0.0
  %70 = vmatpush1.msra.mxu0 0.0
  %71 = vmatprep.subr.mxu0 0.0
  %72 = vmatpush1.msra.mxu0 0.0
  %73 = vmatprep.subr.mxu0 0.0
  %74 = vmatpush1.msra.mxu0 0.0
  %75 = vmatprep.subr.mxu0 0.0
  %76 = vmatpush1.msra.mxu0 0.0
  %77 = vmatprep.subr.mxu0 0.0
  %78 = vmatpush1.msra.mxu0 0.0
  %79 = vmatprep.subr.mxu0 0.0
  %80 = vmatpush1.msra.mxu0 0.0
  %81 = vmatprep.subr.mxu0 0.0
  %82 = vmatpush1.msra.mxu0 0.0
  %83 = vmatprep.subr.mxu0 %v21
  %84 = vmatpush1.msra.mxu0 %v20
  %85 = vmatprep.subr.mxu0 0.0
  %86 = vmatpush2.msra.mxu0 0.0
  %87 = vmatprep.subr.mxu0 0.0
  %88 = vmatpush2.msra.mxu0 0.0
  %89 = vmatprep.subr.mxu0 0.0
  %90 = vmatpush2.msra.mxu0 0.0
  %91 = vmatprep.subr.mxu0 0.0
  %92 = vmatpush2.msra.mxu0 0.0
  %93 = vmatprep.subr.mxu0 0.0
  %94 = vmatpush2.msra.mxu0 0.0
  %95 = vmatprep.subr.mxu0 0.0
  %96 = vmatpush2.msra.mxu0 0.0
  %97 = vmatprep.subr.mxu0 0.0
  %98 = vmatpush2.msra.mxu0 0.0
  %99 = vmatprep.subr.mxu0 0.0
  %100 = vmatpush2.msra.mxu0 0.0
  %101 = vmatprep.subr.mxu0 0.0
  %102 = vmatpush2.msra.mxu0 0.0
  %103 = vmatprep.subr.mxu0 0.0
  %104 = vmatpush2.msra.mxu0 0.0
  %105 = vmatprep.subr.mxu0 0.0
  %106 = vmatpush2.msra.mxu0 0.0
  %107 = vmatprep.subr.mxu0 0.0
  %108 = vmatpush2.msra.mxu0 0.0
  %109 = vmatprep.subr.mxu0 0.0
  %110 = vmatpush2.msra.mxu0 0.0
  %111 = vmatprep.subr.mxu0 0.0
  %112 = vmatpush2.msra.mxu0 0.0
  %113 = vmatprep.subr.mxu0 0.0
  %114 = vmatpush2.msra.mxu0 0.0
  %115 = vmatprep.subr.mxu0 0.0
  %116 = vmatpush2.msra.mxu0 0.0
  %117 = vmatprep.mubr.f32.mxu0 0.0
  %118 = vmatmul.mubr.f32.gmra.mxu0 %v48
  %v119 = vpop.f32.mrf.mxu0
  %v120 = vadd.f32 %v29, %v119
  %v121 = vpop.f32.mrf.mxu0
  %v122 = vadd.f32 %v33, %v121
  %123 = vmatprep.mubr.f32.mxu0 0.0
  %124 = vmatmul.mubr.f32.gmra.mxu0 %v51
  %v125 = vpop.f32.mrf.mxu0
  %v126 = vadd.f32 %v29, %v125
  %v127 = vpop.f32.mrf.mxu0
  %v128 = vadd.f32 %v33, %v127
  %129 = vdwg.mxu0
  %130 = vmatprep.subr.mxu0 0.0
  %131 = vmatpush1.msra.mxu0 0.0
  %132 = vmatprep.subr.mxu0 0.0
  %133 = vmatpush1.msra.mxu0 0.0
  %134 = vmatprep.subr.mxu0 0.0
  %135 = vmatpush1.msra.mxu0 0.0
  %136 = vmatprep.subr.mxu0 0.0
  %137 = vmatpush1.msra.mxu0 0.0
  %138 = vmatprep.subr.mxu0 0.0
  %139 = vmatpush1.msra.mxu0 0.0
  %140 = vmatprep.subr.mxu0 0.0
  %141 = vmatpush1.msra.mxu0 0.0
  %142 = vmatprep.subr.mxu0 0.0
  %143 = vmatpush1.msra.mxu0 0.0
  %144 = vmatprep.subr.mxu0 0.0
  %145 = vmatpush1.msra.mxu0 0.0
  %146 = vmatprep.subr.mxu0 0.0
  %147 = vmatpush1.msra.mxu0 0.0
  %148 = vmatprep.subr.mxu0 0.0
  %149 = vmatpush1.msra.mxu0 0.0
  %150 = vmatprep.subr.mxu0 0.0
  %151 = vmatpush1.msra.mxu0 0.0
  %152 = vmatprep.subr.mxu0 0.0
  %153 = vmatpush1.msra.mxu0 0.0
  %154 = vmatprep.subr.mxu0 0.0
  %155 = vmatpush1.msra.mxu0 0.0
  %156 = vmatprep.subr.mxu0 0.0
  %157 = vmatpush1.msra.mxu0 0.0
  %158 = vmatprep.subr.mxu0 0.0
  %159 = vmatpush1.msra.mxu0 0.0
  %160 = vmatprep.subr.mxu0 %v23
  %161 = vmatpush1.msra.mxu0 %v22
  %162 = vmatprep.subr.mxu0 0.0
  %163 = vmatpush2.msra.mxu0 0.0
  %164 = vmatprep.subr.mxu0 0.0
  %165 = vmatpush2.msra.mxu0 0.0
  %166 = vmatprep.subr.mxu0 0.0
  %167 = vmatpush2.msra.mxu0 0.0
  %168 = vmatprep.subr.mxu0 0.0
  %169 = vmatpush2.msra.mxu0 0.0
  %170 = vmatprep.subr.mxu0 0.0
  %171 = vmatpush2.msra.mxu0 0.0
  %172 = vmatprep.subr.mxu0 0.0
  %173 = vmatpush2.msra.mxu0 0.0
  %174 = vmatprep.subr.mxu0 0.0
  %175 = vmatpush2.msra.mxu0 0.0
  %176 = vmatprep.subr.mxu0 0.0
  %177 = vmatpush2.msra.mxu0 0.0
  %178 = vmatprep.subr.mxu0 0.0
  %179 = vmatpush2.msra.mxu0 0.0
  %180 = vmatprep.subr.mxu0 0.0
  %181 = vmatpush2.msra.mxu0 0.0
  %182 = vmatprep.subr.mxu0 0.0
  %183 = vmatpush2.msra.mxu0 0.0
  %184 = vmatprep.subr.mxu0 0.0
  %185 = vmatpush2.msra.mxu0 0.0
  %186 = vmatprep.subr.mxu0 0.0
  %187 = vmatpush2.msra.mxu0 0.0
  %188 = vmatprep.subr.mxu0 0.0
  %189 = vmatpush2.msra.mxu0 0.0
  %190 = vmatprep.subr.mxu0 0.0
  %191 = vmatpush2.msra.mxu0 0.0
  %192 = vmatprep.subr.mxu0 0.0
  %193 = vmatpush2.msra.mxu0 0.0
  %194 = vmatprep.mubr.f32.mxu0 0.0
  %195 = vmatmul.mubr.f32.gmra.mxu0 %v48
  %v196 = vpop.f32.mrf.mxu0
  %v197 = vadd.f32 %v37, %v196
  %v198 = vpop.f32.mrf.mxu0
  %v199 = vadd.f32 %v41, %v198
  %200 = vmatprep.mubr.f32.mxu0 0.0
  %201 = vmatmul.mubr.f32.gmra.mxu0 %v51
  %v202 = vpop.f32.mrf.mxu0
  %v203 = vadd.f32 %v37, %v202
  %v204 = vpop.f32.mrf.mxu0
  %v205 = vadd.f32 %v41, %v204
  %206 = vdwg.mxu0
  %207 = vst [vmem:[#allocation2] sm:$0xff] %v120
  %208 = vst [vmem:[#allocation2 + $0x8] sm:$0xff] %v122
  %209 = vst [vmem:[#allocation2 + $0x10] sm:$0xff] %v197
  %210 = vst [vmem:[#allocation2 + $0x18] sm:$0xff] %v199
  %211 = vst [vmem:[#allocation2 + $0x20] sm:$0xff] %v126
  %212 = vst [vmem:[#allocation2 + $0x28] sm:$0xff] %v128
  %213 = vst [vmem:[#allocation2 + $0x30] sm:$0xff] %v203
  %214 = vst [vmem:[#allocation2 + $0x38] sm:$0xff] %v205
  %v215 = vld [vmem:[#allocation2] sm:$0x3]
  %v216 = vld [vmem:[%s3] sm:$0xf]
  %v217 = vld [vmem:[%s3 + $0x4] sm:$0xf]
  %v218 = vld [vmem:[%s3 + $0x8] sm:$0xf]
  %v219 = vld [vmem:[%s3 + $0xc] sm:$0xf]
  %v220 = vld [vmem:[%s3 + $0x10] sm:$0xf]
  %v221 = vld [vmem:[%s3 + $0x14] sm:$0xf]
  %v222 = vld [vmem:[%s3 + $0x18] sm:$0xf]
  %v223 = vld [vmem:[%s3 + $0x1c] sm:$0xf]
  %v224 = vld [vmem:[%s3 + $0x20] sm:$0xf]
  %v225 = vld [vmem:[%s3 + $0x24] sm:$0xf]
  %v226 = vld [vmem:[%s3 + $0x28] sm:$0xf]
  %v227 = vld [vmem:[%s3 + $0x2c] sm:$0xf]
  %v228 = vld [vmem:[%s3 + $0x30] sm:$0xf]
  %v229 = vld [vmem:[%s3 + $0x34] sm:$0xf]
  %v230 = vld [vmem:[%s3 + $0x38] sm:$0xf]
  %v231 = vld [vmem:[%s3 + $0x3c] sm:$0xf]
  %v248 = vunpack.c.l.b16 %v216
  %v249 = vunpack.c.l.b16 %v217
  %v250 = vunpack.c.l.b16 %v218
  %v251 = vunpack.c.l.b16 %v219
  %v252 = vunpack.c.l.b16 %v220
  %v253 = vunpack.c.l.b16 %v221
  %v254 = vunpack.c.l.b16 %v222
  %v255 = vunpack.c.l.b16 %v223
  %v256 = vunpack.c.l.b16 %v224
  %v257 = vunpack.c.l.b16 %v225
  %v258 = vunpack.c.l.b16 %v226
  %v259 = vunpack.c.l.b16 %v227
  %v260 = vunpack.c.l.b16 %v228
  %v261 = vunpack.c.l.b16 %v229
  %v262 = vunpack.c.l.b16 %v230
  %v263 = vunpack.c.l.b16 %v231
  %v264 = vpack.c.b16 %v249, %v248
  %v265 = vpack.c.b16 %v251, %v250
  %v266 = vpack.c.b16 %v253, %v252
  %v267 = vpack.c.b16 %v255, %v254
  %v268 = vpack.c.b16 %v257, %v256
  %v269 = vpack.c.b16 %v259, %v258
  %v270 = vpack.c.b16 %v261, %v260
  %v271 = vpack.c.b16 %v263, %v262
  %280 = vmatprep.subr.bf16.mxu0 0
  %281 = vmatpush1.bf16.msra.mxu0 %v271
  %282 = vmatprep.subr.bf16.mxu0 0
  %283 = vmatpush1.bf16.msra.mxu0 %v270
  %284 = vmatprep.subr.bf16.mxu0 0
  %285 = vmatpush1.bf16.msra.mxu0 %v269
  %286 = vmatprep.subr.bf16.mxu0 0
  %287 = vmatpush1.bf16.msra.mxu0 %v268
  %288 = vmatprep.subr.bf16.mxu0 0
  %289 = vmatpush1.bf16.msra.mxu0 %v267
  %290 = vmatprep.subr.bf16.mxu0 0
  %291 = vmatpush1.bf16.msra.mxu0 %v266
  %292 = vmatprep.subr.bf16.mxu0 0
  %293 = vmatpush1.bf16.msra.mxu0 %v265
  %294 = vmatprep.subr.bf16.mxu0 0
  %295 = vmatpush1.bf16.msra.mxu0 %v264
  %296 = vmatprep.subr.bf16.mxu0 0
  %297 = vmatpush2.bf16.msra.mxu0 0
  %298 = vmatprep.subr.bf16.mxu0 0
  %299 = vmatpush2.bf16.msra.mxu0 0
  %300 = vmatprep.subr.bf16.mxu0 0
  %301 = vmatpush2.bf16.msra.mxu0 0
  %302 = vmatprep.subr.bf16.mxu0 0
  %303 = vmatpush2.bf16.msra.mxu0 0
  %304 = vmatprep.subr.bf16.mxu0 0
  %305 = vmatpush2.bf16.msra.mxu0 0
  %306 = vmatprep.subr.bf16.mxu0 0
  %307 = vmatpush2.bf16.msra.mxu0 0
  %308 = vmatprep.subr.bf16.mxu0 0
  %309 = vmatpush2.bf16.msra.mxu0 0
  %310 = vmatprep.subr.bf16.mxu0 0
  %311 = vmatpush2.bf16.msra.mxu0 0
  %312 = vmatprep.mubr.bf16.mxu0 0
  %313 = vmatmul.mubr.bf16.gmra.mxu0 0
  %v314 = vpop.f32.mrf.mxu0
  %v315 = vadd.f32 0.0, %v314
  %v316 = vpop.f32.mrf.mxu0
  %v317 = vpop.f32.mrf.mxu0
  %v318 = vpop.f32.mrf.mxu0
  %319 = vdwg.mxu0
  %v320 = vadd.f32 %v215, %v315
  %v321 = vmax.f32 %v320, 0.0
  %v322 = vld [vmem:[#allocation2 + $0x8] sm:$0x3]
  %s323 = scalar_lea.vmem %s3, 64
  %v324 = vld [vmem:[%s323] sm:$0xf]
  %v325 = vld [vmem:[%s323 + $0x4] sm:$0xf]
  %v326 = vld [vmem:[%s323 + $0x8] sm:$0xf]
  %v327 = vld [vmem:[%s323 + $0xc] sm:$0xf]
  %v328 = vld [vmem:[%s323 + $0x10] sm:$0xf]
  %v329 = vld [vmem:[%s323 + $0x14] sm:$0xf]
  %v330 = vld [vmem:[%s323 + $0x18] sm:$0xf]
  %v331 = vld [vmem:[%s323 + $0x1c] sm:$0xf]
  %v332 = vld [vmem:[%s323 + $0x20] sm:$0xf]
  %v333 = vld [vmem:[%s323 + $0x24] sm:$0xf]
  %v334 = vld [vmem:[%s323 + $0x28] sm:$0xf]
  %v335 = vld [vmem:[%s323 + $0x2c] sm:$0xf]
  %v336 = vld [vmem:[%s323 + $0x30] sm:$0xf]
  %v337 = vld [vmem:[%s323 + $0x34] sm:$0xf]
  %v338 = vld [vmem:[%s323 + $0x38] sm:$0xf]
  %v339 = vld [vmem:[%s323 + $0x3c] sm:$0xf]
  %v356 = vunpack.c.l.b16 %v324
  %v357 = vunpack.c.l.b16 %v325
  %v358 = vunpack.c.l.b16 %v326
  %v359 = vunpack.c.l.b16 %v327
  %v360 = vunpack.c.l.b16 %v328
  %v361 = vunpack.c.l.b16 %v329
  %v362 = vunpack.c.l.b16 %v330
  %v363 = vunpack.c.l.b16 %v331
  %v364 = vunpack.c.l.b16 %v332
  %v365 = vunpack.c.l.b16 %v333
  %v366 = vunpack.c.l.b16 %v334
  %v367 = vunpack.c.l.b16 %v335
  %v368 = vunpack.c.l.b16 %v336
  %v369 = vunpack.c.l.b16 %v337
  %v370 = vunpack.c.l.b16 %v338
  %v371 = vunpack.c.l.b16 %v339
  %v372 = vpack.c.b16 %v357, %v356
  %v373 = vpack.c.b16 %v359, %v358
  %v374 = vpack.c.b16 %v361, %v360
  %v375 = vpack.c.b16 %v363, %v362
  %v376 = vpack.c.b16 %v365, %v364
  %v377 = vpack.c.b16 %v367, %v366
  %v378 = vpack.c.b16 %v369, %v368
  %v379 = vpack.c.b16 %v371, %v370
  %388 = vmatprep.subr.bf16.mxu0 0
  %389 = vmatpush1.bf16.msra.mxu0 %v379
  %390 = vmatprep.subr.bf16.mxu0 0
  %391 = vmatpush1.bf16.msra.mxu0 %v378
  %392 = vmatprep.subr.bf16.mxu0 0
  %393 = vmatpush1.bf16.msra.mxu0 %v377
  %394 = vmatprep.subr.bf16.mxu0 0
  %395 = vmatpush1.bf16.msra.mxu0 %v376
  %396 = vmatprep.subr.bf16.mxu0 0
  %397 = vmatpush1.bf16.msra.mxu0 %v375
  %398 = vmatprep.subr.bf16.mxu0 0
  %399 = vmatpush1.bf16.msra.mxu0 %v374
  %400 = vmatprep.subr.bf16.mxu0 0
  %401 = vmatpush1.bf16.msra.mxu0 %v373
  %402 = vmatprep.subr.bf16.mxu0 0
  %403 = vmatpush1.bf16.msra.mxu0 %v372
  %404 = vmatprep.subr.bf16.mxu0 0
  %405 = vmatpush2.bf16.msra.mxu0 0
  %406 = vmatprep.subr.bf16.mxu0 0
  %407 = vmatpush2.bf16.msra.mxu0 0
  %408 = vmatprep.subr.bf16.mxu0 0
  %409 = vmatpush2.bf16.msra.mxu0 0
  %410 = vmatprep.subr.bf16.mxu0 0
  %411 = vmatpush2.bf16.msra.mxu0 0
  %412 = vmatprep.subr.bf16.mxu0 0
  %413 = vmatpush2.bf16.msra.mxu0 0
  %414 = vmatprep.subr.bf16.mxu0 0
  %415 = vmatpush2.bf16.msra.mxu0 0
  %416 = vmatprep.subr.bf16.mxu0 0
  %417 = vmatpush2.bf16.msra.mxu0 0
  %418 = vmatprep.subr.bf16.mxu0 0
  %419 = vmatpush2.bf16.msra.mxu0 0
  %420 = vmatprep.mubr.bf16.mxu0 0
  %421 = vmatmul.mubr.bf16.gmra.mxu0 0
  %v422 = vpop.f32.mrf.mxu0
  %v423 = vadd.f32 0.0, %v422
  %v424 = vpop.f32.mrf.mxu0
  %v425 = vpop.f32.mrf.mxu0
  %v426 = vpop.f32.mrf.mxu0
  %427 = vdwg.mxu0
  %v428 = vadd.f32 %v322, %v423
  %v429 = vmax.f32 %v428, 0.0
  %v430 = vld [vmem:[#allocation2 + $0x10] sm:$0x3]
  %s431 = scalar_lea.vmem %s3, 128
  %v432 = vld [vmem:[%s431] sm:$0xf]
  %v433 = vld [vmem:[%s431 + $0x4] sm:$0xf]
  %v434 = vld [vmem:[%s431 + $0x8] sm:$0xf]
  %v435 = vld [vmem:[%s431 + $0xc] sm:$0xf]
  %v436 = vld [vmem:[%s431 + $0x10] sm:$0xf]
  %v437 = vld [vmem:[%s431 + $0x14] sm:$0xf]
  %v438 = vld [vmem:[%s431 + $0x18] sm:$0xf]
  %v439 = vld [vmem:[%s431 + $0x1c] sm:$0xf]
  %v440 = vld [vmem:[%s431 + $0x20] sm:$0xf]
  %v441 = vld [vmem:[%s431 + $0x24] sm:$0xf]
  %v442 = vld [vmem:[%s431 + $0x28] sm:$0xf]
  %v443 = vld [vmem:[%s431 + $0x2c] sm:$0xf]
  %v444 = vld [vmem:[%s431 + $0x30] sm:$0xf]
  %v445 = vld [vmem:[%s431 + $0x34] sm:$0xf]
  %v446 = vld [vmem:[%s431 + $0x38] sm:$0xf]
  %v447 = vld [vmem:[%s431 + $0x3c] sm:$0xf]
  %v464 = vunpack.c.l.b16 %v432
  %v465 = vunpack.c.l.b16 %v433
  %v466 = vunpack.c.l.b16 %v434
  %v467 = vunpack.c.l.b16 %v435
  %v468 = vunpack.c.l.b16 %v436
  %v469 = vunpack.c.l.b16 %v437
  %v470 = vunpack.c.l.b16 %v438
  %v471 = vunpack.c.l.b16 %v439
  %v472 = vunpack.c.l.b16 %v440
  %v473 = vunpack.c.l.b16 %v441
  %v474 = vunpack.c.l.b16 %v442
  %v475 = vunpack.c.l.b16 %v443
  %v476 = vunpack.c.l.b16 %v444
  %v477 = vunpack.c.l.b16 %v445
  %v478 = vunpack.c.l.b16 %v446
  %v479 = vunpack.c.l.b16 %v447
  %v480 = vpack.c.b16 %v465, %v464
  %v481 = vpack.c.b16 %v467, %v466
  %v482 = vpack.c.b16 %v469, %v468
  %v483 = vpack.c.b16 %v471, %v470
  %v484 = vpack.c.b16 %v473, %v472
  %v485 = vpack.c.b16 %v475, %v474
  %v486 = vpack.c.b16 %v477, %v476
  %v487 = vpack.c.b16 %v479, %v478
  %496 = vmatprep.subr.bf16.mxu0 0
  %497 = vmatpush1.bf16.msra.mxu0 %v487
  %498 = vmatprep.subr.bf16.mxu0 0
  %499 = vmatpush1.bf16.msra.mxu0 %v486
  %500 = vmatprep.subr.bf16.mxu0 0
  %501 = vmatpush1.bf16.msra.mxu0 %v485
  %502 = vmatprep.subr.bf16.mxu0 0
  %503 = vmatpush1.bf16.msra.mxu0 %v484
  %504 = vmatprep.subr.bf16.mxu0 0
  %505 = vmatpush1.bf16.msra.mxu0 %v483
  %506 = vmatprep.subr.bf16.mxu0 0
  %507 = vmatpush1.bf16.msra.mxu0 %v482
  %508 = vmatprep.subr.bf16.mxu0 0
  %509 = vmatpush1.bf16.msra.mxu0 %v481
  %510 = vmatprep.subr.bf16.mxu0 0
  %511 = vmatpush1.bf16.msra.mxu0 %v480
  %512 = vmatprep.subr.bf16.mxu0 0
  %513 = vmatpush2.bf16.msra.mxu0 0
  %514 = vmatprep.subr.bf16.mxu0 0
  %515 = vmatpush2.bf16.msra.mxu0 0
  %516 = vmatprep.subr.bf16.mxu0 0
  %517 = vmatpush2.bf16.msra.mxu0 0
  %518 = vmatprep.subr.bf16.mxu0 0
  %519 = vmatpush2.bf16.msra.mxu0 0
  %520 = vmatprep.subr.bf16.mxu0 0
  %521 = vmatpush2.bf16.msra.mxu0 0
  %522 = vmatprep.subr.bf16.mxu0 0
  %523 = vmatpush2.bf16.msra.mxu0 0
  %524 = vmatprep.subr.bf16.mxu0 0
  %525 = vmatpush2.bf16.msra.mxu0 0
  %526 = vmatprep.subr.bf16.mxu0 0
  %527 = vmatpush2.bf16.msra.mxu0 0
  %528 = vmatprep.mubr.bf16.mxu0 0
  %529 = vmatmul.mubr.bf16.gmra.mxu0 0
  %v530 = vpop.f32.mrf.mxu0
  %v531 = vadd.f32 0.0, %v530
  %v532 = vpop.f32.mrf.mxu0
  %v533 = vpop.f32.mrf.mxu0
  %v534 = vpop.f32.mrf.mxu0
  %535 = vdwg.mxu0
  %v536 = vadd.f32 %v430, %v531
  %v537 = vmax.f32 %v536, 0.0
  %v538 = vld [vmem:[#allocation2 + $0x18] sm:$0x3]
  %s539 = scalar_lea.vmem %s3, 192
  %v540 = vld [vmem:[%s539] sm:$0xf]
  %v541 = vld [vmem:[%s539 + $0x4] sm:$0xf]
  %v542 = vld [vmem:[%s539 + $0x8] sm:$0xf]
  %v543 = vld [vmem:[%s539 + $0xc] sm:$0xf]
  %v544 = vld [vmem:[%s539 + $0x10] sm:$0xf]
  %v545 = vld [vmem:[%s539 + $0x14] sm:$0xf]
  %v546 = vld [vmem:[%s539 + $0x18] sm:$0xf]
  %v547 = vld [vmem:[%s539 + $0x1c] sm:$0xf]
  %v548 = vld [vmem:[%s539 + $0x20] sm:$0xf]
  %v549 = vld [vmem:[%s539 + $0x24] sm:$0xf]
  %v550 = vld [vmem:[%s539 + $0x28] sm:$0xf]
  %v551 = vld [vmem:[%s539 + $0x2c] sm:$0xf]
  %v552 = vld [vmem:[%s539 + $0x30] sm:$0xf]
  %v553 = vld [vmem:[%s539 + $0x34] sm:$0xf]
  %v554 = vld [vmem:[%s539 + $0x38] sm:$0xf]
  %v555 = vld [vmem:[%s539 + $0x3c] sm:$0xf]
  %v572 = vunpack.c.l.b16 %v540
  %v573 = vunpack.c.l.b16 %v541
  %v574 = vunpack.c.l.b16 %v542
  %v575 = vunpack.c.l.b16 %v543
  %v576 = vunpack.c.l.b16 %v544
  %v577 = vunpack.c.l.b16 %v545
  %v578 = vunpack.c.l.b16 %v546
  %v579 = vunpack.c.l.b16 %v547
  %v580 = vunpack.c.l.b16 %v548
  %v581 = vunpack.c.l.b16 %v549
  %v582 = vunpack.c.l.b16 %v550
  %v583 = vunpack.c.l.b16 %v551
  %v584 = vunpack.c.l.b16 %v552
  %v585 = vunpack.c.l.b16 %v553
  %v586 = vunpack.c.l.b16 %v554
  %v587 = vunpack.c.l.b16 %v555
  %v588 = vpack.c.b16 %v573, %v572
  %v589 = vpack.c.b16 %v575, %v574
  %v590 = vpack.c.b16 %v577, %v576
  %v591 = vpack.c.b16 %v579, %v578
  %v592 = vpack.c.b16 %v581, %v580
  %v593 = vpack.c.b16 %v583, %v582
  %v594 = vpack.c.b16 %v585, %v584
  %v595 = vpack.c.b16 %v587, %v586
  %604 = vmatprep.subr.bf16.mxu0 0
  %605 = vmatpush1.bf16.msra.mxu0 %v595
  %606 = vmatprep.subr.bf16.mxu0 0
  %607 = vmatpush1.bf16.msra.mxu0 %v594
  %608 = vmatprep.subr.bf16.mxu0 0
  %609 = vmatpush1.bf16.msra.mxu0 %v593
  %610 = vmatprep.subr.bf16.mxu0 0
  %611 = vmatpush1.bf16.msra.mxu0 %v592
  %612 = vmatprep.subr.bf16.mxu0 0
  %613 = vmatpush1.bf16.msra.mxu0 %v591
  %614 = vmatprep.subr.bf16.mxu0 0
  %615 = vmatpush1.bf16.msra.mxu0 %v590
  %616 = vmatprep.subr.bf16.mxu0 0
  %617 = vmatpush1.bf16.msra.mxu0 %v589
  %618 = vmatprep.subr.bf16.mxu0 0
  %619 = vmatpush1.bf16.msra.mxu0 %v588
  %620 = vmatprep.subr.bf16.mxu0 0
  %621 = vmatpush2.bf16.msra.mxu0 0
  %622 = vmatprep.subr.bf16.mxu0 0
  %623 = vmatpush2.bf16.msra.mxu0 0
  %624 = vmatprep.subr.bf16.mxu0 0
  %625 = vmatpush2.bf16.msra.mxu0 0
  %626 = vmatprep.subr.bf16.mxu0 0
  %627 = vmatpush2.bf16.msra.mxu0 0
  %628 = vmatprep.subr.bf16.mxu0 0
  %629 = vmatpush2.bf16.msra.mxu0 0
  %630 = vmatprep.subr.bf16.mxu0 0
  %631 = vmatpush2.bf16.msra.mxu0 0
  %632 = vmatprep.subr.bf16.mxu0 0
  %633 = vmatpush2.bf16.msra.mxu0 0
  %634 = vmatprep.subr.bf16.mxu0 0
  %635 = vmatpush2.bf16.msra.mxu0 0
  %636 = vmatprep.mubr.bf16.mxu0 0
  %637 = vmatmul.mubr.bf16.gmra.mxu0 0
  %v638 = vpop.f32.mrf.mxu0
  %v639 = vadd.f32 0.0, %v638
  %v640 = vpop.f32.mrf.mxu0
  %v641 = vpop.f32.mrf.mxu0
  %v642 = vpop.f32.mrf.mxu0
  %643 = vdwg.mxu0
  %v644 = vadd.f32 %v538, %v639
  %v645 = vtanh.pop %v644
  %v647 = vrot.slane %v429, 6
  %v650 = vrot.slane %v537, 4
  %v653 = vrot.slane %v645, 2
  %vm655 = vcmask 1041408
  %v656 = vsel %vm655, %v321, %v647
  %vm657 = vcmask 1043456
  %v658 = vsel %vm657, %v656, %v650
  %vm659 = vcmask 1045504
  %v660 = vsel %vm659, %v658, %v653
  %661 = vst [vmem:[%s4] sm:$0xff] %v660
  %v662 = vld [vmem:[#allocation2] sm:$0xc]
  %v663 = vpack.c.bf16 %v321, %v321
  %v664 = vld [vmem:[%s3] sm:$0xf]
  %v665 = vld [vmem:[%s3 + $0x4] sm:$0xf]
  %v666 = vld [vmem:[%s3 + $0x8] sm:$0xf]
  %v667 = vld [vmem:[%s3 + $0xc] sm:$0xf]
  %v668 = vld [vmem:[%s3 + $0x10] sm:$0xf]
  %v669 = vld [vmem:[%s3 + $0x14] sm:$0xf]
  %v670 = vld [vmem:[%s3 + $0x18] sm:$0xf]
  %v671 = vld [vmem:[%s3 + $0x1c] sm:$0xf]
  %v672 = vld [vmem:[%s3 + $0x20] sm:$0xf]
  %v673 = vld [vmem:[%s3 + $0x24] sm:$0xf]
  %v674 = vld [vmem:[%s3 + $0x28] sm:$0xf]
  %v675 = vld [vmem:[%s3 + $0x2c] sm:$0xf]
  %v676 = vld [vmem:[%s3 + $0x30] sm:$0xf]
  %v677 = vld [vmem:[%s3 + $0x34] sm:$0xf]
  %v678 = vld [vmem:[%s3 + $0x38] sm:$0xf]
  %v679 = vld [vmem:[%s3 + $0x3c] sm:$0xf]
  %v696 = vunpack.c.l.b16 %v664
  %v697 = vunpack.c.l.b16 %v665
  %v698 = vunpack.c.l.b16 %v666
  %v699 = vunpack.c.l.b16 %v667
  %v700 = vunpack.c.l.b16 %v668
  %v701 = vunpack.c.l.b16 %v669
  %v702 = vunpack.c.l.b16 %v670
  %v703 = vunpack.c.l.b16 %v671
  %v704 = vunpack.c.l.b16 %v672
  %v705 = vunpack.c.l.b16 %v673
  %v706 = vunpack.c.l.b16 %v674
  %v707 = vunpack.c.l.b16 %v675
  %v708 = vunpack.c.l.b16 %v676
  %v709 = vunpack.c.l.b16 %v677
  %v710 = vunpack.c.l.b16 %v678
  %v711 = vunpack.c.l.b16 %v679
  %v712 = vpack.c.b16 %v697, %v696
  %v713 = vpack.c.b16 %v699, %v698
  %v714 = vpack.c.b16 %v701, %v700
  %v715 = vpack.c.b16 %v703, %v702
  %v716 = vpack.c.b16 %v705, %v704
  %v717 = vpack.c.b16 %v707, %v706
  %v718 = vpack.c.b16 %v709, %v708
  %v719 = vpack.c.b16 %v711, %v710
  %728 = vmatprep.subr.bf16.mxu0 0
  %729 = vmatpush1.bf16.msra.mxu0 %v719
  %730 = vmatprep.subr.bf16.mxu0 0
  %731 = vmatpush1.bf16.msra.mxu0 %v718
  %732 = vmatprep.subr.bf16.mxu0 0
  %733 = vmatpush1.bf16.msra.mxu0 %v717
  %734 = vmatprep.subr.bf16.mxu0 0
  %735 = vmatpush1.bf16.msra.mxu0 %v716
  %736 = vmatprep.subr.bf16.mxu0 0
  %737 = vmatpush1.bf16.msra.mxu0 %v715
  %738 = vmatprep.subr.bf16.mxu0 0
  %739 = vmatpush1.bf16.msra.mxu0 %v714
  %740 = vmatprep.subr.bf16.mxu0 0
  %741 = vmatpush1.bf16.msra.mxu0 %v713
  %742 = vmatprep.subr.bf16.mxu0 0
  %743 = vmatpush1.bf16.msra.mxu0 %v712
  %744 = vmatprep.subr.bf16.mxu0 0
  %745 = vmatpush2.bf16.msra.mxu0 0
  %746 = vmatprep.subr.bf16.mxu0 0
  %747 = vmatpush2.bf16.msra.mxu0 0
  %748 = vmatprep.subr.bf16.mxu0 0
  %749 = vmatpush2.bf16.msra.mxu0 0
  %750 = vmatprep.subr.bf16.mxu0 0
  %751 = vmatpush2.bf16.msra.mxu0 0
  %752 = vmatprep.subr.bf16.mxu0 0
  %753 = vmatpush2.bf16.msra.mxu0 0
  %754 = vmatprep.subr.bf16.mxu0 0
  %755 = vmatpush2.bf16.msra.mxu0 0
  %756 = vmatprep.subr.bf16.mxu0 0
  %757 = vmatpush2.bf16.msra.mxu0 0
  %758 = vmatprep.subr.bf16.mxu0 0
  %759 = vmatpush2.bf16.msra.mxu0 0
  %760 = vmatprep.mubr.bf16.mxu0 0
  %761 = vmatmul.mubr.bf16.gmra.mxu0 %v663
  %v762 = vpop.f32.mrf.mxu0
  %v763 = vadd.f32 0.0, %v762
  %v764 = vpop.f32.mrf.mxu0
  %v765 = vpop.f32.mrf.mxu0
  %v766 = vpop.f32.mrf.mxu0
  %767 = vdwg.mxu0
  %v769 = vrot.slane %v763, 6
  %v771 = vadd.f32 %v662, %v769
  %v772 = vmax.f32 %v771, 0.0
  %v773 = vld [vmem:[#allocation2 + $0x8] sm:$0xc]
  %v774 = vpack.c.bf16 %v429, %v429
  %v775 = vld [vmem:[%s323] sm:$0xf]
  %v776 = vld [vmem:[%s323 + $0x4] sm:$0xf]
  %v777 = vld [vmem:[%s323 + $0x8] sm:$0xf]
  %v778 = vld [vmem:[%s323 + $0xc] sm:$0xf]
  %v779 = vld [vmem:[%s323 + $0x10] sm:$0xf]
  %v780 = vld [vmem:[%s323 + $0x14] sm:$0xf]
  %v781 = vld [vmem:[%s323 + $0x18] sm:$0xf]
  %v782 = vld [vmem:[%s323 + $0x1c] sm:$0xf]
  %v783 = vld [vmem:[%s323 + $0x20] sm:$0xf]
  %v784 = vld [vmem:[%s323 + $0x24] sm:$0xf]
  %v785 = vld [vmem:[%s323 + $0x28] sm:$0xf]
  %v786 = vld [vmem:[%s323 + $0x2c] sm:$0xf]
  %v787 = vld [vmem:[%s323 + $0x30] sm:$0xf]
  %v788 = vld [vmem:[%s323 + $0x34] sm:$0xf]
  %v789 = vld [vmem:[%s323 + $0x38] sm:$0xf]
  %v790 = vld [vmem:[%s323 + $0x3c] sm:$0xf]
  %v807 = vunpack.c.l.b16 %v775
  %v808 = vunpack.c.l.b16 %v776
  %v809 = vunpack.c.l.b16 %v777
  %v810 = vunpack.c.l.b16 %v778
  %v811 = vunpack.c.l.b16 %v779
  %v812 = vunpack.c.l.b16 %v780
  %v813 = vunpack.c.l.b16 %v781
  %v814 = vunpack.c.l.b16 %v782
  %v815 = vunpack.c.l.b16 %v783
  %v816 = vunpack.c.l.b16 %v784
  %v817 = vunpack.c.l.b16 %v785
  %v818 = vunpack.c.l.b16 %v786
  %v819 = vunpack.c.l.b16 %v787
  %v820 = vunpack.c.l.b16 %v788
  %v821 = vunpack.c.l.b16 %v789
  %v822 = vunpack.c.l.b16 %v790
  %v823 = vpack.c.b16 %v808, %v807
  %v824 = vpack.c.b16 %v810, %v809
  %v825 = vpack.c.b16 %v812, %v811
  %v826 = vpack.c.b16 %v814, %v813
  %v827 = vpack.c.b16 %v816, %v815
  %v828 = vpack.c.b16 %v818, %v817
  %v829 = vpack.c.b16 %v820, %v819
  %v830 = vpack.c.b16 %v822, %v821
  %839 = vmatprep.subr.bf16.mxu0 0
  %840 = vmatpush1.bf16.msra.mxu0 %v830
  %841 = vmatprep.subr.bf16.mxu0 0
  %842 = vmatpush1.bf16.msra.mxu0 %v829
  %843 = vmatprep.subr.bf16.mxu0 0
  %844 = vmatpush1.bf16.msra.mxu0 %v828
  %845 = vmatprep.subr.bf16.mxu0 0
  %846 = vmatpush1.bf16.msra.mxu0 %v827
  %847 = vmatprep.subr.bf16.mxu0 0
  %848 = vmatpush1.bf16.msra.mxu0 %v826
  %849 = vmatprep.subr.bf16.mxu0 0
  %850 = vmatpush1.bf16.msra.mxu0 %v825
  %851 = vmatprep.subr.bf16.mxu0 0
  %852 = vmatpush1.bf16.msra.mxu0 %v824
  %853 = vmatprep.subr.bf16.mxu0 0
  %854 = vmatpush1.bf16.msra.mxu0 %v823
  %855 = vmatprep.subr.bf16.mxu0 0
  %856 = vmatpush2.bf16.msra.mxu0 0
  %857 = vmatprep.subr.bf16.mxu0 0
  %858 = vmatpush2.bf16.msra.mxu0 0
  %859 = vmatprep.subr.bf16.mxu0 0
  %860 = vmatpush2.bf16.msra.mxu0 0
  %861 = vmatprep.subr.bf16.mxu0 0
  %862 = vmatpush2.bf16.msra.mxu0 0
  %863 = vmatprep.subr.bf16.mxu0 0
  %864 = vmatpush2.bf16.msra.mxu0 0
  %865 = vmatprep.subr.bf16.mxu0 0
  %866 = vmatpush2.bf16.msra.mxu0 0
  %867 = vmatprep.subr.bf16.mxu0 0
  %868 = vmatpush2.bf16.msra.mxu0 0
  %869 = vmatprep.subr.bf16.mxu0 0
  %870 = vmatpush2.bf16.msra.mxu0 0
  %871 = vmatprep.mubr.bf16.mxu0 0
  %872 = vmatmul.mubr.bf16.gmra.mxu0 %v774
  %v873 = vpop.f32.mrf.mxu0
  %v874 = vadd.f32 0.0, %v873
  %v875 = vpop.f32.mrf.mxu0
  %v876 = vpop.f32.mrf.mxu0
  %v877 = vpop.f32.mrf.mxu0
  %878 = vdwg.mxu0
  %v880 = vrot.slane %v874, 6
  %v882 = vadd.f32 %v773, %v880
  %v883 = vmax.f32 %v882, 0.0
  %v884 = vld [vmem:[#allocation2 + $0x10] sm:$0xc]
  %v885 = vpack.c.bf16 %v537, %v537
  %v886 = vld [vmem:[%s431] sm:$0xf]
  %v887 = vld [vmem:[%s431 + $0x4] sm:$0xf]
  %v888 = vld [vmem:[%s431 + $0x8] sm:$0xf]
  %v889 = vld [vmem:[%s431 + $0xc] sm:$0xf]
  %v890 = vld [vmem:[%s431 + $0x10] sm:$0xf]
  %v891 = vld [vmem:[%s431 + $0x14] sm:$0xf]
  %v892 = vld [vmem:[%s431 + $0x18] sm:$0xf]
  %v893 = vld [vmem:[%s431 + $0x1c] sm:$0xf]
  %v894 = vld [vmem:[%s431 + $0x20] sm:$0xf]
  %v895 = vld [vmem:[%s431 + $0x24] sm:$0xf]
  %v896 = vld [vmem:[%s431 + $0x28] sm:$0xf]
  %v897 = vld [vmem:[%s431 + $0x2c] sm:$0xf]
  %v898 = vld [vmem:[%s431 + $0x30] sm:$0xf]
  %v899 = vld [vmem:[%s431 + $0x34] sm:$0xf]
  %v900 = vld [vmem:[%s431 + $0x38] sm:$0xf]
  %v901 = vld [vmem:[%s431 + $0x3c] sm:$0xf]
  %v918 = vunpack.c.l.b16 %v886
  %v919 = vunpack.c.l.b16 %v887
  %v920 = vunpack.c.l.b16 %v888
  %v921 = vunpack.c.l.b16 %v889
  %v922 = vunpack.c.l.b16 %v890
  %v923 = vunpack.c.l.b16 %v891
  %v924 = vunpack.c.l.b16 %v892
  %v925 = vunpack.c.l.b16 %v893
  %v926 = vunpack.c.l.b16 %v894
  %v927 = vunpack.c.l.b16 %v895
  %v928 = vunpack.c.l.b16 %v896
  %v929 = vunpack.c.l.b16 %v897
  %v930 = vunpack.c.l.b16 %v898
  %v931 = vunpack.c.l.b16 %v899
  %v932 = vunpack.c.l.b16 %v900
  %v933 = vunpack.c.l.b16 %v901
  %v934 = vpack.c.b16 %v919, %v918
  %v935 = vpack.c.b16 %v921, %v920
  %v936 = vpack.c.b16 %v923, %v922
  %v937 = vpack.c.b16 %v925, %v924
  %v938 = vpack.c.b16 %v927, %v926
  %v939 = vpack.c.b16 %v929, %v928
  %v940 = vpack.c.b16 %v931, %v930
  %v941 = vpack.c.b16 %v933, %v932
  %950 = vmatprep.subr.bf16.mxu0 0
  %951 = vmatpush1.bf16.msra.mxu0 %v941
  %952 = vmatprep.subr.bf16.mxu0 0
  %953 = vmatpush1.bf16.msra.mxu0 %v940
  %954 = vmatprep.subr.bf16.mxu0 0
  %955 = vmatpush1.bf16.msra.mxu0 %v939
  %956 = vmatprep.subr.bf16.mxu0 0
  %957 = vmatpush1.bf16.msra.mxu0 %v938
  %958 = vmatprep.subr.bf16.mxu0 0
  %959 = vmatpush1.bf16.msra.mxu0 %v937
  %960 = vmatprep.subr.bf16.mxu0 0
  %961 = vmatpush1.bf16.msra.mxu0 %v936
  %962 = vmatprep.subr.bf16.mxu0 0
  %963 = vmatpush1.bf16.msra.mxu0 %v935
  %964 = vmatprep.subr.bf16.mxu0 0
  %965 = vmatpush1.bf16.msra.mxu0 %v934
  %966 = vmatprep.subr.bf16.mxu0 0
  %967 = vmatpush2.bf16.msra.mxu0 0
  %968 = vmatprep.subr.bf16.mxu0 0
  %969 = vmatpush2.bf16.msra.mxu0 0
  %970 = vmatprep.subr.bf16.mxu0 0
  %971 = vmatpush2.bf16.msra.mxu0 0
  %972 = vmatprep.subr.bf16.mxu0 0
  %973 = vmatpush2.bf16.msra.mxu0 0
  %974 = vmatprep.subr.bf16.mxu0 0
  %975 = vmatpush2.bf16.msra.mxu0 0
  %976 = vmatprep.subr.bf16.mxu0 0
  %977 = vmatpush2.bf16.msra.mxu0 0
  %978 = vmatprep.subr.bf16.mxu0 0
  %979 = vmatpush2.bf16.msra.mxu0 0
  %980 = vmatprep.subr.bf16.mxu0 0
  %981 = vmatpush2.bf16.msra.mxu0 0
  %982 = vmatprep.mubr.bf16.mxu0 0
  %983 = vmatmul.mubr.bf16.gmra.mxu0 %v885
  %v984 = vpop.f32.mrf.mxu0
  %v985 = vadd.f32 0.0, %v984
  %v986 = vpop.f32.mrf.mxu0
  %v987 = vpop.f32.mrf.mxu0
  %v988 = vpop.f32.mrf.mxu0
  %989 = vdwg.mxu0
  %v991 = vrot.slane %v985, 6
  %v993 = vadd.f32 %v884, %v991
  %v994 = vmax.f32 %v993, 0.0
  %v995 = vld [vmem:[#allocation2 + $0x18] sm:$0xc]
  %v996 = vpack.c.bf16 %v645, %v645
  %v997 = vld [vmem:[%s539] sm:$0xf]
  %v998 = vld [vmem:[%s539 + $0x4] sm:$0xf]
  %v999 = vld [vmem:[%s539 + $0x8] sm:$0xf]
  %v1000 = vld [vmem:[%s539 + $0xc] sm:$0xf]
  %v1001 = vld [vmem:[%s539 + $0x10] sm:$0xf]
  %v1002 = vld [vmem:[%s539 + $0x14] sm:$0xf]
  %v1003 = vld [vmem:[%s539 + $0x18] sm:$0xf]
  %v1004 = vld [vmem:[%s539 + $0x1c] sm:$0xf]
  %v1005 = vld [vmem:[%s539 + $0x20] sm:$0xf]
  %v1006 = vld [vmem:[%s539 + $0x24] sm:$0xf]
  %v1007 = vld [vmem:[%s539 + $0x28] sm:$0xf]
  %v1008 = vld [vmem:[%s539 + $0x2c] sm:$0xf]
  %v1009 = vld [vmem:[%s539 + $0x30] sm:$0xf]
  %v1010 = vld [vmem:[%s539 + $0x34] sm:$0xf]
  %v1011 = vld [vmem:[%s539 + $0x38] sm:$0xf]
  %v1012 = vld [vmem:[%s539 + $0x3c] sm:$0xf]
  %v1029 = vunpack.c.l.b16 %v997
  %v1030 = vunpack.c.l.b16 %v998
  %v1031 = vunpack.c.l.b16 %v999
  %v1032 = vunpack.c.l.b16 %v1000
  %v1033 = vunpack.c.l.b16 %v1001
  %v1034 = vunpack.c.l.b16 %v1002
  %v1035 = vunpack.c.l.b16 %v1003
  %v1036 = vunpack.c.l.b16 %v1004
  %v1037 = vunpack.c.l.b16 %v1005
  %v1038 = vunpack.c.l.b16 %v1006
  %v1039 = vunpack.c.l.b16 %v1007
  %v1040 = vunpack.c.l.b16 %v1008
  %v1041 = vunpack.c.l.b16 %v1009
  %v1042 = vunpack.c.l.b16 %v1010
  %v1043 = vunpack.c.l.b16 %v1011
  %v1044 = vunpack.c.l.b16 %v1012
  %v1045 = vpack.c.b16 %v1030, %v1029
  %v1046 = vpack.c.b16 %v1032, %v1031
  %v1047 = vpack.c.b16 %v1034, %v1033
  %v1048 = vpack.c.b16 %v1036, %v1035
  %v1049 = vpack.c.b16 %v1038, %v1037
  %v1050 = vpack.c.b16 %v1040, %v1039
  %v1051 = vpack.c.b16 %v1042, %v1041
  %v1052 = vpack.c.b16 %v1044, %v1043
  %1061 = vmatprep.subr.bf16.mxu0 0
  %1062 = vmatpush1.bf16.msra.mxu0 %v1052
  %1063 = vmatprep.subr.bf16.mxu0 0
  %1064 = vmatpush1.bf16.msra.mxu0 %v1051
  %1065 = vmatprep.subr.bf16.mxu0 0
  %1066 = vmatpush1.bf16.msra.mxu0 %v1050
  %1067 = vmatprep.subr.bf16.mxu0 0
  %1068 = vmatpush1.bf16.msra.mxu0 %v1049
  %1069 = vmatprep.subr.bf16.mxu0 0
  %1070 = vmatpush1.bf16.msra.mxu0 %v1048
  %1071 = vmatprep.subr.bf16.mxu0 0
  %1072 = vmatpush1.bf16.msra.mxu0 %v1047
  %1073 = vmatprep.subr.bf16.mxu0 0
  %1074 = vmatpush1.bf16.msra.mxu0 %v1046
  %1075 = vmatprep.subr.bf16.mxu0 0
  %1076 = vmatpush1.bf16.msra.mxu0 %v1045
  %1077 = vmatprep.subr.bf16.mxu0 0
  %1078 = vmatpush2.bf16.msra.mxu0 0
  %1079 = vmatprep.subr.bf16.mxu0 0
  %1080 = vmatpush2.bf16.msra.mxu0 0
  %1081 = vmatprep.subr.bf16.mxu0 0
  %1082 = vmatpush2.bf16.msra.mxu0 0
  %1083 = vmatprep.subr.bf16.mxu0 0
  %1084 = vmatpush2.bf16.msra.mxu0 0
  %1085 = vmatprep.subr.bf16.mxu0 0
  %1086 = vmatpush2.bf16.msra.mxu0 0
  %1087 = vmatprep.subr.bf16.mxu0 0
  %1088 = vmatpush2.bf16.msra.mxu0 0
  %1089 = vmatprep.subr.bf16.mxu0 0
  %1090 = vmatpush2.bf16.msra.mxu0 0
  %1091 = vmatprep.subr.bf16.mxu0 0
  %1092 = vmatpush2.bf16.msra.mxu0 0
  %1093 = vmatprep.mubr.bf16.mxu0 0
  %1094 = vmatmul.mubr.bf16.gmra.mxu0 %v996
  %v1095 = vpop.f32.mrf.mxu0
  %v1096 = vadd.f32 0.0, %v1095
  %v1097 = vpop.f32.mrf.mxu0
  %v1098 = vpop.f32.mrf.mxu0
  %v1099 = vpop.f32.mrf.mxu0
  %1100 = vdwg.mxu0
  %v1102 = vrot.slane %v1096, 6
  %v1104 = vadd.f32 %v995, %v1102
  %v1105 = vtanh.pop %v1104
  %v1107 = vrot.slane %v772, 2
  %v1110 = vrot.slane %v994, 6
  %v1113 = vrot.slane %v1105, 4
  %v1115 = vsel %vm655, %v1107, %v883
  %v1116 = vsel %vm657, %v1115, %v1110
  %v1117 = vsel %vm659, %v1116, %v1113
  %s1118 = scalar_lea.vmem %s4, 8
  %1119 = vst [vmem:[%s1118] sm:$0xff] %v1117
  %v1120 = vld [vmem:[#allocation2] sm:$0x30]
  %v1121 = vpack.c.bf16 %v772, %v772
  %v1122 = vld [vmem:[%s3] sm:$0xf]
  %v1123 = vld [vmem:[%s3 + $0x4] sm:$0xf]
  %v1124 = vld [vmem:[%s3 + $0x8] sm:$0xf]
  %v1125 = vld [vmem:[%s3 + $0xc] sm:$0xf]
  %v1126 = vld [vmem:[%s3 + $0x10] sm:$0xf]
  %v1127 = vld [vmem:[%s3 + $0x14] sm:$0xf]
  %v1128 = vld [vmem:[%s3 + $0x18] sm:$0xf]
  %v1129 = vld [vmem:[%s3 + $0x1c] sm:$0xf]
  %v1130 = vld [vmem:[%s3 + $0x20] sm:$0xf]
  %v1131 = vld [vmem:[%s3 + $0x24] sm:$0xf]
  %v1132 = vld [vmem:[%s3 + $0x28] sm:$0xf]
  %v1133 = vld [vmem:[%s3 + $0x2c] sm:$0xf]
  %v1134 = vld [vmem:[%s3 + $0x30] sm:$0xf]
  %v1135 = vld [vmem:[%s3 + $0x34] sm:$0xf]
  %v1136 = vld [vmem:[%s3 + $0x38] sm:$0xf]
  %v1137 = vld [vmem:[%s3 + $0x3c] sm:$0xf]
  %v1139 = vrot.slane %v1121, 1
  %v1157 = vunpack.c.l.b16 %v1122
  %v1158 = vunpack.c.l.b16 %v1123
  %v1159 = vunpack.c.l.b16 %v1124
  %v1160 = vunpack.c.l.b16 %v1125
  %v1161 = vunpack.c.l.b16 %v1126
  %v1162 = vunpack.c.l.b16 %v1127
  %v1163 = vunpack.c.l.b16 %v1128
  %v1164 = vunpack.c.l.b16 %v1129
  %v1165 = vunpack.c.l.b16 %v1130
  %v1166 = vunpack.c.l.b16 %v1131
  %v1167 = vunpack.c.l.b16 %v1132
  %v1168 = vunpack.c.l.b16 %v1133
  %v1169 = vunpack.c.l.b16 %v1134
  %v1170 = vunpack.c.l.b16 %v1135
  %v1171 = vunpack.c.l.b16 %v1136
  %v1172 = vunpack.c.l.b16 %v1137
  %v1173 = vpack.c.b16 %v1158, %v1157
  %v1174 = vpack.c.b16 %v1160, %v1159
  %v1175 = vpack.c.b16 %v1162, %v1161
  %v1176 = vpack.c.b16 %v1164, %v1163
  %v1177 = vpack.c.b16 %v1166, %v1165
  %v1178 = vpack.c.b16 %v1168, %v1167
  %v1179 = vpack.c.b16 %v1170, %v1169
  %v1180 = vpack.c.b16 %v1172, %v1171
  %1189 = vmatprep.subr.bf16.mxu0 0
  %1190 = vmatpush1.bf16.msra.mxu0 %v1180
  %1191 = vmatprep.subr.bf16.mxu0 0
  %1192 = vmatpush1.bf16.msra.mxu0 %v1179
  %1193 = vmatprep.subr.bf16.mxu0 0
  %1194 = vmatpush1.bf16.msra.mxu0 %v1178
  %1195 = vmatprep.subr.bf16.mxu0 0
  %1196 = vmatpush1.bf16.msra.mxu0 %v1177
  %1197 = vmatprep.subr.bf16.mxu0 0
  %1198 = vmatpush1.bf16.msra.mxu0 %v1176
  %1199 = vmatprep.subr.bf16.mxu0 0
  %1200 = vmatpush1.bf16.msra.mxu0 %v1175
  %1201 = vmatprep.subr.bf16.mxu0 0
  %1202 = vmatpush1.bf16.msra.mxu0 %v1174
  %1203 = vmatprep.subr.bf16.mxu0 0
  %1204 = vmatpush1.bf16.msra.mxu0 %v1173
  %1205 = vmatprep.subr.bf16.mxu0 0
  %1206 = vmatpush2.bf16.msra.mxu0 0
  %1207 = vmatprep.subr.bf16.mxu0 0
  %1208 = vmatpush2.bf16.msra.mxu0 0
  %1209 = vmatprep.subr.bf16.mxu0 0
  %1210 = vmatpush2.bf16.msra.mxu0 0
  %1211 = vmatprep.subr.bf16.mxu0 0
  %1212 = vmatpush2.bf16.msra.mxu0 0
  %1213 = vmatprep.subr.bf16.mxu0 0
  %1214 = vmatpush2.bf16.msra.mxu0 0
  %1215 = vmatprep.subr.bf16.mxu0 0
  %1216 = vmatpush2.bf16.msra.mxu0 0
  %1217 = vmatprep.subr.bf16.mxu0 0
  %1218 = vmatpush2.bf16.msra.mxu0 0
  %1219 = vmatprep.subr.bf16.mxu0 0
  %1220 = vmatpush2.bf16.msra.mxu0 0
  %1221 = vmatprep.mubr.bf16.mxu0 0
  %1222 = vmatmul.mubr.bf16.gmra.mxu0 %v1139
  %v1223 = vpop.f32.mrf.mxu0
  %v1224 = vadd.f32 0.0, %v1223
  %v1225 = vpop.f32.mrf.mxu0
  %v1226 = vpop.f32.mrf.mxu0
  %v1227 = vpop.f32.mrf.mxu0
  %1228 = vdwg.mxu0
  %v1230 = vrot.slane %v1224, 4
  %v1232 = vadd.f32 %v1120, %v1230
  %v1233 = vmax.f32 %v1232, 0.0
  %v1234 = vld [vmem:[#allocation2 + $0x8] sm:$0x30]
  %v1235 = vpack.c.bf16 %v883, %v883
  %v1236 = vld [vmem:[%s323] sm:$0xf]
  %v1237 = vld [vmem:[%s323 + $0x4] sm:$0xf]
  %v1238 = vld [vmem:[%s323 + $0x8] sm:$0xf]
  %v1239 = vld [vmem:[%s323 + $0xc] sm:$0xf]
  %v1240 = vld [vmem:[%s323 + $0x10] sm:$0xf]
  %v1241 = vld [vmem:[%s323 + $0x14] sm:$0xf]
  %v1242 = vld [vmem:[%s323 + $0x18] sm:$0xf]
  %v1243 = vld [vmem:[%s323 + $0x1c] sm:$0xf]
  %v1244 = vld [vmem:[%s323 + $0x20] sm:$0xf]
  %v1245 = vld [vmem:[%s323 + $0x24] sm:$0xf]
  %v1246 = vld [vmem:[%s323 + $0x28] sm:$0xf]
  %v1247 = vld [vmem:[%s323 + $0x2c] sm:$0xf]
  %v1248 = vld [vmem:[%s323 + $0x30] sm:$0xf]
  %v1249 = vld [vmem:[%s323 + $0x34] sm:$0xf]
  %v1250 = vld [vmem:[%s323 + $0x38] sm:$0xf]
  %v1251 = vld [vmem:[%s323 + $0x3c] sm:$0xf]
  %v1253 = vrot.slane %v1235, 1
  %v1271 = vunpack.c.l.b16 %v1236
  %v1272 = vunpack.c.l.b16 %v1237
  %v1273 = vunpack.c.l.b16 %v1238
  %v1274 = vunpack.c.l.b16 %v1239
  %v1275 = vunpack.c.l.b16 %v1240
  %v1276 = vunpack.c.l.b16 %v1241
  %v1277 = vunpack.c.l.b16 %v1242
  %v1278 = vunpack.c.l.b16 %v1243
  %v1279 = vunpack.c.l.b16 %v1244
  %v1280 = vunpack.c.l.b16 %v1245
  %v1281 = vunpack.c.l.b16 %v1246
  %v1282 = vunpack.c.l.b16 %v1247
  %v1283 = vunpack.c.l.b16 %v1248
  %v1284 = vunpack.c.l.b16 %v1249
  %v1285 = vunpack.c.l.b16 %v1250
  %v1286 = vunpack.c.l.b16 %v1251
  %v1287 = vpack.c.b16 %v1272, %v1271
  %v1288 = vpack.c.b16 %v1274, %v1273
  %v1289 = vpack.c.b16 %v1276, %v1275
  %v1290 = vpack.c.b16 %v1278, %v1277
  %v1291 = vpack.c.b16 %v1280, %v1279
  %v1292 = vpack.c.b16 %v1282, %v1281
  %v1293 = vpack.c.b16 %v1284, %v1283
  %v1294 = vpack.c.b16 %v1286, %v1285
  %1303 = vmatprep.subr.bf16.mxu0 0
  %1304 = vmatpush1.bf16.msra.mxu0 %v1294
  %1305 = vmatprep.subr.bf16.mxu0 0
  %1306 = vmatpush1.bf16.msra.mxu0 %v1293
  %1307 = vmatprep.subr.bf16.mxu0 0
  %1308 = vmatpush1.bf16.msra.mxu0 %v1292
  %1309 = vmatprep.subr.bf16.mxu0 0
  %1310 = vmatpush1.bf16.msra.mxu0 %v1291
  %1311 = vmatprep.subr.bf16.mxu0 0
  %1312 = vmatpush1.bf16.msra.mxu0 %v1290
  %1313 = vmatprep.subr.bf16.mxu0 0
  %1314 = vmatpush1.bf16.msra.mxu0 %v1289
  %1315 = vmatprep.subr.bf16.mxu0 0
  %1316 = vmatpush1.bf16.msra.mxu0 %v1288
  %1317 = vmatprep.subr.bf16.mxu0 0
  %1318 = vmatpush1.bf16.msra.mxu0 %v1287
  %1319 = vmatprep.subr.bf16.mxu0 0
  %1320 = vmatpush2.bf16.msra.mxu0 0
  %1321 = vmatprep.subr.bf16.mxu0 0
  %1322 = vmatpush2.bf16.msra.mxu0 0
  %1323 = vmatprep.subr.bf16.mxu0 0
  %1324 = vmatpush2.bf16.msra.mxu0 0
  %1325 = vmatprep.subr.bf16.mxu0 0
  %1326 = vmatpush2.bf16.msra.mxu0 0
  %1327 = vmatprep.subr.bf16.mxu0 0
  %1328 = vmatpush2.bf16.msra.mxu0 0
  %1329 = vmatprep.subr.bf16.mxu0 0
  %1330 = vmatpush2.bf16.msra.mxu0 0
  %1331 = vmatprep.subr.bf16.mxu0 0
  %1332 = vmatpush2.bf16.msra.mxu0 0
  %1333 = vmatprep.subr.bf16.mxu0 0
  %1334 = vmatpush2.bf16.msra.mxu0 0
  %1335 = vmatprep.mubr.bf16.mxu0 0
  %1336 = vmatmul.mubr.bf16.gmra.mxu0 %v1253
  %v1337 = vpop.f32.mrf.mxu0
  %v1338 = vadd.f32 0.0, %v1337
  %v1339 = vpop.f32.mrf.mxu0
  %v1340 = vpop.f32.mrf.mxu0
  %v1341 = vpop.f32.mrf.mxu0
  %1342 = vdwg.mxu0
  %v1344 = vrot.slane %v1338, 4
  %v1346 = vadd.f32 %v1234, %v1344
  %v1347 = vmax.f32 %v1346, 0.0
  %v1348 = vld [vmem:[#allocation2 + $0x10] sm:$0x30]
  %v1349 = vpack.c.bf16 %v994, %v994
  %v1350 = vld [vmem:[%s431] sm:$0xf]
  %v1351 = vld [vmem:[%s431 + $0x4] sm:$0xf]
  %v1352 = vld [vmem:[%s431 + $0x8] sm:$0xf]
  %v1353 = vld [vmem:[%s431 + $0xc] sm:$0xf]
  %v1354 = vld [vmem:[%s431 + $0x10] sm:$0xf]
  %v1355 = vld [vmem:[%s431 + $0x14] sm:$0xf]
  %v1356 = vld [vmem:[%s431 + $0x18] sm:$0xf]
  %v1357 = vld [vmem:[%s431 + $0x1c] sm:$0xf]
  %v1358 = vld [vmem:[%s431 + $0x20] sm:$0xf]
  %v1359 = vld [vmem:[%s431 + $0x24] sm:$0xf]
  %v1360 = vld [vmem:[%s431 + $0x28] sm:$0xf]
  %v1361 = vld [vmem:[%s431 + $0x2c] sm:$0xf]
  %v1362 = vld [vmem:[%s431 + $0x30] sm:$0xf]
  %v1363 = vld [vmem:[%s431 + $0x34] sm:$0xf]
  %v1364 = vld [vmem:[%s431 + $0x38] sm:$0xf]
  %v1365 = vld [vmem:[%s431 + $0x3c] sm:$0xf]
  %v1367 = vrot.slane %v1349, 1
  %v1385 = vunpack.c.l.b16 %v1350
  %v1386 = vunpack.c.l.b16 %v1351
  %v1387 = vunpack.c.l.b16 %v1352
  %v1388 = vunpack.c.l.b16 %v1353
  %v1389 = vunpack.c.l.b16 %v1354
  %v1390 = vunpack.c.l.b16 %v1355
  %v1391 = vunpack.c.l.b16 %v1356
  %v1392 = vunpack.c.l.b16 %v1357
  %v1393 = vunpack.c.l.b16 %v1358
  %v1394 = vunpack.c.l.b16 %v1359
  %v1395 = vunpack.c.l.b16 %v1360
  %v1396 = vunpack.c.l.b16 %v1361
  %v1397 = vunpack.c.l.b16 %v1362
  %v1398 = vunpack.c.l.b16 %v1363
  %v1399 = vunpack.c.l.b16 %v1364
  %v1400 = vunpack.c.l.b16 %v1365
  %v1401 = vpack.c.b16 %v1386, %v1385
  %v1402 = vpack.c.b16 %v1388, %v1387
  %v1403 = vpack.c.b16 %v1390, %v1389
  %v1404 = vpack.c.b16 %v1392, %v1391
  %v1405 = vpack.c.b16 %v1394, %v1393
  %v1406 = vpack.c.b16 %v1396, %v1395
  %v1407 = vpack.c.b16 %v1398, %v1397
  %v1408 = vpack.c.b16 %v1400, %v1399
  %1417 = vmatprep.subr.bf16.mxu0 0
  %1418 = vmatpush1.bf16.msra.mxu0 %v1408
  %1419 = vmatprep.subr.bf16.mxu0 0
  %1420 = vmatpush1.bf16.msra.mxu0 %v1407
  %1421 = vmatprep.subr.bf16.mxu0 0
  %1422 = vmatpush1.bf16.msra.mxu0 %v1406
  %1423 = vmatprep.subr.bf16.mxu0 0
  %1424 = vmatpush1.bf16.msra.mxu0 %v1405
  %1425 = vmatprep.subr.bf16.mxu0 0
  %1426 = vmatpush1.bf16.msra.mxu0 %v1404
  %1427 = vmatprep.subr.bf16.mxu0 0
  %1428 = vmatpush1.bf16.msra.mxu0 %v1403
  %1429 = vmatprep.subr.bf16.mxu0 0
  %1430 = vmatpush1.bf16.msra.mxu0 %v1402
  %1431 = vmatprep.subr.bf16.mxu0 0
  %1432 = vmatpush1.bf16.msra.mxu0 %v1401
  %1433 = vmatprep.subr.bf16.mxu0 0
  %1434 = vmatpush2.bf16.msra.mxu0 0
  %1435 = vmatprep.subr.bf16.mxu0 0
  %1436 = vmatpush2.bf16.msra.mxu0 0
  %1437 = vmatprep.subr.bf16.mxu0 0
  %1438 = vmatpush2.bf16.msra.mxu0 0
  %1439 = vmatprep.subr.bf16.mxu0 0
  %1440 = vmatpush2.bf16.msra.mxu0 0
  %1441 = vmatprep.subr.bf16.mxu0 0
  %1442 = vmatpush2.bf16.msra.mxu0 0
  %1443 = vmatprep.subr.bf16.mxu0 0
  %1444 = vmatpush2.bf16.msra.mxu0 0
  %1445 = vmatprep.subr.bf16.mxu0 0
  %1446 = vmatpush2.bf16.msra.mxu0 0
  %1447 = vmatprep.subr.bf16.mxu0 0
  %1448 = vmatpush2.bf16.msra.mxu0 0
  %1449 = vmatprep.mubr.bf16.mxu0 0
  %1450 = vmatmul.mubr.bf16.gmra.mxu0 %v1367
  %v1451 = vpop.f32.mrf.mxu0
  %v1452 = vadd.f32 0.0, %v1451
  %v1453 = vpop.f32.mrf.mxu0
  %v1454 = vpop.f32.mrf.mxu0
  %v1455 = vpop.f32.mrf.mxu0
  %1456 = vdwg.mxu0
  %v1458 = vrot.slane %v1452, 4
  %v1460 = vadd.f32 %v1348, %v1458
  %v1461 = vmax.f32 %v1460, 0.0
  %v1462 = vld [vmem:[#allocation2 + $0x18] sm:$0x30]
  %v1463 = vpack.c.bf16 %v1105, %v1105
  %v1464 = vld [vmem:[%s539] sm:$0xf]
  %v1465 = vld [vmem:[%s539 + $0x4] sm:$0xf]
  %v1466 = vld [vmem:[%s539 + $0x8] sm:$0xf]
  %v1467 = vld [vmem:[%s539 + $0xc] sm:$0xf]
  %v1468 = vld [vmem:[%s539 + $0x10] sm:$0xf]
  %v1469 = vld [vmem:[%s539 + $0x14] sm:$0xf]
  %v1470 = vld [vmem:[%s539 + $0x18] sm:$0xf]
  %v1471 = vld [vmem:[%s539 + $0x1c] sm:$0xf]
  %v1472 = vld [vmem:[%s539 + $0x20] sm:$0xf]
  %v1473 = vld [vmem:[%s539 + $0x24] sm:$0xf]
  %v1474 = vld [vmem:[%s539 + $0x28] sm:$0xf]
  %v1475 = vld [vmem:[%s539 + $0x2c] sm:$0xf]
  %v1476 = vld [vmem:[%s539 + $0x30] sm:$0xf]
  %v1477 = vld [vmem:[%s539 + $0x34] sm:$0xf]
  %v1478 = vld [vmem:[%s539 + $0x38] sm:$0xf]
  %v1479 = vld [vmem:[%s539 + $0x3c] sm:$0xf]
  %v1481 = vrot.slane %v1463, 1
  %v1499 = vunpack.c.l.b16 %v1464
  %v1500 = vunpack.c.l.b16 %v1465
  %v1501 = vunpack.c.l.b16 %v1466
  %v1502 = vunpack.c.l.b16 %v1467
  %v1503 = vunpack.c.l.b16 %v1468
  %v1504 = vunpack.c.l.b16 %v1469
  %v1505 = vunpack.c.l.b16 %v1470
  %v1506 = vunpack.c.l.b16 %v1471
  %v1507 = vunpack.c.l.b16 %v1472
  %v1508 = vunpack.c.l.b16 %v1473
  %v1509 = vunpack.c.l.b16 %v1474
  %v1510 = vunpack.c.l.b16 %v1475
  %v1511 = vunpack.c.l.b16 %v1476
  %v1512 = vunpack.c.l.b16 %v1477
  %v1513 = vunpack.c.l.b16 %v1478
  %v1514 = vunpack.c.l.b16 %v1479
  %v1515 = vpack.c.b16 %v1500, %v1499
  %v1516 = vpack.c.b16 %v1502, %v1501
  %v1517 = vpack.c.b16 %v1504, %v1503
  %v1518 = vpack.c.b16 %v1506, %v1505
  %v1519 = vpack.c.b16 %v1508, %v1507
  %v1520 = vpack.c.b16 %v1510, %v1509
  %v1521 = vpack.c.b16 %v1512, %v1511
  %v1522 = vpack.c.b16 %v1514, %v1513
  %1531 = vmatprep.subr.bf16.mxu0 0
  %1532 = vmatpush1.bf16.msra.mxu0 %v1522
  %1533 = vmatprep.subr.bf16.mxu0 0
  %1534 = vmatpush1.bf16.msra.mxu0 %v1521
  %1535 = vmatprep.subr.bf16.mxu0 0
  %1536 = vmatpush1.bf16.msra.mxu0 %v1520
  %1537 = vmatprep.subr.bf16.mxu0 0
  %1538 = vmatpush1.bf16.msra.mxu0 %v1519
  %1539 = vmatprep.subr.bf16.mxu0 0
  %1540 = vmatpush1.bf16.msra.mxu0 %v1518
  %1541 = vmatprep.subr.bf16.mxu0 0
  %1542 = vmatpush1.bf16.msra.mxu0 %v1517
  %1543 = vmatprep.subr.bf16.mxu0 0
  %1544 = vmatpush1.bf16.msra.mxu0 %v1516
  %1545 = vmatprep.subr.bf16.mxu0 0
  %1546 = vmatpush1.bf16.msra.mxu0 %v1515
  %1547 = vmatprep.subr.bf16.mxu0 0
  %1548 = vmatpush2.bf16.msra.mxu0 0
  %1549 = vmatprep.subr.bf16.mxu0 0
  %1550 = vmatpush2.bf16.msra.mxu0 0
  %1551 = vmatprep.subr.bf16.mxu0 0
  %1552 = vmatpush2.bf16.msra.mxu0 0
  %1553 = vmatprep.subr.bf16.mxu0 0
  %1554 = vmatpush2.bf16.msra.mxu0 0
  %1555 = vmatprep.subr.bf16.mxu0 0
  %1556 = vmatpush2.bf16.msra.mxu0 0
  %1557 = vmatprep.subr.bf16.mxu0 0
  %1558 = vmatpush2.bf16.msra.mxu0 0
  %1559 = vmatprep.subr.bf16.mxu0 0
  %1560 = vmatpush2.bf16.msra.mxu0 0
  %1561 = vmatprep.subr.bf16.mxu0 0
  %1562 = vmatpush2.bf16.msra.mxu0 0
  %1563 = vmatprep.mubr.bf16.mxu0 0
  %1564 = vmatmul.mubr.bf16.gmra.mxu0 %v1481
  %v1565 = vpop.f32.mrf.mxu0
  %v1566 = vadd.f32 0.0, %v1565
  %v1567 = vpop.f32.mrf.mxu0
  %v1568 = vpop.f32.mrf.mxu0
  %v1569 = vpop.f32.mrf.mxu0
  %1570 = vdwg.mxu0
  %v1572 = vrot.slane %v1566, 4
  %v1574 = vadd.f32 %v1462, %v1572
  %v1575 = vtanh.pop %v1574
  %v1577 = vrot.slane %v1233, 4
  %v1580 = vrot.slane %v1347, 2
  %v1583 = vrot.slane %v1575, 6
  %v1585 = vsel %vm655, %v1577, %v1580
  %v1586 = vsel %vm657, %v1585, %v1461
  %v1587 = vsel %vm659, %v1586, %v1583
  %s1588 = scalar_lea.vmem %s4, 16
  %1589 = vst [vmem:[%s1588] sm:$0xff] %v1587
  %v1590 = vld [vmem:[#allocation2] sm:$0xc0]
  %v1591 = vpack.c.bf16 %v1233, %v1233
  %v1592 = vld [vmem:[%s3] sm:$0xf]
  %v1593 = vld [vmem:[%s3 + $0x4] sm:$0xf]
  %v1594 = vld [vmem:[%s3 + $0x8] sm:$0xf]
  %v1595 = vld [vmem:[%s3 + $0xc] sm:$0xf]
  %v1596 = vld [vmem:[%s3 + $0x10] sm:$0xf]
  %v1597 = vld [vmem:[%s3 + $0x14] sm:$0xf]
  %v1598 = vld [vmem:[%s3 + $0x18] sm:$0xf]
  %v1599 = vld [vmem:[%s3 + $0x1c] sm:$0xf]
  %v1600 = vld [vmem:[%s3 + $0x20] sm:$0xf]
  %v1601 = vld [vmem:[%s3 + $0x24] sm:$0xf]
  %v1602 = vld [vmem:[%s3 + $0x28] sm:$0xf]
  %v1603 = vld [vmem:[%s3 + $0x2c] sm:$0xf]
  %v1604 = vld [vmem:[%s3 + $0x30] sm:$0xf]
  %v1605 = vld [vmem:[%s3 + $0x34] sm:$0xf]
  %v1606 = vld [vmem:[%s3 + $0x38] sm:$0xf]
  %v1607 = vld [vmem:[%s3 + $0x3c] sm:$0xf]
  %v1609 = vrot.slane %v1591, 2
  %v1627 = vunpack.c.l.b16 %v1592
  %v1628 = vunpack.c.l.b16 %v1593
  %v1629 = vunpack.c.l.b16 %v1594
  %v1630 = vunpack.c.l.b16 %v1595
  %v1631 = vunpack.c.l.b16 %v1596
  %v1632 = vunpack.c.l.b16 %v1597
  %v1633 = vunpack.c.l.b16 %v1598
  %v1634 = vunpack.c.l.b16 %v1599
  %v1635 = vunpack.c.l.b16 %v1600
  %v1636 = vunpack.c.l.b16 %v1601
  %v1637 = vunpack.c.l.b16 %v1602
  %v1638 = vunpack.c.l.b16 %v1603
  %v1639 = vunpack.c.l.b16 %v1604
  %v1640 = vunpack.c.l.b16 %v1605
  %v1641 = vunpack.c.l.b16 %v1606
  %v1642 = vunpack.c.l.b16 %v1607
  %v1643 = vpack.c.b16 %v1628, %v1627
  %v1644 = vpack.c.b16 %v1630, %v1629
  %v1645 = vpack.c.b16 %v1632, %v1631
  %v1646 = vpack.c.b16 %v1634, %v1633
  %v1647 = vpack.c.b16 %v1636, %v1635
  %v1648 = vpack.c.b16 %v1638, %v1637
  %v1649 = vpack.c.b16 %v1640, %v1639
  %v1650 = vpack.c.b16 %v1642, %v1641
  %1659 = vmatprep.subr.bf16.mxu0 0
  %1660 = vmatpush1.bf16.msra.mxu0 %v1650
  %1661 = vmatprep.subr.bf16.mxu0 0
  %1662 = vmatpush1.bf16.msra.mxu0 %v1649
  %1663 = vmatprep.subr.bf16.mxu0 0
  %1664 = vmatpush1.bf16.msra.mxu0 %v1648
  %1665 = vmatprep.subr.bf16.mxu0 0
  %1666 = vmatpush1.bf16.msra.mxu0 %v1647
  %1667 = vmatprep.subr.bf16.mxu0 0
  %1668 = vmatpush1.bf16.msra.mxu0 %v1646
  %1669 = vmatprep.subr.bf16.mxu0 0
  %1670 = vmatpush1.bf16.msra.mxu0 %v1645
  %1671 = vmatprep.subr.bf16.mxu0 0
  %1672 = vmatpush1.bf16.msra.mxu0 %v1644
  %1673 = vmatprep.subr.bf16.mxu0 0
  %1674 = vmatpush1.bf16.msra.mxu0 %v1643
  %1675 = vmatprep.subr.bf16.mxu0 0
  %1676 = vmatpush2.bf16.msra.mxu0 0
  %1677 = vmatprep.subr.bf16.mxu0 0
  %1678 = vmatpush2.bf16.msra.mxu0 0
  %1679 = vmatprep.subr.bf16.mxu0 0
  %1680 = vmatpush2.bf16.msra.mxu0 0
  %1681 = vmatprep.subr.bf16.mxu0 0
  %1682 = vmatpush2.bf16.msra.mxu0 0
  %1683 = vmatprep.subr.bf16.mxu0 0
  %1684 = vmatpush2.bf16.msra.mxu0 0
  %1685 = vmatprep.subr.bf16.mxu0 0
  %1686 = vmatpush2.bf16.msra.mxu0 0
  %1687 = vmatprep.subr.bf16.mxu0 0
  %1688 = vmatpush2.bf16.msra.mxu0 0
  %1689 = vmatprep.subr.bf16.mxu0 0
  %1690 = vmatpush2.bf16.msra.mxu0 0
  %1691 = vmatprep.mubr.bf16.mxu0 0
  %1692 = vmatmul.mubr.bf16.gmra.mxu0 %v1609
  %v1693 = vpop.f32.mrf.mxu0
  %v1694 = vadd.f32 0.0, %v1693
  %v1695 = vpop.f32.mrf.mxu0
  %v1696 = vpop.f32.mrf.mxu0
  %v1697 = vpop.f32.mrf.mxu0
  %1698 = vdwg.mxu0
  %v1700 = vrot.slane %v1694, 2
  %v1702 = vadd.f32 %v1590, %v1700
  %v1703 = vmax.f32 %v1702, 0.0
  %v1704 = vld [vmem:[#allocation2 + $0x8] sm:$0xc0]
  %v1705 = vpack.c.bf16 %v1347, %v1347
  %v1706 = vld [vmem:[%s323] sm:$0xf]
  %v1707 = vld [vmem:[%s323 + $0x4] sm:$0xf]
  %v1708 = vld [vmem:[%s323 + $0x8] sm:$0xf]
  %v1709 = vld [vmem:[%s323 + $0xc] sm:$0xf]
  %v1710 = vld [vmem:[%s323 + $0x10] sm:$0xf]
  %v1711 = vld [vmem:[%s323 + $0x14] sm:$0xf]
  %v1712 = vld [vmem:[%s323 + $0x18] sm:$0xf]
  %v1713 = vld [vmem:[%s323 + $0x1c] sm:$0xf]
  %v1714 = vld [vmem:[%s323 + $0x20] sm:$0xf]
  %v1715 = vld [vmem:[%s323 + $0x24] sm:$0xf]
  %v1716 = vld [vmem:[%s323 + $0x28] sm:$0xf]
  %v1717 = vld [vmem:[%s323 + $0x2c] sm:$0xf]
  %v1718 = vld [vmem:[%s323 + $0x30] sm:$0xf]
  %v1719 = vld [vmem:[%s323 + $0x34] sm:$0xf]
  %v1720 = vld [vmem:[%s323 + $0x38] sm:$0xf]
  %v1721 = vld [vmem:[%s323 + $0x3c] sm:$0xf]
  %v1723 = vrot.slane %v1705, 2
  %v1741 = vunpack.c.l.b16 %v1706
  %v1742 = vunpack.c.l.b16 %v1707
  %v1743 = vunpack.c.l.b16 %v1708
  %v1744 = vunpack.c.l.b16 %v1709
  %v1745 = vunpack.c.l.b16 %v1710
  %v1746 = vunpack.c.l.b16 %v1711
  %v1747 = vunpack.c.l.b16 %v1712
  %v1748 = vunpack.c.l.b16 %v1713
  %v1749 = vunpack.c.l.b16 %v1714
  %v1750 = vunpack.c.l.b16 %v1715
  %v1751 = vunpack.c.l.b16 %v1716
  %v1752 = vunpack.c.l.b16 %v1717
  %v1753 = vunpack.c.l.b16 %v1718
  %v1754 = vunpack.c.l.b16 %v1719
  %v1755 = vunpack.c.l.b16 %v1720
  %v1756 = vunpack.c.l.b16 %v1721
  %v1757 = vpack.c.b16 %v1742, %v1741
  %v1758 = vpack.c.b16 %v1744, %v1743
  %v1759 = vpack.c.b16 %v1746, %v1745
  %v1760 = vpack.c.b16 %v1748, %v1747
  %v1761 = vpack.c.b16 %v1750, %v1749
  %v1762 = vpack.c.b16 %v1752, %v1751
  %v1763 = vpack.c.b16 %v1754, %v1753
  %v1764 = vpack.c.b16 %v1756, %v1755
  %1773 = vmatprep.subr.bf16.mxu0 0
  %1774 = vmatpush1.bf16.msra.mxu0 %v1764
  %1775 = vmatprep.subr.bf16.mxu0 0
  %1776 = vmatpush1.bf16.msra.mxu0 %v1763
  %1777 = vmatprep.subr.bf16.mxu0 0
  %1778 = vmatpush1.bf16.msra.mxu0 %v1762
  %1779 = vmatprep.subr.bf16.mxu0 0
  %1780 = vmatpush1.bf16.msra.mxu0 %v1761
  %1781 = vmatprep.subr.bf16.mxu0 0
  %1782 = vmatpush1.bf16.msra.mxu0 %v1760
  %1783 = vmatprep.subr.bf16.mxu0 0
  %1784 = vmatpush1.bf16.msra.mxu0 %v1759
  %1785 = vmatprep.subr.bf16.mxu0 0
  %1786 = vmatpush1.bf16.msra.mxu0 %v1758
  %1787 = vmatprep.subr.bf16.mxu0 0
  %1788 = vmatpush1.bf16.msra.mxu0 %v1757
  %1789 = vmatprep.subr.bf16.mxu0 0
  %1790 = vmatpush2.bf16.msra.mxu0 0
  %1791 = vmatprep.subr.bf16.mxu0 0
  %1792 = vmatpush2.bf16.msra.mxu0 0
  %1793 = vmatprep.subr.bf16.mxu0 0
  %1794 = vmatpush2.bf16.msra.mxu0 0
  %1795 = vmatprep.subr.bf16.mxu0 0
  %1796 = vmatpush2.bf16.msra.mxu0 0
  %1797 = vmatprep.subr.bf16.mxu0 0
  %1798 = vmatpush2.bf16.msra.mxu0 0
  %1799 = vmatprep.subr.bf16.mxu0 0
  %1800 = vmatpush2.bf16.msra.mxu0 0
  %1801 = vmatprep.subr.bf16.mxu0 0
  %1802 = vmatpush2.bf16.msra.mxu0 0
  %1803 = vmatprep.subr.bf16.mxu0 0
  %1804 = vmatpush2.bf16.msra.mxu0 0
  %1805 = vmatprep.mubr.bf16.mxu0 0
  %1806 = vmatmul.mubr.bf16.gmra.mxu0 %v1723
  %v1807 = vpop.f32.mrf.mxu0
  %v1808 = vadd.f32 0.0, %v1807
  %v1809 = vpop.f32.mrf.mxu0
  %v1810 = vpop.f32.mrf.mxu0
  %v1811 = vpop.f32.mrf.mxu0
  %1812 = vdwg.mxu0
  %v1814 = vrot.slane %v1808, 2
  %v1816 = vadd.f32 %v1704, %v1814
  %v1817 = vmax.f32 %v1816, 0.0
  %v1818 = vld [vmem:[#allocation2 + $0x10] sm:$0xc0]
  %v1819 = vpack.c.bf16 %v1461, %v1461
  %v1820 = vld [vmem:[%s431] sm:$0xf]
  %v1821 = vld [vmem:[%s431 + $0x4] sm:$0xf]
  %v1822 = vld [vmem:[%s431 + $0x8] sm:$0xf]
  %v1823 = vld [vmem:[%s431 + $0xc] sm:$0xf]
  %v1824 = vld [vmem:[%s431 + $0x10] sm:$0xf]
  %v1825 = vld [vmem:[%s431 + $0x14] sm:$0xf]
  %v1826 = vld [vmem:[%s431 + $0x18] sm:$0xf]
  %v1827 = vld [vmem:[%s431 + $0x1c] sm:$0xf]
  %v1828 = vld [vmem:[%s431 + $0x20] sm:$0xf]
  %v1829 = vld [vmem:[%s431 + $0x24] sm:$0xf]
  %v1830 = vld [vmem:[%s431 + $0x28] sm:$0xf]
  %v1831 = vld [vmem:[%s431 + $0x2c] sm:$0xf]
  %v1832 = vld [vmem:[%s431 + $0x30] sm:$0xf]
  %v1833 = vld [vmem:[%s431 + $0x34] sm:$0xf]
  %v1834 = vld [vmem:[%s431 + $0x38] sm:$0xf]
  %v1835 = vld [vmem:[%s431 + $0x3c] sm:$0xf]
  %v1837 = vrot.slane %v1819, 2
  %v1855 = vunpack.c.l.b16 %v1820
  %v1856 = vunpack.c.l.b16 %v1821
  %v1857 = vunpack.c.l.b16 %v1822
  %v1858 = vunpack.c.l.b16 %v1823
  %v1859 = vunpack.c.l.b16 %v1824
  %v1860 = vunpack.c.l.b16 %v1825
  %v1861 = vunpack.c.l.b16 %v1826
  %v1862 = vunpack.c.l.b16 %v1827
  %v1863 = vunpack.c.l.b16 %v1828
  %v1864 = vunpack.c.l.b16 %v1829
  %v1865 = vunpack.c.l.b16 %v1830
  %v1866 = vunpack.c.l.b16 %v1831
  %v1867 = vunpack.c.l.b16 %v1832
  %v1868 = vunpack.c.l.b16 %v1833
  %v1869 = vunpack.c.l.b16 %v1834
  %v1870 = vunpack.c.l.b16 %v1835
  %v1871 = vpack.c.b16 %v1856, %v1855
  %v1872 = vpack.c.b16 %v1858, %v1857
  %v1873 = vpack.c.b16 %v1860, %v1859
  %v1874 = vpack.c.b16 %v1862, %v1861
  %v1875 = vpack.c.b16 %v1864, %v1863
  %v1876 = vpack.c.b16 %v1866, %v1865
  %v1877 = vpack.c.b16 %v1868, %v1867
  %v1878 = vpack.c.b16 %v1870, %v1869
  %1887 = vmatprep.subr.bf16.mxu0 0
  %1888 = vmatpush1.bf16.msra.mxu0 %v1878
  %1889 = vmatprep.subr.bf16.mxu0 0
  %1890 = vmatpush1.bf16.msra.mxu0 %v1877
  %1891 = vmatprep.subr.bf16.mxu0 0
  %1892 = vmatpush1.bf16.msra.mxu0 %v1876
  %1893 = vmatprep.subr.bf16.mxu0 0
  %1894 = vmatpush1.bf16.msra.mxu0 %v1875
  %1895 = vmatprep.subr.bf16.mxu0 0
  %1896 = vmatpush1.bf16.msra.mxu0 %v1874
  %1897 = vmatprep.subr.bf16.mxu0 0
  %1898 = vmatpush1.bf16.msra.mxu0 %v1873
  %1899 = vmatprep.subr.bf16.mxu0 0
  %1900 = vmatpush1.bf16.msra.mxu0 %v1872
  %1901 = vmatprep.subr.bf16.mxu0 0
  %1902 = vmatpush1.bf16.msra.mxu0 %v1871
  %1903 = vmatprep.subr.bf16.mxu0 0
  %1904 = vmatpush2.bf16.msra.mxu0 0
  %1905 = vmatprep.subr.bf16.mxu0 0
  %1906 = vmatpush2.bf16.msra.mxu0 0
  %1907 = vmatprep.subr.bf16.mxu0 0
  %1908 = vmatpush2.bf16.msra.mxu0 0
  %1909 = vmatprep.subr.bf16.mxu0 0
  %1910 = vmatpush2.bf16.msra.mxu0 0
  %1911 = vmatprep.subr.bf16.mxu0 0
  %1912 = vmatpush2.bf16.msra.mxu0 0
  %1913 = vmatprep.subr.bf16.mxu0 0
  %1914 = vmatpush2.bf16.msra.mxu0 0
  %1915 = vmatprep.subr.bf16.mxu0 0
  %1916 = vmatpush2.bf16.msra.mxu0 0
  %1917 = vmatprep.subr.bf16.mxu0 0
  %1918 = vmatpush2.bf16.msra.mxu0 0
  %1919 = vmatprep.mubr.bf16.mxu0 0
  %1920 = vmatmul.mubr.bf16.gmra.mxu0 %v1837
  %v1921 = vpop.f32.mrf.mxu0
  %v1922 = vadd.f32 0.0, %v1921
  %v1923 = vpop.f32.mrf.mxu0
  %v1924 = vpop.f32.mrf.mxu0
  %v1925 = vpop.f32.mrf.mxu0
  %1926 = vdwg.mxu0
  %v1928 = vrot.slane %v1922, 2
  %v1930 = vadd.f32 %v1818, %v1928
  %v1931 = vmax.f32 %v1930, 0.0
  %v1932 = vld [vmem:[#allocation2 + $0x18] sm:$0xc0]
  %v1933 = vpack.c.bf16 %v1575, %v1575
  %v1934 = vld [vmem:[%s539] sm:$0xf]
  %v1935 = vld [vmem:[%s539 + $0x4] sm:$0xf]
  %v1936 = vld [vmem:[%s539 + $0x8] sm:$0xf]
  %v1937 = vld [vmem:[%s539 + $0xc] sm:$0xf]
  %v1938 = vld [vmem:[%s539 + $0x10] sm:$0xf]
  %v1939 = vld [vmem:[%s539 + $0x14] sm:$0xf]
  %v1940 = vld [vmem:[%s539 + $0x18] sm:$0xf]
  %v1941 = vld [vmem:[%s539 + $0x1c] sm:$0xf]
  %v1942 = vld [vmem:[%s539 + $0x20] sm:$0xf]
  %v1943 = vld [vmem:[%s539 + $0x24] sm:$0xf]
  %v1944 = vld [vmem:[%s539 + $0x28] sm:$0xf]
  %v1945 = vld [vmem:[%s539 + $0x2c] sm:$0xf]
  %v1946 = vld [vmem:[%s539 + $0x30] sm:$0xf]
  %v1947 = vld [vmem:[%s539 + $0x34] sm:$0xf]
  %v1948 = vld [vmem:[%s539 + $0x38] sm:$0xf]
  %v1949 = vld [vmem:[%s539 + $0x3c] sm:$0xf]
  %v1951 = vrot.slane %v1933, 2
  %v1969 = vunpack.c.l.b16 %v1934
  %v1970 = vunpack.c.l.b16 %v1935
  %v1971 = vunpack.c.l.b16 %v1936
  %v1972 = vunpack.c.l.b16 %v1937
  %v1973 = vunpack.c.l.b16 %v1938
  %v1974 = vunpack.c.l.b16 %v1939
  %v1975 = vunpack.c.l.b16 %v1940
  %v1976 = vunpack.c.l.b16 %v1941
  %v1977 = vunpack.c.l.b16 %v1942
  %v1978 = vunpack.c.l.b16 %v1943
  %v1979 = vunpack.c.l.b16 %v1944
  %v1980 = vunpack.c.l.b16 %v1945
  %v1981 = vunpack.c.l.b16 %v1946
  %v1982 = vunpack.c.l.b16 %v1947
  %v1983 = vunpack.c.l.b16 %v1948
  %v1984 = vunpack.c.l.b16 %v1949
  %v1985 = vpack.c.b16 %v1970, %v1969
  %v1986 = vpack.c.b16 %v1972, %v1971
  %v1987 = vpack.c.b16 %v1974, %v1973
  %v1988 = vpack.c.b16 %v1976, %v1975
  %v1989 = vpack.c.b16 %v1978, %v1977
  %v1990 = vpack.c.b16 %v1980, %v1979
  %v1991 = vpack.c.b16 %v1982, %v1981
  %v1992 = vpack.c.b16 %v1984, %v1983
  %2001 = vmatprep.subr.bf16.mxu0 0
  %2002 = vmatpush1.bf16.msra.mxu0 %v1992
  %2003 = vmatprep.subr.bf16.mxu0 0
  %2004 = vmatpush1.bf16.msra.mxu0 %v1991
  %2005 = vmatprep.subr.bf16.mxu0 0
  %2006 = vmatpush1.bf16.msra.mxu0 %v1990
  %2007 = vmatprep.subr.bf16.mxu0 0
  %2008 = vmatpush1.bf16.msra.mxu0 %v1989
  %2009 = vmatprep.subr.bf16.mxu0 0
  %2010 = vmatpush1.bf16.msra.mxu0 %v1988
  %2011 = vmatprep.subr.bf16.mxu0 0
  %2012 = vmatpush1.bf16.msra.mxu0 %v1987
  %2013 = vmatprep.subr.bf16.mxu0 0
  %2014 = vmatpush1.bf16.msra.mxu0 %v1986
  %2015 = vmatprep.subr.bf16.mxu0 0
  %2016 = vmatpush1.bf16.msra.mxu0 %v1985
  %2017 = vmatprep.subr.bf16.mxu0 0
  %2018 = vmatpush2.bf16.msra.mxu0 0
  %2019 = vmatprep.subr.bf16.mxu0 0
  %2020 = vmatpush2.bf16.msra.mxu0 0
  %2021 = vmatprep.subr.bf16.mxu0 0
  %2022 = vmatpush2.bf16.msra.mxu0 0
  %2023 = vmatprep.subr.bf16.mxu0 0
  %2024 = vmatpush2.bf16.msra.mxu0 0
  %2025 = vmatprep.subr.bf16.mxu0 0
  %2026 = vmatpush2.bf16.msra.mxu0 0
  %2027 = vmatprep.subr.bf16.mxu0 0
  %2028 = vmatpush2.bf16.msra.mxu0 0
  %2029 = vmatprep.subr.bf16.mxu0 0
  %2030 = vmatpush2.bf16.msra.mxu0 0
  %2031 = vmatprep.subr.bf16.mxu0 0
  %2032 = vmatpush2.bf16.msra.mxu0 0
  %2033 = vmatprep.mubr.bf16.mxu0 0
  %2034 = vmatmul.mubr.bf16.gmra.mxu0 %v1951
  %v2035 = vpop.f32.mrf.mxu0
  %v2036 = vadd.f32 0.0, %v2035
  %v2037 = vpop.f32.mrf.mxu0
  %v2038 = vpop.f32.mrf.mxu0
  %v2039 = vpop.f32.mrf.mxu0
  %2040 = vdwg.mxu0
  %v2042 = vrot.slane %v2036, 2
  %v2044 = vadd.f32 %v1932, %v2042
  %v2045 = vtanh.pop %v2044
  %v2047 = vrot.slane %v1703, 6
  %v2050 = vrot.slane %v1817, 4
  %v2053 = vrot.slane %v1931, 2
  %v2055 = vsel %vm655, %v2047, %v2050
  %v2056 = vsel %vm657, %v2055, %v2053
  %v2057 = vsel %vm659, %v2056, %v2045
  %s2058 = scalar_lea.vmem %s4, 24
  %2059 = vst [vmem:[%s2058] sm:$0xff] %v2057
  %v2060 = vld [vmem:[#allocation2 + $0x20] sm:$0x3]
  %v2061 = vpack.c.bf16 %v1703, %v1703
  %v2062 = vld [vmem:[%s3] sm:$0xf]
  %v2063 = vld [vmem:[%s3 + $0x4] sm:$0xf]
  %v2064 = vld [vmem:[%s3 + $0x8] sm:$0xf]
  %v2065 = vld [vmem:[%s3 + $0xc] sm:$0xf]
  %v2066 = vld [vmem:[%s3 + $0x10] sm:$0xf]
  %v2067 = vld [vmem:[%s3 + $0x14] sm:$0xf]
  %v2068 = vld [vmem:[%s3 + $0x18] sm:$0xf]
  %v2069 = vld [vmem:[%s3 + $0x1c] sm:$0xf]
  %v2070 = vld [vmem:[%s3 + $0x20] sm:$0xf]
  %v2071 = vld [vmem:[%s3 + $0x24] sm:$0xf]
  %v2072 = vld [vmem:[%s3 + $0x28] sm:$0xf]
  %v2073 = vld [vmem:[%s3 + $0x2c] sm:$0xf]
  %v2074 = vld [vmem:[%s3 + $0x30] sm:$0xf]
  %v2075 = vld [vmem:[%s3 + $0x34] sm:$0xf]
  %v2076 = vld [vmem:[%s3 + $0x38] sm:$0xf]
  %v2077 = vld [vmem:[%s3 + $0x3c] sm:$0xf]
  %v2079 = vrot.slane %v2061, 3
  %v2097 = vunpack.c.l.b16 %v2062
  %v2098 = vunpack.c.l.b16 %v2063
  %v2099 = vunpack.c.l.b16 %v2064
  %v2100 = vunpack.c.l.b16 %v2065
  %v2101 = vunpack.c.l.b16 %v2066
  %v2102 = vunpack.c.l.b16 %v2067
  %v2103 = vunpack.c.l.b16 %v2068
  %v2104 = vunpack.c.l.b16 %v2069
  %v2105 = vunpack.c.l.b16 %v2070
  %v2106 = vunpack.c.l.b16 %v2071
  %v2107 = vunpack.c.l.b16 %v2072
  %v2108 = vunpack.c.l.b16 %v2073
  %v2109 = vunpack.c.l.b16 %v2074
  %v2110 = vunpack.c.l.b16 %v2075
  %v2111 = vunpack.c.l.b16 %v2076
  %v2112 = vunpack.c.l.b16 %v2077
  %v2113 = vpack.c.b16 %v2098, %v2097
  %v2114 = vpack.c.b16 %v2100, %v2099
  %v2115 = vpack.c.b16 %v2102, %v2101
  %v2116 = vpack.c.b16 %v2104, %v2103
  %v2117 = vpack.c.b16 %v2106, %v2105
  %v2118 = vpack.c.b16 %v2108, %v2107
  %v2119 = vpack.c.b16 %v2110, %v2109
  %v2120 = vpack.c.b16 %v2112, %v2111
  %2129 = vmatprep.subr.bf16.mxu0 0
  %2130 = vmatpush1.bf16.msra.mxu0 %v2120
  %2131 = vmatprep.subr.bf16.mxu0 0
  %2132 = vmatpush1.bf16.msra.mxu0 %v2119
  %2133 = vmatprep.subr.bf16.mxu0 0
  %2134 = vmatpush1.bf16.msra.mxu0 %v2118
  %2135 = vmatprep.subr.bf16.mxu0 0
  %2136 = vmatpush1.bf16.msra.mxu0 %v2117
  %2137 = vmatprep.subr.bf16.mxu0 0
  %2138 = vmatpush1.bf16.msra.mxu0 %v2116
  %2139 = vmatprep.subr.bf16.mxu0 0
  %2140 = vmatpush1.bf16.msra.mxu0 %v2115
  %2141 = vmatprep.subr.bf16.mxu0 0
  %2142 = vmatpush1.bf16.msra.mxu0 %v2114
  %2143 = vmatprep.subr.bf16.mxu0 0
  %2144 = vmatpush1.bf16.msra.mxu0 %v2113
  %2145 = vmatprep.subr.bf16.mxu0 0
  %2146 = vmatpush2.bf16.msra.mxu0 0
  %2147 = vmatprep.subr.bf16.mxu0 0
  %2148 = vmatpush2.bf16.msra.mxu0 0
  %2149 = vmatprep.subr.bf16.mxu0 0
  %2150 = vmatpush2.bf16.msra.mxu0 0
  %2151 = vmatprep.subr.bf16.mxu0 0
  %2152 = vmatpush2.bf16.msra.mxu0 0
  %2153 = vmatprep.subr.bf16.mxu0 0
  %2154 = vmatpush2.bf16.msra.mxu0 0
  %2155 = vmatprep.subr.bf16.mxu0 0
  %2156 = vmatpush2.bf16.msra.mxu0 0
  %2157 = vmatprep.subr.bf16.mxu0 0
  %2158 = vmatpush2.bf16.msra.mxu0 0
  %2159 = vmatprep.subr.bf16.mxu0 0
  %2160 = vmatpush2.bf16.msra.mxu0 0
  %2161 = vmatprep.mubr.bf16.mxu0 0
  %2162 = vmatmul.mubr.bf16.gmra.mxu0 %v2079
  %v2163 = vpop.f32.mrf.mxu0
  %v2164 = vadd.f32 0.0, %v2163
  %v2165 = vpop.f32.mrf.mxu0
  %v2166 = vpop.f32.mrf.mxu0
  %v2167 = vpop.f32.mrf.mxu0
  %2168 = vdwg.mxu0
  %v2169 = vadd.f32 %v2060, %v2164
  %v2170 = vmax.f32 %v2169, 0.0
  %v2171 = vld [vmem:[#allocation2 + $0x28] sm:$0x3]
  %v2172 = vpack.c.bf16 %v1817, %v1817
  %v2173 = vld [vmem:[%s323] sm:$0xf]
  %v2174 = vld [vmem:[%s323 + $0x4] sm:$0xf]
  %v2175 = vld [vmem:[%s323 + $0x8] sm:$0xf]
  %v2176 = vld [vmem:[%s323 + $0xc] sm:$0xf]
  %v2177 = vld [vmem:[%s323 + $0x10] sm:$0xf]
  %v2178 = vld [vmem:[%s323 + $0x14] sm:$0xf]
  %v2179 = vld [vmem:[%s323 + $0x18] sm:$0xf]
  %v2180 = vld [vmem:[%s323 + $0x1c] sm:$0xf]
  %v2181 = vld [vmem:[%s323 + $0x20] sm:$0xf]
  %v2182 = vld [vmem:[%s323 + $0x24] sm:$0xf]
  %v2183 = vld [vmem:[%s323 + $0x28] sm:$0xf]
  %v2184 = vld [vmem:[%s323 + $0x2c] sm:$0xf]
  %v2185 = vld [vmem:[%s323 + $0x30] sm:$0xf]
  %v2186 = vld [vmem:[%s323 + $0x34] sm:$0xf]
  %v2187 = vld [vmem:[%s323 + $0x38] sm:$0xf]
  %v2188 = vld [vmem:[%s323 + $0x3c] sm:$0xf]
  %v2190 = vrot.slane %v2172, 3
  %v2208 = vunpack.c.l.b16 %v2173
  %v2209 = vunpack.c.l.b16 %v2174
  %v2210 = vunpack.c.l.b16 %v2175
  %v2211 = vunpack.c.l.b16 %v2176
  %v2212 = vunpack.c.l.b16 %v2177
  %v2213 = vunpack.c.l.b16 %v2178
  %v2214 = vunpack.c.l.b16 %v2179
  %v2215 = vunpack.c.l.b16 %v2180
  %v2216 = vunpack.c.l.b16 %v2181
  %v2217 = vunpack.c.l.b16 %v2182
  %v2218 = vunpack.c.l.b16 %v2183
  %v2219 = vunpack.c.l.b16 %v2184
  %v2220 = vunpack.c.l.b16 %v2185
  %v2221 = vunpack.c.l.b16 %v2186
  %v2222 = vunpack.c.l.b16 %v2187
  %v2223 = vunpack.c.l.b16 %v2188
  %v2224 = vpack.c.b16 %v2209, %v2208
  %v2225 = vpack.c.b16 %v2211, %v2210
  %v2226 = vpack.c.b16 %v2213, %v2212
  %v2227 = vpack.c.b16 %v2215, %v2214
  %v2228 = vpack.c.b16 %v2217, %v2216
  %v2229 = vpack.c.b16 %v2219, %v2218
  %v2230 = vpack.c.b16 %v2221, %v2220
  %v2231 = vpack.c.b16 %v2223, %v2222
  %2240 = vmatprep.subr.bf16.mxu0 0
  %2241 = vmatpush1.bf16.msra.mxu0 %v2231
  %2242 = vmatprep.subr.bf16.mxu0 0
  %2243 = vmatpush1.bf16.msra.mxu0 %v2230
  %2244 = vmatprep.subr.bf16.mxu0 0
  %2245 = vmatpush1.bf16.msra.mxu0 %v2229
  %2246 = vmatprep.subr.bf16.mxu0 0
  %2247 = vmatpush1.bf16.msra.mxu0 %v2228
  %2248 = vmatprep.subr.bf16.mxu0 0
  %2249 = vmatpush1.bf16.msra.mxu0 %v2227
  %2250 = vmatprep.subr.bf16.mxu0 0
  %2251 = vmatpush1.bf16.msra.mxu0 %v2226
  %2252 = vmatprep.subr.bf16.mxu0 0
  %2253 = vmatpush1.bf16.msra.mxu0 %v2225
  %2254 = vmatprep.subr.bf16.mxu0 0
  %2255 = vmatpush1.bf16.msra.mxu0 %v2224
  %2256 = vmatprep.subr.bf16.mxu0 0
  %2257 = vmatpush2.bf16.msra.mxu0 0
  %2258 = vmatprep.subr.bf16.mxu0 0
  %2259 = vmatpush2.bf16.msra.mxu0 0
  %2260 = vmatprep.subr.bf16.mxu0 0
  %2261 = vmatpush2.bf16.msra.mxu0 0
  %2262 = vmatprep.subr.bf16.mxu0 0
  %2263 = vmatpush2.bf16.msra.mxu0 0
  %2264 = vmatprep.subr.bf16.mxu0 0
  %2265 = vmatpush2.bf16.msra.mxu0 0
  %2266 = vmatprep.subr.bf16.mxu0 0
  %2267 = vmatpush2.bf16.msra.mxu0 0
  %2268 = vmatprep.subr.bf16.mxu0 0
  %2269 = vmatpush2.bf16.msra.mxu0 0
  %2270 = vmatprep.subr.bf16.mxu0 0
  %2271 = vmatpush2.bf16.msra.mxu0 0
  %2272 = vmatprep.mubr.bf16.mxu0 0
  %2273 = vmatmul.mubr.bf16.gmra.mxu0 %v2190
  %v2274 = vpop.f32.mrf.mxu0
  %v2275 = vadd.f32 0.0, %v2274
  %v2276 = vpop.f32.mrf.mxu0
  %v2277 = vpop.f32.mrf.mxu0
  %v2278 = vpop.f32.mrf.mxu0
  %2279 = vdwg.mxu0
  %v2280 = vadd.f32 %v2171, %v2275
  %v2281 = vmax.f32 %v2280, 0.0
  %v2282 = vld [vmem:[#allocation2 + $0x30] sm:$0x3]
  %v2283 = vpack.c.bf16 %v1931, %v1931
  %v2284 = vld [vmem:[%s431] sm:$0xf]
  %v2285 = vld [vmem:[%s431 + $0x4] sm:$0xf]
  %v2286 = vld [vmem:[%s431 + $0x8] sm:$0xf]
  %v2287 = vld [vmem:[%s431 + $0xc] sm:$0xf]
  %v2288 = vld [vmem:[%s431 + $0x10] sm:$0xf]
  %v2289 = vld [vmem:[%s431 + $0x14] sm:$0xf]
  %v2290 = vld [vmem:[%s431 + $0x18] sm:$0xf]
  %v2291 = vld [vmem:[%s431 + $0x1c] sm:$0xf]
  %v2292 = vld [vmem:[%s431 + $0x20] sm:$0xf]
  %v2293 = vld [vmem:[%s431 + $0x24] sm:$0xf]
  %v2294 = vld [vmem:[%s431 + $0x28] sm:$0xf]
  %v2295 = vld [vmem:[%s431 + $0x2c] sm:$0xf]
  %v2296 = vld [vmem:[%s431 + $0x30] sm:$0xf]
  %v2297 = vld [vmem:[%s431 + $0x34] sm:$0xf]
  %v2298 = vld [vmem:[%s431 + $0x38] sm:$0xf]
  %v2299 = vld [vmem:[%s431 + $0x3c] sm:$0xf]
  %v2301 = vrot.slane %v2283, 3
  %v2319 = vunpack.c.l.b16 %v2284
  %v2320 = vunpack.c.l.b16 %v2285
  %v2321 = vunpack.c.l.b16 %v2286
  %v2322 = vunpack.c.l.b16 %v2287
  %v2323 = vunpack.c.l.b16 %v2288
  %v2324 = vunpack.c.l.b16 %v2289
  %v2325 = vunpack.c.l.b16 %v2290
  %v2326 = vunpack.c.l.b16 %v2291
  %v2327 = vunpack.c.l.b16 %v2292
  %v2328 = vunpack.c.l.b16 %v2293
  %v2329 = vunpack.c.l.b16 %v2294
  %v2330 = vunpack.c.l.b16 %v2295
  %v2331 = vunpack.c.l.b16 %v2296
  %v2332 = vunpack.c.l.b16 %v2297
  %v2333 = vunpack.c.l.b16 %v2298
  %v2334 = vunpack.c.l.b16 %v2299
  %v2335 = vpack.c.b16 %v2320, %v2319
  %v2336 = vpack.c.b16 %v2322, %v2321
  %v2337 = vpack.c.b16 %v2324, %v2323
  %v2338 = vpack.c.b16 %v2326, %v2325
  %v2339 = vpack.c.b16 %v2328, %v2327
  %v2340 = vpack.c.b16 %v2330, %v2329
  %v2341 = vpack.c.b16 %v2332, %v2331
  %v2342 = vpack.c.b16 %v2334, %v2333
  %2351 = vmatprep.subr.bf16.mxu0 0
  %2352 = vmatpush1.bf16.msra.mxu0 %v2342
  %2353 = vmatprep.subr.bf16.mxu0 0
  %2354 = vmatpush1.bf16.msra.mxu0 %v2341
  %2355 = vmatprep.subr.bf16.mxu0 0
  %2356 = vmatpush1.bf16.msra.mxu0 %v2340
  %2357 = vmatprep.subr.bf16.mxu0 0
  %2358 = vmatpush1.bf16.msra.mxu0 %v2339
  %2359 = vmatprep.subr.bf16.mxu0 0
  %2360 = vmatpush1.bf16.msra.mxu0 %v2338
  %2361 = vmatprep.subr.bf16.mxu0 0
  %2362 = vmatpush1.bf16.msra.mxu0 %v2337
  %2363 = vmatprep.subr.bf16.mxu0 0
  %2364 = vmatpush1.bf16.msra.mxu0 %v2336
  %2365 = vmatprep.subr.bf16.mxu0 0
  %2366 = vmatpush1.bf16.msra.mxu0 %v2335
  %2367 = vmatprep.subr.bf16.mxu0 0
  %2368 = vmatpush2.bf16.msra.mxu0 0
  %2369 = vmatprep.subr.bf16.mxu0 0
  %2370 = vmatpush2.bf16.msra.mxu0 0
  %2371 = vmatprep.subr.bf16.mxu0 0
  %2372 = vmatpush2.bf16.msra.mxu0 0
  %2373 = vmatprep.subr.bf16.mxu0 0
  %2374 = vmatpush2.bf16.msra.mxu0 0
  %2375 = vmatprep.subr.bf16.mxu0 0
  %2376 = vmatpush2.bf16.msra.mxu0 0
  %2377 = vmatprep.subr.bf16.mxu0 0
  %2378 = vmatpush2.bf16.msra.mxu0 0
  %2379 = vmatprep.subr.bf16.mxu0 0
  %2380 = vmatpush2.bf16.msra.mxu0 0
  %2381 = vmatprep.subr.bf16.mxu0 0
  %2382 = vmatpush2.bf16.msra.mxu0 0
  %2383 = vmatprep.mubr.bf16.mxu0 0
  %2384 = vmatmul.mubr.bf16.gmra.mxu0 %v2301
  %v2385 = vpop.f32.mrf.mxu0
  %v2386 = vadd.f32 0.0, %v2385
  %v2387 = vpop.f32.mrf.mxu0
  %v2388 = vpop.f32.mrf.mxu0
  %v2389 = vpop.f32.mrf.mxu0
  %2390 = vdwg.mxu0
  %v2391 = vadd.f32 %v2282, %v2386
  %v2392 = vmax.f32 %v2391, 0.0
  %v2393 = vld [vmem:[#allocation2 + $0x38] sm:$0x3]
  %v2394 = vpack.c.bf16 %v2045, %v2045
  %v2395 = vld [vmem:[%s539] sm:$0xf]
  %v2396 = vld [vmem:[%s539 + $0x4] sm:$0xf]
  %v2397 = vld [vmem:[%s539 + $0x8] sm:$0xf]
  %v2398 = vld [vmem:[%s539 + $0xc] sm:$0xf]
  %v2399 = vld [vmem:[%s539 + $0x10] sm:$0xf]
  %v2400 = vld [vmem:[%s539 + $0x14] sm:$0xf]
  %v2401 = vld [vmem:[%s539 + $0x18] sm:$0xf]
  %v2402 = vld [vmem:[%s539 + $0x1c] sm:$0xf]
  %v2403 = vld [vmem:[%s539 + $0x20] sm:$0xf]
  %v2404 = vld [vmem:[%s539 + $0x24] sm:$0xf]
  %v2405 = vld [vmem:[%s539 + $0x28] sm:$0xf]
  %v2406 = vld [vmem:[%s539 + $0x2c] sm:$0xf]
  %v2407 = vld [vmem:[%s539 + $0x30] sm:$0xf]
  %v2408 = vld [vmem:[%s539 + $0x34] sm:$0xf]
  %v2409 = vld [vmem:[%s539 + $0x38] sm:$0xf]
  %v2410 = vld [vmem:[%s539 + $0x3c] sm:$0xf]
  %v2412 = vrot.slane %v2394, 3
  %v2430 = vunpack.c.l.b16 %v2395
  %v2431 = vunpack.c.l.b16 %v2396
  %v2432 = vunpack.c.l.b16 %v2397
  %v2433 = vunpack.c.l.b16 %v2398
  %v2434 = vunpack.c.l.b16 %v2399
  %v2435 = vunpack.c.l.b16 %v2400
  %v2436 = vunpack.c.l.b16 %v2401
  %v2437 = vunpack.c.l.b16 %v2402
  %v2438 = vunpack.c.l.b16 %v2403
  %v2439 = vunpack.c.l.b16 %v2404
  %v2440 = vunpack.c.l.b16 %v2405
  %v2441 = vunpack.c.l.b16 %v2406
  %v2442 = vunpack.c.l.b16 %v2407
  %v2443 = vunpack.c.l.b16 %v2408
  %v2444 = vunpack.c.l.b16 %v2409
  %v2445 = vunpack.c.l.b16 %v2410
  %v2446 = vpack.c.b16 %v2431, %v2430
  %v2447 = vpack.c.b16 %v2433, %v2432
  %v2448 = vpack.c.b16 %v2435, %v2434
  %v2449 = vpack.c.b16 %v2437, %v2436
  %v2450 = vpack.c.b16 %v2439, %v2438
  %v2451 = vpack.c.b16 %v2441, %v2440
  %v2452 = vpack.c.b16 %v2443, %v2442
  %v2453 = vpack.c.b16 %v2445, %v2444
  %2462 = vmatprep.subr.bf16.mxu0 0
  %2463 = vmatpush1.bf16.msra.mxu0 %v2453
  %2464 = vmatprep.subr.bf16.mxu0 0
  %2465 = vmatpush1.bf16.msra.mxu0 %v2452
  %2466 = vmatprep.subr.bf16.mxu0 0
  %2467 = vmatpush1.bf16.msra.mxu0 %v2451
  %2468 = vmatprep.subr.bf16.mxu0 0
  %2469 = vmatpush1.bf16.msra.mxu0 %v2450
  %2470 = vmatprep.subr.bf16.mxu0 0
  %2471 = vmatpush1.bf16.msra.mxu0 %v2449
  %2472 = vmatprep.subr.bf16.mxu0 0
  %2473 = vmatpush1.bf16.msra.mxu0 %v2448
  %2474 = vmatprep.subr.bf16.mxu0 0
  %2475 = vmatpush1.bf16.msra.mxu0 %v2447
  %2476 = vmatprep.subr.bf16.mxu0 0
  %2477 = vmatpush1.bf16.msra.mxu0 %v2446
  %2478 = vmatprep.subr.bf16.mxu0 0
  %2479 = vmatpush2.bf16.msra.mxu0 0
  %2480 = vmatprep.subr.bf16.mxu0 0
  %2481 = vmatpush2.bf16.msra.mxu0 0
  %2482 = vmatprep.subr.bf16.mxu0 0
  %2483 = vmatpush2.bf16.msra.mxu0 0
  %2484 = vmatprep.subr.bf16.mxu0 0
  %2485 = vmatpush2.bf16.msra.mxu0 0
  %2486 = vmatprep.subr.bf16.mxu0 0
  %2487 = vmatpush2.bf16.msra.mxu0 0
  %2488 = vmatprep.subr.bf16.mxu0 0
  %2489 = vmatpush2.bf16.msra.mxu0 0
  %2490 = vmatprep.subr.bf16.mxu0 0
  %2491 = vmatpush2.bf16.msra.mxu0 0
  %2492 = vmatprep.subr.bf16.mxu0 0
  %2493 = vmatpush2.bf16.msra.mxu0 0
  %2494 = vmatprep.mubr.bf16.mxu0 0
  %2495 = vmatmul.mubr.bf16.gmra.mxu0 %v2412
  %v2496 = vpop.f32.mrf.mxu0
  %v2497 = vadd.f32 0.0, %v2496
  %v2498 = vpop.f32.mrf.mxu0
  %v2499 = vpop.f32.mrf.mxu0
  %v2500 = vpop.f32.mrf.mxu0
  %2501 = vdwg.mxu0
  %v2502 = vadd.f32 %v2393, %v2497
  %v2503 = vtanh.pop %v2502
  %v2505 = vrot.slane %v2281, 6
  %v2508 = vrot.slane %v2392, 4
  %v2511 = vrot.slane %v2503, 2
  %v2513 = vsel %vm655, %v2170, %v2505
  %v2514 = vsel %vm657, %v2513, %v2508
  %v2515 = vsel %vm659, %v2514, %v2511
  %s2516 = scalar_lea.vmem %s4, 32
  %2517 = vst [vmem:[%s2516] sm:$0xff] %v2515
  %v2518 = vld [vmem:[#allocation2 + $0x20] sm:$0xc]
  %v2519 = vpack.c.bf16 %v2170, %v2170
  %v2520 = vld [vmem:[%s3] sm:$0xf]
  %v2521 = vld [vmem:[%s3 + $0x4] sm:$0xf]
  %v2522 = vld [vmem:[%s3 + $0x8] sm:$0xf]
  %v2523 = vld [vmem:[%s3 + $0xc] sm:$0xf]
  %v2524 = vld [vmem:[%s3 + $0x10] sm:$0xf]
  %v2525 = vld [vmem:[%s3 + $0x14] sm:$0xf]
  %v2526 = vld [vmem:[%s3 + $0x18] sm:$0xf]
  %v2527 = vld [vmem:[%s3 + $0x1c] sm:$0xf]
  %v2528 = vld [vmem:[%s3 + $0x20] sm:$0xf]
  %v2529 = vld [vmem:[%s3 + $0x24] sm:$0xf]
  %v2530 = vld [vmem:[%s3 + $0x28] sm:$0xf]
  %v2531 = vld [vmem:[%s3 + $0x2c] sm:$0xf]
  %v2532 = vld [vmem:[%s3 + $0x30] sm:$0xf]
  %v2533 = vld [vmem:[%s3 + $0x34] sm:$0xf]
  %v2534 = vld [vmem:[%s3 + $0x38] sm:$0xf]
  %v2535 = vld [vmem:[%s3 + $0x3c] sm:$0xf]
  %v2552 = vunpack.c.l.b16 %v2520
  %v2553 = vunpack.c.l.b16 %v2521
  %v2554 = vunpack.c.l.b16 %v2522
  %v2555 = vunpack.c.l.b16 %v2523
  %v2556 = vunpack.c.l.b16 %v2524
  %v2557 = vunpack.c.l.b16 %v2525
  %v2558 = vunpack.c.l.b16 %v2526
  %v2559 = vunpack.c.l.b16 %v2527
  %v2560 = vunpack.c.l.b16 %v2528
  %v2561 = vunpack.c.l.b16 %v2529
  %v2562 = vunpack.c.l.b16 %v2530
  %v2563 = vunpack.c.l.b16 %v2531
  %v2564 = vunpack.c.l.b16 %v2532
  %v2565 = vunpack.c.l.b16 %v2533
  %v2566 = vunpack.c.l.b16 %v2534
  %v2567 = vunpack.c.l.b16 %v2535
  %v2568 = vpack.c.b16 %v2553, %v2552
  %v2569 = vpack.c.b16 %v2555, %v2554
  %v2570 = vpack.c.b16 %v2557, %v2556
  %v2571 = vpack.c.b16 %v2559, %v2558
  %v2572 = vpack.c.b16 %v2561, %v2560
  %v2573 = vpack.c.b16 %v2563, %v2562
  %v2574 = vpack.c.b16 %v2565, %v2564
  %v2575 = vpack.c.b16 %v2567, %v2566
  %2584 = vmatprep.subr.bf16.mxu0 0
  %2585 = vmatpush1.bf16.msra.mxu0 %v2575
  %2586 = vmatprep.subr.bf16.mxu0 0
  %2587 = vmatpush1.bf16.msra.mxu0 %v2574
  %2588 = vmatprep.subr.bf16.mxu0 0
  %2589 = vmatpush1.bf16.msra.mxu0 %v2573
  %2590 = vmatprep.subr.bf16.mxu0 0
  %2591 = vmatpush1.bf16.msra.mxu0 %v2572
  %2592 = vmatprep.subr.bf16.mxu0 0
  %2593 = vmatpush1.bf16.msra.mxu0 %v2571
  %2594 = vmatprep.subr.bf16.mxu0 0
  %2595 = vmatpush1.bf16.msra.mxu0 %v2570
  %2596 = vmatprep.subr.bf16.mxu0 0
  %2597 = vmatpush1.bf16.msra.mxu0 %v2569
  %2598 = vmatprep.subr.bf16.mxu0 0
  %2599 = vmatpush1.bf16.msra.mxu0 %v2568
  %2600 = vmatprep.subr.bf16.mxu0 0
  %2601 = vmatpush2.bf16.msra.mxu0 0
  %2602 = vmatprep.subr.bf16.mxu0 0
  %2603 = vmatpush2.bf16.msra.mxu0 0
  %2604 = vmatprep.subr.bf16.mxu0 0
  %2605 = vmatpush2.bf16.msra.mxu0 0
  %2606 = vmatprep.subr.bf16.mxu0 0
  %2607 = vmatpush2.bf16.msra.mxu0 0
  %2608 = vmatprep.subr.bf16.mxu0 0
  %2609 = vmatpush2.bf16.msra.mxu0 0
  %2610 = vmatprep.subr.bf16.mxu0 0
  %2611 = vmatpush2.bf16.msra.mxu0 0
  %2612 = vmatprep.subr.bf16.mxu0 0
  %2613 = vmatpush2.bf16.msra.mxu0 0
  %2614 = vmatprep.subr.bf16.mxu0 0
  %2615 = vmatpush2.bf16.msra.mxu0 0
  %2616 = vmatprep.mubr.bf16.mxu0 0
  %2617 = vmatmul.mubr.bf16.gmra.mxu0 %v2519
  %v2618 = vpop.f32.mrf.mxu0
  %v2619 = vadd.f32 0.0, %v2618
  %v2620 = vpop.f32.mrf.mxu0
  %v2621 = vpop.f32.mrf.mxu0
  %v2622 = vpop.f32.mrf.mxu0
  %2623 = vdwg.mxu0
  %v2625 = vrot.slane %v2619, 6
  %v2627 = vadd.f32 %v2518, %v2625
  %v2628 = vmax.f32 %v2627, 0.0
  %v2629 = vld [vmem:[#allocation2 + $0x28] sm:$0xc]
  %v2630 = vpack.c.bf16 %v2281, %v2281
  %v2631 = vld [vmem:[%s323] sm:$0xf]
  %v2632 = vld [vmem:[%s323 + $0x4] sm:$0xf]
  %v2633 = vld [vmem:[%s323 + $0x8] sm:$0xf]
  %v2634 = vld [vmem:[%s323 + $0xc] sm:$0xf]
  %v2635 = vld [vmem:[%s323 + $0x10] sm:$0xf]
  %v2636 = vld [vmem:[%s323 + $0x14] sm:$0xf]
  %v2637 = vld [vmem:[%s323 + $0x18] sm:$0xf]
  %v2638 = vld [vmem:[%s323 + $0x1c] sm:$0xf]
  %v2639 = vld [vmem:[%s323 + $0x20] sm:$0xf]
  %v2640 = vld [vmem:[%s323 + $0x24] sm:$0xf]
  %v2641 = vld [vmem:[%s323 + $0x28] sm:$0xf]
  %v2642 = vld [vmem:[%s323 + $0x2c] sm:$0xf]
  %v2643 = vld [vmem:[%s323 + $0x30] sm:$0xf]
  %v2644 = vld [vmem:[%s323 + $0x34] sm:$0xf]
  %v2645 = vld [vmem:[%s323 + $0x38] sm:$0xf]
  %v2646 = vld [vmem:[%s323 + $0x3c] sm:$0xf]
  %v2663 = vunpack.c.l.b16 %v2631
  %v2664 = vunpack.c.l.b16 %v2632
  %v2665 = vunpack.c.l.b16 %v2633
  %v2666 = vunpack.c.l.b16 %v2634
  %v2667 = vunpack.c.l.b16 %v2635
  %v2668 = vunpack.c.l.b16 %v2636
  %v2669 = vunpack.c.l.b16 %v2637
  %v2670 = vunpack.c.l.b16 %v2638
  %v2671 = vunpack.c.l.b16 %v2639
  %v2672 = vunpack.c.l.b16 %v2640
  %v2673 = vunpack.c.l.b16 %v2641
  %v2674 = vunpack.c.l.b16 %v2642
  %v2675 = vunpack.c.l.b16 %v2643
  %v2676 = vunpack.c.l.b16 %v2644
  %v2677 = vunpack.c.l.b16 %v2645
  %v2678 = vunpack.c.l.b16 %v2646
  %v2679 = vpack.c.b16 %v2664, %v2663
  %v2680 = vpack.c.b16 %v2666, %v2665
  %v2681 = vpack.c.b16 %v2668, %v2667
  %v2682 = vpack.c.b16 %v2670, %v2669
  %v2683 = vpack.c.b16 %v2672, %v2671
  %v2684 = vpack.c.b16 %v2674, %v2673
  %v2685 = vpack.c.b16 %v2676, %v2675
  %v2686 = vpack.c.b16 %v2678, %v2677
  %2695 = vmatprep.subr.bf16.mxu0 0
  %2696 = vmatpush1.bf16.msra.mxu0 %v2686
  %2697 = vmatprep.subr.bf16.mxu0 0
  %2698 = vmatpush1.bf16.msra.mxu0 %v2685
  %2699 = vmatprep.subr.bf16.mxu0 0
  %2700 = vmatpush1.bf16.msra.mxu0 %v2684
  %2701 = vmatprep.subr.bf16.mxu0 0
  %2702 = vmatpush1.bf16.msra.mxu0 %v2683
  %2703 = vmatprep.subr.bf16.mxu0 0
  %2704 = vmatpush1.bf16.msra.mxu0 %v2682
  %2705 = vmatprep.subr.bf16.mxu0 0
  %2706 = vmatpush1.bf16.msra.mxu0 %v2681
  %2707 = vmatprep.subr.bf16.mxu0 0
  %2708 = vmatpush1.bf16.msra.mxu0 %v2680
  %2709 = vmatprep.subr.bf16.mxu0 0
  %2710 = vmatpush1.bf16.msra.mxu0 %v2679
  %2711 = vmatprep.subr.bf16.mxu0 0
  %2712 = vmatpush2.bf16.msra.mxu0 0
  %2713 = vmatprep.subr.bf16.mxu0 0
  %2714 = vmatpush2.bf16.msra.mxu0 0
  %2715 = vmatprep.subr.bf16.mxu0 0
  %2716 = vmatpush2.bf16.msra.mxu0 0
  %2717 = vmatprep.subr.bf16.mxu0 0
  %2718 = vmatpush2.bf16.msra.mxu0 0
  %2719 = vmatprep.subr.bf16.mxu0 0
  %2720 = vmatpush2.bf16.msra.mxu0 0
  %2721 = vmatprep.subr.bf16.mxu0 0
  %2722 = vmatpush2.bf16.msra.mxu0 0
  %2723 = vmatprep.subr.bf16.mxu0 0
  %2724 = vmatpush2.bf16.msra.mxu0 0
  %2725 = vmatprep.subr.bf16.mxu0 0
  %2726 = vmatpush2.bf16.msra.mxu0 0
  %2727 = vmatprep.mubr.bf16.mxu0 0
  %2728 = vmatmul.mubr.bf16.gmra.mxu0 %v2630
  %v2729 = vpop.f32.mrf.mxu0
  %v2730 = vadd.f32 0.0, %v2729
  %v2731 = vpop.f32.mrf.mxu0
  %v2732 = vpop.f32.mrf.mxu0
  %v2733 = vpop.f32.mrf.mxu0
  %2734 = vdwg.mxu0
  %v2736 = vrot.slane %v2730, 6
  %v2738 = vadd.f32 %v2629, %v2736
  %v2739 = vmax.f32 %v2738, 0.0
  %v2740 = vld [vmem:[#allocation2 + $0x30] sm:$0xc]
  %v2741 = vpack.c.bf16 %v2392, %v2392
  %v2742 = vld [vmem:[%s431] sm:$0xf]
  %v2743 = vld [vmem:[%s431 + $0x4] sm:$0xf]
  %v2744 = vld [vmem:[%s431 + $0x8] sm:$0xf]
  %v2745 = vld [vmem:[%s431 + $0xc] sm:$0xf]
  %v2746 = vld [vmem:[%s431 + $0x10] sm:$0xf]
  %v2747 = vld [vmem:[%s431 + $0x14] sm:$0xf]
  %v2748 = vld [vmem:[%s431 + $0x18] sm:$0xf]
  %v2749 = vld [vmem:[%s431 + $0x1c] sm:$0xf]
  %v2750 = vld [vmem:[%s431 + $0x20] sm:$0xf]
  %v2751 = vld [vmem:[%s431 + $0x24] sm:$0xf]
  %v2752 = vld [vmem:[%s431 + $0x28] sm:$0xf]
  %v2753 = vld [vmem:[%s431 + $0x2c] sm:$0xf]
  %v2754 = vld [vmem:[%s431 + $0x30] sm:$0xf]
  %v2755 = vld [vmem:[%s431 + $0x34] sm:$0xf]
  %v2756 = vld [vmem:[%s431 + $0x38] sm:$0xf]
  %v2757 = vld [vmem:[%s431 + $0x3c] sm:$0xf]
  %v2774 = vunpack.c.l.b16 %v2742
  %v2775 = vunpack.c.l.b16 %v2743
  %v2776 = vunpack.c.l.b16 %v2744
  %v2777 = vunpack.c.l.b16 %v2745
  %v2778 = vunpack.c.l.b16 %v2746
  %v2779 = vunpack.c.l.b16 %v2747
  %v2780 = vunpack.c.l.b16 %v2748
  %v2781 = vunpack.c.l.b16 %v2749
  %v2782 = vunpack.c.l.b16 %v2750
  %v2783 = vunpack.c.l.b16 %v2751
  %v2784 = vunpack.c.l.b16 %v2752
  %v2785 = vunpack.c.l.b16 %v2753
  %v2786 = vunpack.c.l.b16 %v2754
  %v2787 = vunpack.c.l.b16 %v2755
  %v2788 = vunpack.c.l.b16 %v2756
  %v2789 = vunpack.c.l.b16 %v2757
  %v2790 = vpack.c.b16 %v2775, %v2774
  %v2791 = vpack.c.b16 %v2777, %v2776
  %v2792 = vpack.c.b16 %v2779, %v2778
  %v2793 = vpack.c.b16 %v2781, %v2780
  %v2794 = vpack.c.b16 %v2783, %v2782
  %v2795 = vpack.c.b16 %v2785, %v2784
  %v2796 = vpack.c.b16 %v2787, %v2786
  %v2797 = vpack.c.b16 %v2789, %v2788
  %2806 = vmatprep.subr.bf16.mxu0 0
  %2807 = vmatpush1.bf16.msra.mxu0 %v2797
  %2808 = vmatprep.subr.bf16.mxu0 0
  %2809 = vmatpush1.bf16.msra.mxu0 %v2796
  %2810 = vmatprep.subr.bf16.mxu0 0
  %2811 = vmatpush1.bf16.msra.mxu0 %v2795
  %2812 = vmatprep.subr.bf16.mxu0 0
  %2813 = vmatpush1.bf16.msra.mxu0 %v2794
  %2814 = vmatprep.subr.bf16.mxu0 0
  %2815 = vmatpush1.bf16.msra.mxu0 %v2793
  %2816 = vmatprep.subr.bf16.mxu0 0
  %2817 = vmatpush1.bf16.msra.mxu0 %v2792
  %2818 = vmatprep.subr.bf16.mxu0 0
  %2819 = vmatpush1.bf16.msra.mxu0 %v2791
  %2820 = vmatprep.subr.bf16.mxu0 0
  %2821 = vmatpush1.bf16.msra.mxu0 %v2790
  %2822 = vmatprep.subr.bf16.mxu0 0
  %2823 = vmatpush2.bf16.msra.mxu0 0
  %2824 = vmatprep.subr.bf16.mxu0 0
  %2825 = vmatpush2.bf16.msra.mxu0 0
  %2826 = vmatprep.subr.bf16.mxu0 0
  %2827 = vmatpush2.bf16.msra.mxu0 0
  %2828 = vmatprep.subr.bf16.mxu0 0
  %2829 = vmatpush2.bf16.msra.mxu0 0
  %2830 = vmatprep.subr.bf16.mxu0 0
  %2831 = vmatpush2.bf16.msra.mxu0 0
  %2832 = vmatprep.subr.bf16.mxu0 0
  %2833 = vmatpush2.bf16.msra.mxu0 0
  %2834 = vmatprep.subr.bf16.mxu0 0
  %2835 = vmatpush2.bf16.msra.mxu0 0
  %2836 = vmatprep.subr.bf16.mxu0 0
  %2837 = vmatpush2.bf16.msra.mxu0 0
  %2838 = vmatprep.mubr.bf16.mxu0 0
  %2839 = vmatmul.mubr.bf16.gmra.mxu0 %v2741
  %v2840 = vpop.f32.mrf.mxu0
  %v2841 = vadd.f32 0.0, %v2840
  %v2842 = vpop.f32.mrf.mxu0
  %v2843 = vpop.f32.mrf.mxu0
  %v2844 = vpop.f32.mrf.mxu0
  %2845 = vdwg.mxu0
  %v2847 = vrot.slane %v2841, 6
  %v2849 = vadd.f32 %v2740, %v2847
  %v2850 = vmax.f32 %v2849, 0.0
  %v2851 = vld [vmem:[#allocation2 + $0x38] sm:$0xc]
  %v2852 = vpack.c.bf16 %v2503, %v2503
  %v2853 = vld [vmem:[%s539] sm:$0xf]
  %v2854 = vld [vmem:[%s539 + $0x4] sm:$0xf]
  %v2855 = vld [vmem:[%s539 + $0x8] sm:$0xf]
  %v2856 = vld [vmem:[%s539 + $0xc] sm:$0xf]
  %v2857 = vld [vmem:[%s539 + $0x10] sm:$0xf]
  %v2858 = vld [vmem:[%s539 + $0x14] sm:$0xf]
  %v2859 = vld [vmem:[%s539 + $0x18] sm:$0xf]
  %v2860 = vld [vmem:[%s539 + $0x1c] sm:$0xf]
  %v2861 = vld [vmem:[%s539 + $0x20] sm:$0xf]
  %v2862 = vld [vmem:[%s539 + $0x24] sm:$0xf]
  %v2863 = vld [vmem:[%s539 + $0x28] sm:$0xf]
  %v2864 = vld [vmem:[%s539 + $0x2c] sm:$0xf]
  %v2865 = vld [vmem:[%s539 + $0x30] sm:$0xf]
  %v2866 = vld [vmem:[%s539 + $0x34] sm:$0xf]
  %v2867 = vld [vmem:[%s539 + $0x38] sm:$0xf]
  %v2868 = vld [vmem:[%s539 + $0x3c] sm:$0xf]
  %v2885 = vunpack.c.l.b16 %v2853
  %v2886 = vunpack.c.l.b16 %v2854
  %v2887 = vunpack.c.l.b16 %v2855
  %v2888 = vunpack.c.l.b16 %v2856
  %v2889 = vunpack.c.l.b16 %v2857
  %v2890 = vunpack.c.l.b16 %v2858
  %v2891 = vunpack.c.l.b16 %v2859
  %v2892 = vunpack.c.l.b16 %v2860
  %v2893 = vunpack.c.l.b16 %v2861
  %v2894 = vunpack.c.l.b16 %v2862
  %v2895 = vunpack.c.l.b16 %v2863
  %v2896 = vunpack.c.l.b16 %v2864
  %v2897 = vunpack.c.l.b16 %v2865
  %v2898 = vunpack.c.l.b16 %v2866
  %v2899 = vunpack.c.l.b16 %v2867
  %v2900 = vunpack.c.l.b16 %v2868
  %v2901 = vpack.c.b16 %v2886, %v2885
  %v2902 = vpack.c.b16 %v2888, %v2887
  %v2903 = vpack.c.b16 %v2890, %v2889
  %v2904 = vpack.c.b16 %v2892, %v2891
  %v2905 = vpack.c.b16 %v2894, %v2893
  %v2906 = vpack.c.b16 %v2896, %v2895
  %v2907 = vpack.c.b16 %v2898, %v2897
  %v2908 = vpack.c.b16 %v2900, %v2899
  %2917 = vmatprep.subr.bf16.mxu0 0
  %2918 = vmatpush1.bf16.msra.mxu0 %v2908
  %2919 = vmatprep.subr.bf16.mxu0 0
  %2920 = vmatpush1.bf16.msra.mxu0 %v2907
  %2921 = vmatprep.subr.bf16.mxu0 0
  %2922 = vmatpush1.bf16.msra.mxu0 %v2906
  %2923 = vmatprep.subr.bf16.mxu0 0
  %2924 = vmatpush1.bf16.msra.mxu0 %v2905
  %2925 = vmatprep.subr.bf16.mxu0 0
  %2926 = vmatpush1.bf16.msra.mxu0 %v2904
  %2927 = vmatprep.subr.bf16.mxu0 0
  %2928 = vmatpush1.bf16.msra.mxu0 %v2903
  %2929 = vmatprep.subr.bf16.mxu0 0
  %2930 = vmatpush1.bf16.msra.mxu0 %v2902
  %2931 = vmatprep.subr.bf16.mxu0 0
  %2932 = vmatpush1.bf16.msra.mxu0 %v2901
  %2933 = vmatprep.subr.bf16.mxu0 0
  %2934 = vmatpush2.bf16.msra.mxu0 0
  %2935 = vmatprep.subr.bf16.mxu0 0
  %2936 = vmatpush2.bf16.msra.mxu0 0
  %2937 = vmatprep.subr.bf16.mxu0 0
  %2938 = vmatpush2.bf16.msra.mxu0 0
  %2939 = vmatprep.subr.bf16.mxu0 0
  %2940 = vmatpush2.bf16.msra.mxu0 0
  %2941 = vmatprep.subr.bf16.mxu0 0
  %2942 = vmatpush2.bf16.msra.mxu0 0
  %2943 = vmatprep.subr.bf16.mxu0 0
  %2944 = vmatpush2.bf16.msra.mxu0 0
  %2945 = vmatprep.subr.bf16.mxu0 0
  %2946 = vmatpush2.bf16.msra.mxu0 0
  %2947 = vmatprep.subr.bf16.mxu0 0
  %2948 = vmatpush2.bf16.msra.mxu0 0
  %2949 = vmatprep.mubr.bf16.mxu0 0
  %2950 = vmatmul.mubr.bf16.gmra.mxu0 %v2852
  %v2951 = vpop.f32.mrf.mxu0
  %v2952 = vadd.f32 0.0, %v2951
  %v2953 = vpop.f32.mrf.mxu0
  %v2954 = vpop.f32.mrf.mxu0
  %v2955 = vpop.f32.mrf.mxu0
  %2956 = vdwg.mxu0
  %v2958 = vrot.slane %v2952, 6
  %v2960 = vadd.f32 %v2851, %v2958
  %v2961 = vtanh.pop %v2960
  %v2963 = vrot.slane %v2628, 2
  %v2966 = vrot.slane %v2850, 6
  %v2969 = vrot.slane %v2961, 4
  %v2971 = vsel %vm655, %v2963, %v2739
  %v2972 = vsel %vm657, %v2971, %v2966
  %v2973 = vsel %vm659, %v2972, %v2969
  %s2974 = scalar_lea.vmem %s4, 40
  %2975 = vst [vmem:[%s2974] sm:$0xff] %v2973
  %v2976 = vld [vmem:[#allocation2 + $0x20] sm:$0x30]
  %v2977 = vpack.c.bf16 %v2628, %v2628
  %v2978 = vld [vmem:[%s3] sm:$0xf]
  %v2979 = vld [vmem:[%s3 + $0x4] sm:$0xf]
  %v2980 = vld [vmem:[%s3 + $0x8] sm:$0xf]
  %v2981 = vld [vmem:[%s3 + $0xc] sm:$0xf]
  %v2982 = vld [vmem:[%s3 + $0x10] sm:$0xf]
  %v2983 = vld [vmem:[%s3 + $0x14] sm:$0xf]
  %v2984 = vld [vmem:[%s3 + $0x18] sm:$0xf]
  %v2985 = vld [vmem:[%s3 + $0x1c] sm:$0xf]
  %v2986 = vld [vmem:[%s3 + $0x20] sm:$0xf]
  %v2987 = vld [vmem:[%s3 + $0x24] sm:$0xf]
  %v2988 = vld [vmem:[%s3 + $0x28] sm:$0xf]
  %v2989 = vld [vmem:[%s3 + $0x2c] sm:$0xf]
  %v2990 = vld [vmem:[%s3 + $0x30] sm:$0xf]
  %v2991 = vld [vmem:[%s3 + $0x34] sm:$0xf]
  %v2992 = vld [vmem:[%s3 + $0x38] sm:$0xf]
  %v2993 = vld [vmem:[%s3 + $0x3c] sm:$0xf]
  %v2995 = vrot.slane %v2977, 1
  %v3013 = vunpack.c.l.b16 %v2978
  %v3014 = vunpack.c.l.b16 %v2979
  %v3015 = vunpack.c.l.b16 %v2980
  %v3016 = vunpack.c.l.b16 %v2981
  %v3017 = vunpack.c.l.b16 %v2982
  %v3018 = vunpack.c.l.b16 %v2983
  %v3019 = vunpack.c.l.b16 %v2984
  %v3020 = vunpack.c.l.b16 %v2985
  %v3021 = vunpack.c.l.b16 %v2986
  %v3022 = vunpack.c.l.b16 %v2987
  %v3023 = vunpack.c.l.b16 %v2988
  %v3024 = vunpack.c.l.b16 %v2989
  %v3025 = vunpack.c.l.b16 %v2990
  %v3026 = vunpack.c.l.b16 %v2991
  %v3027 = vunpack.c.l.b16 %v2992
  %v3028 = vunpack.c.l.b16 %v2993
  %v3029 = vpack.c.b16 %v3014, %v3013
  %v3030 = vpack.c.b16 %v3016, %v3015
  %v3031 = vpack.c.b16 %v3018, %v3017
  %v3032 = vpack.c.b16 %v3020, %v3019
  %v3033 = vpack.c.b16 %v3022, %v3021
  %v3034 = vpack.c.b16 %v3024, %v3023
  %v3035 = vpack.c.b16 %v3026, %v3025
  %v3036 = vpack.c.b16 %v3028, %v3027
  %3045 = vmatprep.subr.bf16.mxu0 0
  %3046 = vmatpush1.bf16.msra.mxu0 %v3036
  %3047 = vmatprep.subr.bf16.mxu0 0
  %3048 = vmatpush1.bf16.msra.mxu0 %v3035
  %3049 = vmatprep.subr.bf16.mxu0 0
  %3050 = vmatpush1.bf16.msra.mxu0 %v3034
  %3051 = vmatprep.subr.bf16.mxu0 0
  %3052 = vmatpush1.bf16.msra.mxu0 %v3033
  %3053 = vmatprep.subr.bf16.mxu0 0
  %3054 = vmatpush1.bf16.msra.mxu0 %v3032
  %3055 = vmatprep.subr.bf16.mxu0 0
  %3056 = vmatpush1.bf16.msra.mxu0 %v3031
  %3057 = vmatprep.subr.bf16.mxu0 0
  %3058 = vmatpush1.bf16.msra.mxu0 %v3030
  %3059 = vmatprep.subr.bf16.mxu0 0
  %3060 = vmatpush1.bf16.msra.mxu0 %v3029
  %3061 = vmatprep.subr.bf16.mxu0 0
  %3062 = vmatpush2.bf16.msra.mxu0 0
  %3063 = vmatprep.subr.bf16.mxu0 0
  %3064 = vmatpush2.bf16.msra.mxu0 0
  %3065 = vmatprep.subr.bf16.mxu0 0
  %3066 = vmatpush2.bf16.msra.mxu0 0
  %3067 = vmatprep.subr.bf16.mxu0 0
  %3068 = vmatpush2.bf16.msra.mxu0 0
  %3069 = vmatprep.subr.bf16.mxu0 0
  %3070 = vmatpush2.bf16.msra.mxu0 0
  %3071 = vmatprep.subr.bf16.mxu0 0
  %3072 = vmatpush2.bf16.msra.mxu0 0
  %3073 = vmatprep.subr.bf16.mxu0 0
  %3074 = vmatpush2.bf16.msra.mxu0 0
  %3075 = vmatprep.subr.bf16.mxu0 0
  %3076 = vmatpush2.bf16.msra.mxu0 0
  %3077 = vmatprep.mubr.bf16.mxu0 0
  %3078 = vmatmul.mubr.bf16.gmra.mxu0 %v2995
  %v3079 = vpop.f32.mrf.mxu0
  %v3080 = vadd.f32 0.0, %v3079
  %v3081 = vpop.f32.mrf.mxu0
  %v3082 = vpop.f32.mrf.mxu0
  %v3083 = vpop.f32.mrf.mxu0
  %3084 = vdwg.mxu0
  %v3086 = vrot.slane %v3080, 4
  %v3088 = vadd.f32 %v2976, %v3086
  %v3089 = vmax.f32 %v3088, 0.0
  %v3090 = vld [vmem:[#allocation2 + $0x28] sm:$0x30]
  %v3091 = vpack.c.bf16 %v2739, %v2739
  %v3092 = vld [vmem:[%s323] sm:$0xf]
  %v3093 = vld [vmem:[%s323 + $0x4] sm:$0xf]
  %v3094 = vld [vmem:[%s323 + $0x8] sm:$0xf]
  %v3095 = vld [vmem:[%s323 + $0xc] sm:$0xf]
  %v3096 = vld [vmem:[%s323 + $0x10] sm:$0xf]
  %v3097 = vld [vmem:[%s323 + $0x14] sm:$0xf]
  %v3098 = vld [vmem:[%s323 + $0x18] sm:$0xf]
  %v3099 = vld [vmem:[%s323 + $0x1c] sm:$0xf]
  %v3100 = vld [vmem:[%s323 + $0x20] sm:$0xf]
  %v3101 = vld [vmem:[%s323 + $0x24] sm:$0xf]
  %v3102 = vld [vmem:[%s323 + $0x28] sm:$0xf]
  %v3103 = vld [vmem:[%s323 + $0x2c] sm:$0xf]
  %v3104 = vld [vmem:[%s323 + $0x30] sm:$0xf]
  %v3105 = vld [vmem:[%s323 + $0x34] sm:$0xf]
  %v3106 = vld [vmem:[%s323 + $0x38] sm:$0xf]
  %v3107 = vld [vmem:[%s323 + $0x3c] sm:$0xf]
  %v3109 = vrot.slane %v3091, 1
  %v3127 = vunpack.c.l.b16 %v3092
  %v3128 = vunpack.c.l.b16 %v3093
  %v3129 = vunpack.c.l.b16 %v3094
  %v3130 = vunpack.c.l.b16 %v3095
  %v3131 = vunpack.c.l.b16 %v3096
  %v3132 = vunpack.c.l.b16 %v3097
  %v3133 = vunpack.c.l.b16 %v3098
  %v3134 = vunpack.c.l.b16 %v3099
  %v3135 = vunpack.c.l.b16 %v3100
  %v3136 = vunpack.c.l.b16 %v3101
  %v3137 = vunpack.c.l.b16 %v3102
  %v3138 = vunpack.c.l.b16 %v3103
  %v3139 = vunpack.c.l.b16 %v3104
  %v3140 = vunpack.c.l.b16 %v3105
  %v3141 = vunpack.c.l.b16 %v3106
  %v3142 = vunpack.c.l.b16 %v3107
  %v3143 = vpack.c.b16 %v3128, %v3127
  %v3144 = vpack.c.b16 %v3130, %v3129
  %v3145 = vpack.c.b16 %v3132, %v3131
  %v3146 = vpack.c.b16 %v3134, %v3133
  %v3147 = vpack.c.b16 %v3136, %v3135
  %v3148 = vpack.c.b16 %v3138, %v3137
  %v3149 = vpack.c.b16 %v3140, %v3139
  %v3150 = vpack.c.b16 %v3142, %v3141
  %3159 = vmatprep.subr.bf16.mxu0 0
  %3160 = vmatpush1.bf16.msra.mxu0 %v3150
  %3161 = vmatprep.subr.bf16.mxu0 0
  %3162 = vmatpush1.bf16.msra.mxu0 %v3149
  %3163 = vmatprep.subr.bf16.mxu0 0
  %3164 = vmatpush1.bf16.msra.mxu0 %v3148
  %3165 = vmatprep.subr.bf16.mxu0 0
  %3166 = vmatpush1.bf16.msra.mxu0 %v3147
  %3167 = vmatprep.subr.bf16.mxu0 0
  %3168 = vmatpush1.bf16.msra.mxu0 %v3146
  %3169 = vmatprep.subr.bf16.mxu0 0
  %3170 = vmatpush1.bf16.msra.mxu0 %v3145
  %3171 = vmatprep.subr.bf16.mxu0 0
  %3172 = vmatpush1.bf16.msra.mxu0 %v3144
  %3173 = vmatprep.subr.bf16.mxu0 0
  %3174 = vmatpush1.bf16.msra.mxu0 %v3143
  %3175 = vmatprep.subr.bf16.mxu0 0
  %3176 = vmatpush2.bf16.msra.mxu0 0
  %3177 = vmatprep.subr.bf16.mxu0 0
  %3178 = vmatpush2.bf16.msra.mxu0 0
  %3179 = vmatprep.subr.bf16.mxu0 0
  %3180 = vmatpush2.bf16.msra.mxu0 0
  %3181 = vmatprep.subr.bf16.mxu0 0
  %3182 = vmatpush2.bf16.msra.mxu0 0
  %3183 = vmatprep.subr.bf16.mxu0 0
  %3184 = vmatpush2.bf16.msra.mxu0 0
  %3185 = vmatprep.subr.bf16.mxu0 0
  %3186 = vmatpush2.bf16.msra.mxu0 0
  %3187 = vmatprep.subr.bf16.mxu0 0
  %3188 = vmatpush2.bf16.msra.mxu0 0
  %3189 = vmatprep.subr.bf16.mxu0 0
  %3190 = vmatpush2.bf16.msra.mxu0 0
  %3191 = vmatprep.mubr.bf16.mxu0 0
  %3192 = vmatmul.mubr.bf16.gmra.mxu0 %v3109
  %v3193 = vpop.f32.mrf.mxu0
  %v3194 = vadd.f32 0.0, %v3193
  %v3195 = vpop.f32.mrf.mxu0
  %v3196 = vpop.f32.mrf.mxu0
  %v3197 = vpop.f32.mrf.mxu0
  %3198 = vdwg.mxu0
  %v3200 = vrot.slane %v3194, 4
  %v3202 = vadd.f32 %v3090, %v3200
  %v3203 = vmax.f32 %v3202, 0.0
  %v3204 = vld [vmem:[#allocation2 + $0x30] sm:$0x30]
  %v3205 = vpack.c.bf16 %v2850, %v2850
  %v3206 = vld [vmem:[%s431] sm:$0xf]
  %v3207 = vld [vmem:[%s431 + $0x4] sm:$0xf]
  %v3208 = vld [vmem:[%s431 + $0x8] sm:$0xf]
  %v3209 = vld [vmem:[%s431 + $0xc] sm:$0xf]
  %v3210 = vld [vmem:[%s431 + $0x10] sm:$0xf]
  %v3211 = vld [vmem:[%s431 + $0x14] sm:$0xf]
  %v3212 = vld [vmem:[%s431 + $0x18] sm:$0xf]
  %v3213 = vld [vmem:[%s431 + $0x1c] sm:$0xf]
  %v3214 = vld [vmem:[%s431 + $0x20] sm:$0xf]
  %v3215 = vld [vmem:[%s431 + $0x24] sm:$0xf]
  %v3216 = vld [vmem:[%s431 + $0x28] sm:$0xf]
  %v3217 = vld [vmem:[%s431 + $0x2c] sm:$0xf]
  %v3218 = vld [vmem:[%s431 + $0x30] sm:$0xf]
  %v3219 = vld [vmem:[%s431 + $0x34] sm:$0xf]
  %v3220 = vld [vmem:[%s431 + $0x38] sm:$0xf]
  %v3221 = vld [vmem:[%s431 + $0x3c] sm:$0xf]
  %v3223 = vrot.slane %v3205, 1
  %v3241 = vunpack.c.l.b16 %v3206
  %v3242 = vunpack.c.l.b16 %v3207
  %v3243 = vunpack.c.l.b16 %v3208
  %v3244 = vunpack.c.l.b16 %v3209
  %v3245 = vunpack.c.l.b16 %v3210
  %v3246 = vunpack.c.l.b16 %v3211
  %v3247 = vunpack.c.l.b16 %v3212
  %v3248 = vunpack.c.l.b16 %v3213
  %v3249 = vunpack.c.l.b16 %v3214
  %v3250 = vunpack.c.l.b16 %v3215
  %v3251 = vunpack.c.l.b16 %v3216
  %v3252 = vunpack.c.l.b16 %v3217
  %v3253 = vunpack.c.l.b16 %v3218
  %v3254 = vunpack.c.l.b16 %v3219
  %v3255 = vunpack.c.l.b16 %v3220
  %v3256 = vunpack.c.l.b16 %v3221
  %v3257 = vpack.c.b16 %v3242, %v3241
  %v3258 = vpack.c.b16 %v3244, %v3243
  %v3259 = vpack.c.b16 %v3246, %v3245
  %v3260 = vpack.c.b16 %v3248, %v3247
  %v3261 = vpack.c.b16 %v3250, %v3249
  %v3262 = vpack.c.b16 %v3252, %v3251
  %v3263 = vpack.c.b16 %v3254, %v3253
  %v3264 = vpack.c.b16 %v3256, %v3255
  %3273 = vmatprep.subr.bf16.mxu0 0
  %3274 = vmatpush1.bf16.msra.mxu0 %v3264
  %3275 = vmatprep.subr.bf16.mxu0 0
  %3276 = vmatpush1.bf16.msra.mxu0 %v3263
  %3277 = vmatprep.subr.bf16.mxu0 0
  %3278 = vmatpush1.bf16.msra.mxu0 %v3262
  %3279 = vmatprep.subr.bf16.mxu0 0
  %3280 = vmatpush1.bf16.msra.mxu0 %v3261
  %3281 = vmatprep.subr.bf16.mxu0 0
  %3282 = vmatpush1.bf16.msra.mxu0 %v3260
  %3283 = vmatprep.subr.bf16.mxu0 0
  %3284 = vmatpush1.bf16.msra.mxu0 %v3259
  %3285 = vmatprep.subr.bf16.mxu0 0
  %3286 = vmatpush1.bf16.msra.mxu0 %v3258
  %3287 = vmatprep.subr.bf16.mxu0 0
  %3288 = vmatpush1.bf16.msra.mxu0 %v3257
  %3289 = vmatprep.subr.bf16.mxu0 0
  %3290 = vmatpush2.bf16.msra.mxu0 0
  %3291 = vmatprep.subr.bf16.mxu0 0
  %3292 = vmatpush2.bf16.msra.mxu0 0
  %3293 = vmatprep.subr.bf16.mxu0 0
  %3294 = vmatpush2.bf16.msra.mxu0 0
  %3295 = vmatprep.subr.bf16.mxu0 0
  %3296 = vmatpush2.bf16.msra.mxu0 0
  %3297 = vmatprep.subr.bf16.mxu0 0
  %3298 = vmatpush2.bf16.msra.mxu0 0
  %3299 = vmatprep.subr.bf16.mxu0 0
  %3300 = vmatpush2.bf16.msra.mxu0 0
  %3301 = vmatprep.subr.bf16.mxu0 0
  %3302 = vmatpush2.bf16.msra.mxu0 0
  %3303 = vmatprep.subr.bf16.mxu0 0
  %3304 = vmatpush2.bf16.msra.mxu0 0
  %3305 = vmatprep.mubr.bf16.mxu0 0
  %3306 = vmatmul.mubr.bf16.gmra.mxu0 %v3223
  %v3307 = vpop.f32.mrf.mxu0
  %v3308 = vadd.f32 0.0, %v3307
  %v3309 = vpop.f32.mrf.mxu0
  %v3310 = vpop.f32.mrf.mxu0
  %v3311 = vpop.f32.mrf.mxu0
  %3312 = vdwg.mxu0
  %v3314 = vrot.slane %v3308, 4
  %v3316 = vadd.f32 %v3204, %v3314
  %v3317 = vmax.f32 %v3316, 0.0
  %v3318 = vld [vmem:[#allocation2 + $0x38] sm:$0x30]
  %v3319 = vpack.c.bf16 %v2961, %v2961
  %v3320 = vld [vmem:[%s539] sm:$0xf]
  %v3321 = vld [vmem:[%s539 + $0x4] sm:$0xf]
  %v3322 = vld [vmem:[%s539 + $0x8] sm:$0xf]
  %v3323 = vld [vmem:[%s539 + $0xc] sm:$0xf]
  %v3324 = vld [vmem:[%s539 + $0x10] sm:$0xf]
  %v3325 = vld [vmem:[%s539 + $0x14] sm:$0xf]
  %v3326 = vld [vmem:[%s539 + $0x18] sm:$0xf]
  %v3327 = vld [vmem:[%s539 + $0x1c] sm:$0xf]
  %v3328 = vld [vmem:[%s539 + $0x20] sm:$0xf]
  %v3329 = vld [vmem:[%s539 + $0x24] sm:$0xf]
  %v3330 = vld [vmem:[%s539 + $0x28] sm:$0xf]
  %v3331 = vld [vmem:[%s539 + $0x2c] sm:$0xf]
  %v3332 = vld [vmem:[%s539 + $0x30] sm:$0xf]
  %v3333 = vld [vmem:[%s539 + $0x34] sm:$0xf]
  %v3334 = vld [vmem:[%s539 + $0x38] sm:$0xf]
  %v3335 = vld [vmem:[%s539 + $0x3c] sm:$0xf]
  %v3337 = vrot.slane %v3319, 1
  %v3355 = vunpack.c.l.b16 %v3320
  %v3356 = vunpack.c.l.b16 %v3321
  %v3357 = vunpack.c.l.b16 %v3322
  %v3358 = vunpack.c.l.b16 %v3323
  %v3359 = vunpack.c.l.b16 %v3324
  %v3360 = vunpack.c.l.b16 %v3325
  %v3361 = vunpack.c.l.b16 %v3326
  %v3362 = vunpack.c.l.b16 %v3327
  %v3363 = vunpack.c.l.b16 %v3328
  %v3364 = vunpack.c.l.b16 %v3329
  %v3365 = vunpack.c.l.b16 %v3330
  %v3366 = vunpack.c.l.b16 %v3331
  %v3367 = vunpack.c.l.b16 %v3332
  %v3368 = vunpack.c.l.b16 %v3333
  %v3369 = vunpack.c.l.b16 %v3334
  %v3370 = vunpack.c.l.b16 %v3335
  %v3371 = vpack.c.b16 %v3356, %v3355
  %v3372 = vpack.c.b16 %v3358, %v3357
  %v3373 = vpack.c.b16 %v3360, %v3359
  %v3374 = vpack.c.b16 %v3362, %v3361
  %v3375 = vpack.c.b16 %v3364, %v3363
  %v3376 = vpack.c.b16 %v3366, %v3365
  %v3377 = vpack.c.b16 %v3368, %v3367
  %v3378 = vpack.c.b16 %v3370, %v3369
  %3387 = vmatprep.subr.bf16.mxu0 0
  %3388 = vmatpush1.bf16.msra.mxu0 %v3378
  %3389 = vmatprep.subr.bf16.mxu0 0
  %3390 = vmatpush1.bf16.msra.mxu0 %v3377
  %3391 = vmatprep.subr.bf16.mxu0 0
  %3392 = vmatpush1.bf16.msra.mxu0 %v3376
  %3393 = vmatprep.subr.bf16.mxu0 0
  %3394 = vmatpush1.bf16.msra.mxu0 %v3375
  %3395 = vmatprep.subr.bf16.mxu0 0
  %3396 = vmatpush1.bf16.msra.mxu0 %v3374
  %3397 = vmatprep.subr.bf16.mxu0 0
  %3398 = vmatpush1.bf16.msra.mxu0 %v3373
  %3399 = vmatprep.subr.bf16.mxu0 0
  %3400 = vmatpush1.bf16.msra.mxu0 %v3372
  %3401 = vmatprep.subr.bf16.mxu0 0
  %3402 = vmatpush1.bf16.msra.mxu0 %v3371
  %3403 = vmatprep.subr.bf16.mxu0 0
  %3404 = vmatpush2.bf16.msra.mxu0 0
  %3405 = vmatprep.subr.bf16.mxu0 0
  %3406 = vmatpush2.bf16.msra.mxu0 0
  %3407 = vmatprep.subr.bf16.mxu0 0
  %3408 = vmatpush2.bf16.msra.mxu0 0
  %3409 = vmatprep.subr.bf16.mxu0 0
  %3410 = vmatpush2.bf16.msra.mxu0 0
  %3411 = vmatprep.subr.bf16.mxu0 0
  %3412 = vmatpush2.bf16.msra.mxu0 0
  %3413 = vmatprep.subr.bf16.mxu0 0
  %3414 = vmatpush2.bf16.msra.mxu0 0
  %3415 = vmatprep.subr.bf16.mxu0 0
  %3416 = vmatpush2.bf16.msra.mxu0 0
  %3417 = vmatprep.subr.bf16.mxu0 0
  %3418 = vmatpush2.bf16.msra.mxu0 0
  %3419 = vmatprep.mubr.bf16.mxu0 0
  %3420 = vmatmul.mubr.bf16.gmra.mxu0 %v3337
  %v3421 = vpop.f32.mrf.mxu0
  %v3422 = vadd.f32 0.0, %v3421
  %v3423 = vpop.f32.mrf.mxu0
  %v3424 = vpop.f32.mrf.mxu0
  %v3425 = vpop.f32.mrf.mxu0
  %3426 = vdwg.mxu0
  %v3428 = vrot.slane %v3422, 4
  %v3430 = vadd.f32 %v3318, %v3428
  %v3431 = vtanh.pop %v3430
  %v3433 = vrot.slane %v3089, 4
  %v3436 = vrot.slane %v3203, 2
  %v3439 = vrot.slane %v3431, 6
  %v3441 = vsel %vm655, %v3433, %v3436
  %v3442 = vsel %vm657, %v3441, %v3317
  %v3443 = vsel %vm659, %v3442, %v3439
  %s3444 = scalar_lea.vmem %s4, 48
  %3445 = vst [vmem:[%s3444] sm:$0xff] %v3443
  %v3446 = vld [vmem:[#allocation2 + $0x20] sm:$0xc0]
  %v3447 = vpack.c.bf16 %v3089, %v3089
  %v3448 = vld [vmem:[%s3] sm:$0xf]
  %v3449 = vld [vmem:[%s3 + $0x4] sm:$0xf]
  %v3450 = vld [vmem:[%s3 + $0x8] sm:$0xf]
  %v3451 = vld [vmem:[%s3 + $0xc] sm:$0xf]
  %v3452 = vld [vmem:[%s3 + $0x10] sm:$0xf]
  %v3453 = vld [vmem:[%s3 + $0x14] sm:$0xf]
  %v3454 = vld [vmem:[%s3 + $0x18] sm:$0xf]
  %v3455 = vld [vmem:[%s3 + $0x1c] sm:$0xf]
  %v3456 = vld [vmem:[%s3 + $0x20] sm:$0xf]
  %v3457 = vld [vmem:[%s3 + $0x24] sm:$0xf]
  %v3458 = vld [vmem:[%s3 + $0x28] sm:$0xf]
  %v3459 = vld [vmem:[%s3 + $0x2c] sm:$0xf]
  %v3460 = vld [vmem:[%s3 + $0x30] sm:$0xf]
  %v3461 = vld [vmem:[%s3 + $0x34] sm:$0xf]
  %v3462 = vld [vmem:[%s3 + $0x38] sm:$0xf]
  %v3463 = vld [vmem:[%s3 + $0x3c] sm:$0xf]
  %v3465 = vrot.slane %v3447, 2
  %v3483 = vunpack.c.l.b16 %v3448
  %v3484 = vunpack.c.l.b16 %v3449
  %v3485 = vunpack.c.l.b16 %v3450
  %v3486 = vunpack.c.l.b16 %v3451
  %v3487 = vunpack.c.l.b16 %v3452
  %v3488 = vunpack.c.l.b16 %v3453
  %v3489 = vunpack.c.l.b16 %v3454
  %v3490 = vunpack.c.l.b16 %v3455
  %v3491 = vunpack.c.l.b16 %v3456
  %v3492 = vunpack.c.l.b16 %v3457
  %v3493 = vunpack.c.l.b16 %v3458
  %v3494 = vunpack.c.l.b16 %v3459
  %v3495 = vunpack.c.l.b16 %v3460
  %v3496 = vunpack.c.l.b16 %v3461
  %v3497 = vunpack.c.l.b16 %v3462
  %v3498 = vunpack.c.l.b16 %v3463
  %v3499 = vpack.c.b16 %v3484, %v3483
  %v3500 = vpack.c.b16 %v3486, %v3485
  %v3501 = vpack.c.b16 %v3488, %v3487
  %v3502 = vpack.c.b16 %v3490, %v3489
  %v3503 = vpack.c.b16 %v3492, %v3491
  %v3504 = vpack.c.b16 %v3494, %v3493
  %v3505 = vpack.c.b16 %v3496, %v3495
  %v3506 = vpack.c.b16 %v3498, %v3497
  %3515 = vmatprep.subr.bf16.mxu0 0
  %3516 = vmatpush1.bf16.msra.mxu0 %v3506
  %3517 = vmatprep.subr.bf16.mxu0 0
  %3518 = vmatpush1.bf16.msra.mxu0 %v3505
  %3519 = vmatprep.subr.bf16.mxu0 0
  %3520 = vmatpush1.bf16.msra.mxu0 %v3504
  %3521 = vmatprep.subr.bf16.mxu0 0
  %3522 = vmatpush1.bf16.msra.mxu0 %v3503
  %3523 = vmatprep.subr.bf16.mxu0 0
  %3524 = vmatpush1.bf16.msra.mxu0 %v3502
  %3525 = vmatprep.subr.bf16.mxu0 0
  %3526 = vmatpush1.bf16.msra.mxu0 %v3501
  %3527 = vmatprep.subr.bf16.mxu0 0
  %3528 = vmatpush1.bf16.msra.mxu0 %v3500
  %3529 = vmatprep.subr.bf16.mxu0 0
  %3530 = vmatpush1.bf16.msra.mxu0 %v3499
  %3531 = vmatprep.subr.bf16.mxu0 0
  %3532 = vmatpush2.bf16.msra.mxu0 0
  %3533 = vmatprep.subr.bf16.mxu0 0
  %3534 = vmatpush2.bf16.msra.mxu0 0
  %3535 = vmatprep.subr.bf16.mxu0 0
  %3536 = vmatpush2.bf16.msra.mxu0 0
  %3537 = vmatprep.subr.bf16.mxu0 0
  %3538 = vmatpush2.bf16.msra.mxu0 0
  %3539 = vmatprep.subr.bf16.mxu0 0
  %3540 = vmatpush2.bf16.msra.mxu0 0
  %3541 = vmatprep.subr.bf16.mxu0 0
  %3542 = vmatpush2.bf16.msra.mxu0 0
  %3543 = vmatprep.subr.bf16.mxu0 0
  %3544 = vmatpush2.bf16.msra.mxu0 0
  %3545 = vmatprep.subr.bf16.mxu0 0
  %3546 = vmatpush2.bf16.msra.mxu0 0
  %3547 = vmatprep.mubr.bf16.mxu0 0
  %3548 = vmatmul.mubr.bf16.gmra.mxu0 %v3465
  %v3549 = vpop.f32.mrf.mxu0
  %v3550 = vadd.f32 0.0, %v3549
  %v3551 = vpop.f32.mrf.mxu0
  %v3552 = vpop.f32.mrf.mxu0
  %v3553 = vpop.f32.mrf.mxu0
  %3554 = vdwg.mxu0
  %v3556 = vrot.slane %v3550, 2
  %v3558 = vadd.f32 %v3446, %v3556
  %v3559 = vmax.f32 %v3558, 0.0
  %v3560 = vld [vmem:[#allocation2 + $0x28] sm:$0xc0]
  %v3561 = vpack.c.bf16 %v3203, %v3203
  %v3562 = vld [vmem:[%s323] sm:$0xf]
  %v3563 = vld [vmem:[%s323 + $0x4] sm:$0xf]
  %v3564 = vld [vmem:[%s323 + $0x8] sm:$0xf]
  %v3565 = vld [vmem:[%s323 + $0xc] sm:$0xf]
  %v3566 = vld [vmem:[%s323 + $0x10] sm:$0xf]
  %v3567 = vld [vmem:[%s323 + $0x14] sm:$0xf]
  %v3568 = vld [vmem:[%s323 + $0x18] sm:$0xf]
  %v3569 = vld [vmem:[%s323 + $0x1c] sm:$0xf]
  %v3570 = vld [vmem:[%s323 + $0x20] sm:$0xf]
  %v3571 = vld [vmem:[%s323 + $0x24] sm:$0xf]
  %v3572 = vld [vmem:[%s323 + $0x28] sm:$0xf]
  %v3573 = vld [vmem:[%s323 + $0x2c] sm:$0xf]
  %v3574 = vld [vmem:[%s323 + $0x30] sm:$0xf]
  %v3575 = vld [vmem:[%s323 + $0x34] sm:$0xf]
  %v3576 = vld [vmem:[%s323 + $0x38] sm:$0xf]
  %v3577 = vld [vmem:[%s323 + $0x3c] sm:$0xf]
  %v3579 = vrot.slane %v3561, 2
  %v3597 = vunpack.c.l.b16 %v3562
  %v3598 = vunpack.c.l.b16 %v3563
  %v3599 = vunpack.c.l.b16 %v3564
  %v3600 = vunpack.c.l.b16 %v3565
  %v3601 = vunpack.c.l.b16 %v3566
  %v3602 = vunpack.c.l.b16 %v3567
  %v3603 = vunpack.c.l.b16 %v3568
  %v3604 = vunpack.c.l.b16 %v3569
  %v3605 = vunpack.c.l.b16 %v3570
  %v3606 = vunpack.c.l.b16 %v3571
  %v3607 = vunpack.c.l.b16 %v3572
  %v3608 = vunpack.c.l.b16 %v3573
  %v3609 = vunpack.c.l.b16 %v3574
  %v3610 = vunpack.c.l.b16 %v3575
  %v3611 = vunpack.c.l.b16 %v3576
  %v3612 = vunpack.c.l.b16 %v3577
  %v3613 = vpack.c.b16 %v3598, %v3597
  %v3614 = vpack.c.b16 %v3600, %v3599
  %v3615 = vpack.c.b16 %v3602, %v3601
  %v3616 = vpack.c.b16 %v3604, %v3603
  %v3617 = vpack.c.b16 %v3606, %v3605
  %v3618 = vpack.c.b16 %v3608, %v3607
  %v3619 = vpack.c.b16 %v3610, %v3609
  %v3620 = vpack.c.b16 %v3612, %v3611
  %3629 = vmatprep.subr.bf16.mxu0 0
  %3630 = vmatpush1.bf16.msra.mxu0 %v3620
  %3631 = vmatprep.subr.bf16.mxu0 0
  %3632 = vmatpush1.bf16.msra.mxu0 %v3619
  %3633 = vmatprep.subr.bf16.mxu0 0
  %3634 = vmatpush1.bf16.msra.mxu0 %v3618
  %3635 = vmatprep.subr.bf16.mxu0 0
  %3636 = vmatpush1.bf16.msra.mxu0 %v3617
  %3637 = vmatprep.subr.bf16.mxu0 0
  %3638 = vmatpush1.bf16.msra.mxu0 %v3616
  %3639 = vmatprep.subr.bf16.mxu0 0
  %3640 = vmatpush1.bf16.msra.mxu0 %v3615
  %3641 = vmatprep.subr.bf16.mxu0 0
  %3642 = vmatpush1.bf16.msra.mxu0 %v3614
  %3643 = vmatprep.subr.bf16.mxu0 0
  %3644 = vmatpush1.bf16.msra.mxu0 %v3613
  %3645 = vmatprep.subr.bf16.mxu0 0
  %3646 = vmatpush2.bf16.msra.mxu0 0
  %3647 = vmatprep.subr.bf16.mxu0 0
  %3648 = vmatpush2.bf16.msra.mxu0 0
  %3649 = vmatprep.subr.bf16.mxu0 0
  %3650 = vmatpush2.bf16.msra.mxu0 0
  %3651 = vmatprep.subr.bf16.mxu0 0
  %3652 = vmatpush2.bf16.msra.mxu0 0
  %3653 = vmatprep.subr.bf16.mxu0 0
  %3654 = vmatpush2.bf16.msra.mxu0 0
  %3655 = vmatprep.subr.bf16.mxu0 0
  %3656 = vmatpush2.bf16.msra.mxu0 0
  %3657 = vmatprep.subr.bf16.mxu0 0
  %3658 = vmatpush2.bf16.msra.mxu0 0
  %3659 = vmatprep.subr.bf16.mxu0 0
  %3660 = vmatpush2.bf16.msra.mxu0 0
  %3661 = vmatprep.mubr.bf16.mxu0 0
  %3662 = vmatmul.mubr.bf16.gmra.mxu0 %v3579
  %v3663 = vpop.f32.mrf.mxu0
  %v3664 = vadd.f32 0.0, %v3663
  %v3665 = vpop.f32.mrf.mxu0
  %v3666 = vpop.f32.mrf.mxu0
  %v3667 = vpop.f32.mrf.mxu0
  %3668 = vdwg.mxu0
  %v3670 = vrot.slane %v3664, 2
  %v3672 = vadd.f32 %v3560, %v3670
  %v3673 = vmax.f32 %v3672, 0.0
  %v3674 = vld [vmem:[#allocation2 + $0x30] sm:$0xc0]
  %v3675 = vpack.c.bf16 %v3317, %v3317
  %v3676 = vld [vmem:[%s431] sm:$0xf]
  %v3677 = vld [vmem:[%s431 + $0x4] sm:$0xf]
  %v3678 = vld [vmem:[%s431 + $0x8] sm:$0xf]
  %v3679 = vld [vmem:[%s431 + $0xc] sm:$0xf]
  %v3680 = vld [vmem:[%s431 + $0x10] sm:$0xf]
  %v3681 = vld [vmem:[%s431 + $0x14] sm:$0xf]
  %v3682 = vld [vmem:[%s431 + $0x18] sm:$0xf]
  %v3683 = vld [vmem:[%s431 + $0x1c] sm:$0xf]
  %v3684 = vld [vmem:[%s431 + $0x20] sm:$0xf]
  %v3685 = vld [vmem:[%s431 + $0x24] sm:$0xf]
  %v3686 = vld [vmem:[%s431 + $0x28] sm:$0xf]
  %v3687 = vld [vmem:[%s431 + $0x2c] sm:$0xf]
  %v3688 = vld [vmem:[%s431 + $0x30] sm:$0xf]
  %v3689 = vld [vmem:[%s431 + $0x34] sm:$0xf]
  %v3690 = vld [vmem:[%s431 + $0x38] sm:$0xf]
  %v3691 = vld [vmem:[%s431 + $0x3c] sm:$0xf]
  %v3693 = vrot.slane %v3675, 2
  %v3711 = vunpack.c.l.b16 %v3676
  %v3712 = vunpack.c.l.b16 %v3677
  %v3713 = vunpack.c.l.b16 %v3678
  %v3714 = vunpack.c.l.b16 %v3679
  %v3715 = vunpack.c.l.b16 %v3680
  %v3716 = vunpack.c.l.b16 %v3681
  %v3717 = vunpack.c.l.b16 %v3682
  %v3718 = vunpack.c.l.b16 %v3683
  %v3719 = vunpack.c.l.b16 %v3684
  %v3720 = vunpack.c.l.b16 %v3685
  %v3721 = vunpack.c.l.b16 %v3686
  %v3722 = vunpack.c.l.b16 %v3687
  %v3723 = vunpack.c.l.b16 %v3688
  %v3724 = vunpack.c.l.b16 %v3689
  %v3725 = vunpack.c.l.b16 %v3690
  %v3726 = vunpack.c.l.b16 %v3691
  %v3727 = vpack.c.b16 %v3712, %v3711
  %v3728 = vpack.c.b16 %v3714, %v3713
  %v3729 = vpack.c.b16 %v3716, %v3715
  %v3730 = vpack.c.b16 %v3718, %v3717
  %v3731 = vpack.c.b16 %v3720, %v3719
  %v3732 = vpack.c.b16 %v3722, %v3721
  %v3733 = vpack.c.b16 %v3724, %v3723
  %v3734 = vpack.c.b16 %v3726, %v3725
  %3743 = vmatprep.subr.bf16.mxu0 0
  %3744 = vmatpush1.bf16.msra.mxu0 %v3734
  %3745 = vmatprep.subr.bf16.mxu0 0
  %3746 = vmatpush1.bf16.msra.mxu0 %v3733
  %3747 = vmatprep.subr.bf16.mxu0 0
  %3748 = vmatpush1.bf16.msra.mxu0 %v3732
  %3749 = vmatprep.subr.bf16.mxu0 0
  %3750 = vmatpush1.bf16.msra.mxu0 %v3731
  %3751 = vmatprep.subr.bf16.mxu0 0
  %3752 = vmatpush1.bf16.msra.mxu0 %v3730
  %3753 = vmatprep.subr.bf16.mxu0 0
  %3754 = vmatpush1.bf16.msra.mxu0 %v3729
  %3755 = vmatprep.subr.bf16.mxu0 0
  %3756 = vmatpush1.bf16.msra.mxu0 %v3728
  %3757 = vmatprep.subr.bf16.mxu0 0
  %3758 = vmatpush1.bf16.msra.mxu0 %v3727
  %3759 = vmatprep.subr.bf16.mxu0 0
  %3760 = vmatpush2.bf16.msra.mxu0 0
  %3761 = vmatprep.subr.bf16.mxu0 0
  %3762 = vmatpush2.bf16.msra.mxu0 0
  %3763 = vmatprep.subr.bf16.mxu0 0
  %3764 = vmatpush2.bf16.msra.mxu0 0
  %3765 = vmatprep.subr.bf16.mxu0 0
  %3766 = vmatpush2.bf16.msra.mxu0 0
  %3767 = vmatprep.subr.bf16.mxu0 0
  %3768 = vmatpush2.bf16.msra.mxu0 0
  %3769 = vmatprep.subr.bf16.mxu0 0
  %3770 = vmatpush2.bf16.msra.mxu0 0
  %3771 = vmatprep.subr.bf16.mxu0 0
  %3772 = vmatpush2.bf16.msra.mxu0 0
  %3773 = vmatprep.subr.bf16.mxu0 0
  %3774 = vmatpush2.bf16.msra.mxu0 0
  %3775 = vmatprep.mubr.bf16.mxu0 0
  %3776 = vmatmul.mubr.bf16.gmra.mxu0 %v3693
  %v3777 = vpop.f32.mrf.mxu0
  %v3778 = vadd.f32 0.0, %v3777
  %v3779 = vpop.f32.mrf.mxu0
  %v3780 = vpop.f32.mrf.mxu0
  %v3781 = vpop.f32.mrf.mxu0
  %3782 = vdwg.mxu0
  %v3784 = vrot.slane %v3778, 2
  %v3786 = vadd.f32 %v3674, %v3784
  %v3787 = vmax.f32 %v3786, 0.0
  %v3788 = vld [vmem:[#allocation2 + $0x38] sm:$0xc0]
  %v3789 = vpack.c.bf16 %v3431, %v3431
  %v3790 = vld [vmem:[%s539] sm:$0xf]
  %v3791 = vld [vmem:[%s539 + $0x4] sm:$0xf]
  %v3792 = vld [vmem:[%s539 + $0x8] sm:$0xf]
  %v3793 = vld [vmem:[%s539 + $0xc] sm:$0xf]
  %v3794 = vld [vmem:[%s539 + $0x10] sm:$0xf]
  %v3795 = vld [vmem:[%s539 + $0x14] sm:$0xf]
  %v3796 = vld [vmem:[%s539 + $0x18] sm:$0xf]
  %v3797 = vld [vmem:[%s539 + $0x1c] sm:$0xf]
  %v3798 = vld [vmem:[%s539 + $0x20] sm:$0xf]
  %v3799 = vld [vmem:[%s539 + $0x24] sm:$0xf]
  %v3800 = vld [vmem:[%s539 + $0x28] sm:$0xf]
  %v3801 = vld [vmem:[%s539 + $0x2c] sm:$0xf]
  %v3802 = vld [vmem:[%s539 + $0x30] sm:$0xf]
  %v3803 = vld [vmem:[%s539 + $0x34] sm:$0xf]
  %v3804 = vld [vmem:[%s539 + $0x38] sm:$0xf]
  %v3805 = vld [vmem:[%s539 + $0x3c] sm:$0xf]
  %v3807 = vrot.slane %v3789, 2
  %v3825 = vunpack.c.l.b16 %v3790
  %v3826 = vunpack.c.l.b16 %v3791
  %v3827 = vunpack.c.l.b16 %v3792
  %v3828 = vunpack.c.l.b16 %v3793
  %v3829 = vunpack.c.l.b16 %v3794
  %v3830 = vunpack.c.l.b16 %v3795
  %v3831 = vunpack.c.l.b16 %v3796
  %v3832 = vunpack.c.l.b16 %v3797
  %v3833 = vunpack.c.l.b16 %v3798
  %v3834 = vunpack.c.l.b16 %v3799
  %v3835 = vunpack.c.l.b16 %v3800
  %v3836 = vunpack.c.l.b16 %v3801
  %v3837 = vunpack.c.l.b16 %v3802
  %v3838 = vunpack.c.l.b16 %v3803
  %v3839 = vunpack.c.l.b16 %v3804
  %v3840 = vunpack.c.l.b16 %v3805
  %v3841 = vpack.c.b16 %v3826, %v3825
  %v3842 = vpack.c.b16 %v3828, %v3827
  %v3843 = vpack.c.b16 %v3830, %v3829
  %v3844 = vpack.c.b16 %v3832, %v3831
  %v3845 = vpack.c.b16 %v3834, %v3833
  %v3846 = vpack.c.b16 %v3836, %v3835
  %v3847 = vpack.c.b16 %v3838, %v3837
  %v3848 = vpack.c.b16 %v3840, %v3839
  %3857 = vmatprep.subr.bf16.mxu0 0
  %3858 = vmatpush1.bf16.msra.mxu0 %v3848
  %3859 = vmatprep.subr.bf16.mxu0 0
  %3860 = vmatpush1.bf16.msra.mxu0 %v3847
  %3861 = vmatprep.subr.bf16.mxu0 0
  %3862 = vmatpush1.bf16.msra.mxu0 %v3846
  %3863 = vmatprep.subr.bf16.mxu0 0
  %3864 = vmatpush1.bf16.msra.mxu0 %v3845
  %3865 = vmatprep.subr.bf16.mxu0 0
  %3866 = vmatpush1.bf16.msra.mxu0 %v3844
  %3867 = vmatprep.subr.bf16.mxu0 0
  %3868 = vmatpush1.bf16.msra.mxu0 %v3843
  %3869 = vmatprep.subr.bf16.mxu0 0
  %3870 = vmatpush1.bf16.msra.mxu0 %v3842
  %3871 = vmatprep.subr.bf16.mxu0 0
  %3872 = vmatpush1.bf16.msra.mxu0 %v3841
  %3873 = vmatprep.subr.bf16.mxu0 0
  %3874 = vmatpush2.bf16.msra.mxu0 0
  %3875 = vmatprep.subr.bf16.mxu0 0
  %3876 = vmatpush2.bf16.msra.mxu0 0
  %3877 = vmatprep.subr.bf16.mxu0 0
  %3878 = vmatpush2.bf16.msra.mxu0 0
  %3879 = vmatprep.subr.bf16.mxu0 0
  %3880 = vmatpush2.bf16.msra.mxu0 0
  %3881 = vmatprep.subr.bf16.mxu0 0
  %3882 = vmatpush2.bf16.msra.mxu0 0
  %3883 = vmatprep.subr.bf16.mxu0 0
  %3884 = vmatpush2.bf16.msra.mxu0 0
  %3885 = vmatprep.subr.bf16.mxu0 0
  %3886 = vmatpush2.bf16.msra.mxu0 0
  %3887 = vmatprep.subr.bf16.mxu0 0
  %3888 = vmatpush2.bf16.msra.mxu0 0
  %3889 = vmatprep.mubr.bf16.mxu0 0
  %3890 = vmatmul.mubr.bf16.gmra.mxu0 %v3807
  %v3891 = vpop.f32.mrf.mxu0
  %v3892 = vadd.f32 0.0, %v3891
  %v3893 = vpop.f32.mrf.mxu0
  %v3894 = vpop.f32.mrf.mxu0
  %v3895 = vpop.f32.mrf.mxu0
  %3896 = vdwg.mxu0
  %v3898 = vrot.slane %v3892, 2
  %v3900 = vadd.f32 %v3788, %v3898
  %v3901 = vtanh.pop %v3900
  %v3903 = vrot.slane %v3559, 6
  %v3906 = vrot.slane %v3673, 4
  %v3909 = vrot.slane %v3787, 2
  %v3911 = vsel %vm655, %v3903, %v3906
  %v3912 = vsel %vm657, %v3911, %v3909
  %v3913 = vsel %vm659, %v3912, %v3901
  %s3914 = scalar_lea.vmem %s4, 56
  %3915 = vst [vmem:[%s3914] sm:$0xff] %v3913
  // Predicated region
  $region18: #{forward.1} parent=0 // pred_check
    _
  $region19: #{forward.1} parent=0 // pred_check_branch
    %3917 = sbr.rel (0) target = $region21
  $region20: #{forward.1} parent=0 // pred_region
    _
  $region21: #{forward.1} parent=0 // pred_fallthru
    _
  // Predicated region
  $region22: #{forward.1} parent=0 // pred_check
    _
  $region23: #{forward.1} parent=0 // pred_check_branch
    %3919 = sbr.rel (0) target = $region25
  $region24: #{forward.1} parent=0 // pred_region
    _
  $region25: #{forward.1} parent=0 // pred_fallthru
    _

</llo_original>
